<compile_context>
chip_gen: v7x
topology: tpu7x:2x2x1
jax: 0.10.0
libtpu: 0.0.40
codegen_flags: <defaults>
</compile_context>

<pallas_src>
import functools
import math

import jax
import jax.numpy as jnp
from jax.experimental import pallas as pl
from jax.experimental.pallas import tpu as pltpu


# ---------------------------------------------------------------------------
# helpers used inside the kernel (traced, statically unrolled)
# ---------------------------------------------------------------------------
def _mm(a, b):
    """a @ b on the MXU: bf16 operands, f32 accumulation."""
    return jax.lax.dot_general(
        a.astype(jnp.bfloat16), b.astype(jnp.bfloat16),
        (((1,), (0,)), ((), ())), preferred_element_type=jnp.float32)


def _mm_nt(a, b):
    """a @ b.T on the MXU: bf16 operands, f32 accumulation."""
    return jax.lax.dot_general(
        a.astype(jnp.bfloat16), b.astype(jnp.bfloat16),
        (((1,), (1,)), ((), ())), preferred_element_type=jnp.float32)


def _layer_norm(x, gamma, beta, *, eps):
    # Matches the custom LayerNorm: unbiased std (div by d-1), eps on the std.
    d = x.shape[-1]
    mean = jnp.mean(x, axis=-1, keepdims=True)
    diff = x - mean
    var = jnp.sum(diff * diff, axis=-1, keepdims=True) * (1.0 / (d - 1))
    std = jnp.sqrt(var)
    return gamma * diff / (std + eps) + beta


# ---------------------------------------------------------------------------
# fused decoder-layer kernel (batch_tile elements per grid step)
# ---------------------------------------------------------------------------
def _decoder_layer_kernel(x_ref, mem_ref, tgt_mask_ref, src_mask_ref,
                          qkv_w_ref, attn_b_ref, wo_ref, ln_g_ref, ln_b_ref,
                          w1_ref, b1_ref, w2_ref, b2_ref,
                          out_ref, *, n_heads, d_k, eps):
    bt, S, D = x_ref.shape
    M = mem_ref.shape[1]
    rows = bt * S

    # Fold the batch tile into the row dimension so every projection / FFN
    # matmul sees bt*S rows (MXU-friendly).
    x = x_ref[...].astype(jnp.float32).reshape(rows, D)          # (bt*S, D)
    mem = mem_ref[...].astype(jnp.float32).reshape(bt * M, D)    # (bt*M, D)

    def gamma(i):
        return ln_g_ref[i:i + 1, :].astype(jnp.float32)          # (1, D)

    def beta(i):
        return ln_b_ref[i:i + 1, :].astype(jnp.float32)          # (1, D)

    def bias_row(i):
        return attn_b_ref[i:i + 1, :].astype(jnp.float32)        # (1, D)

    inv_sqrt_dk = 1.0 / math.sqrt(d_k)

    def mha(xq_rows, xkv_rows, Skv, mask_ref, w0, b0, wo0):
        """Multi-headed attention over the whole batch tile.

        xq_rows: (bt*S, D), xkv_rows: (bt*Skv, D), mask_ref: int8 (bt, S, Skv).
        w0: index of W_q in qkv_w_ref (W_k = w0+1, W_v = w0+2).
        b0: index of b_q in attn_b_ref (b_k = +1, b_v = +2, b_o = +3).
        wo0: index of head-0 slice of W_o in wo_ref (shape (d_k, D) per head).
        """
        # Big lane-dense projections over all folded rows; scale folded into Q.
        q = (_mm(xq_rows, qkv_w_ref[w0 + 0]) + bias_row(b0 + 0)) * inv_sqrt_dk
        k = _mm(xkv_rows, qkv_w_ref[w0 + 1]) + bias_row(b0 + 1)
        v = _mm(xkv_rows, qkv_w_ref[w0 + 2]) + bias_row(b0 + 2)
        q3 = q.reshape(bt, S, D)
        k3 = k.reshape(bt, Skv, D)
        v3 = v.reshape(bt, Skv, D)

        # Additive mask bias, computed once per attention call:
        # 0 where mask != 0 (keep), -1e9 where mask == 0.
        mbias = (mask_ref[...].astype(jnp.float32) - 1.0) * 1e9   # (bt, S, Skv)

        outs = []
        for b in range(bt):                    # static unroll over batch tile
            acc = jnp.zeros((S, D), jnp.float32)
            for h in range(n_heads):           # static unroll over heads
                lo = h * d_k
                qh = q3[b, :, lo:lo + d_k]     # (S, d_k)
                kh = k3[b, :, lo:lo + d_k]     # (Skv, d_k)
                vh = v3[b, :, lo:lo + d_k]     # (Skv, d_k)

                s = _mm_nt(qh, kh) + mbias[b]                    # (S, Skv)
                m = jnp.max(s, axis=-1, keepdims=True)
                e = jnp.exp(s - m)                               # unnormalized
                denom = jnp.sum(e, axis=-1, keepdims=True)
                # Normalize the small (S, d_k) context, not the (S, Skv) probs;
                # exact reciprocal of the tiny (S, 1) denominator (accuracy).
                ctx = _mm(e, vh) * pl.reciprocal(denom)          # (S, d_k)
                # Fold the output projection per head (no concat over heads):
                #   sum_h ctx_h @ Wo[h]  ==  concat(ctx) @ Wo
                acc = acc + _mm(ctx, wo_ref[wo0 + h])            # (S, D)
            outs.append(acc)
        attn = jnp.concatenate(outs, axis=0) if bt > 1 else outs[0]
        return attn + bias_row(b0 + 3)

    # ---- sublayer 1: self attention + residual ----
    y1 = _layer_norm(x, gamma(0), beta(0), eps=eps)
    x = x + mha(y1, y1, S, tgt_mask_ref, 0, 0, 0)

    # ---- sublayer 2: source (memory) attention + residual ----
    y2 = _layer_norm(x, gamma(1), beta(1), eps=eps)
    x = x + mha(y2, mem, M, src_mask_ref, 3, 4, n_heads)

    # ---- sublayer 3: position-wise feed forward + residual ----
    y3 = _layer_norm(x, gamma(2), beta(2), eps=eps)
    hidden = jnp.maximum(_mm(y3, w1_ref[...]) + b1_ref[...].astype(jnp.float32), 0.0)
    x = x + _mm(hidden, w2_ref[...]) + b2_ref[...].astype(jnp.float32)

    out_ref[...] = x.reshape(bt, S, D).astype(out_ref.dtype)


# ---------------------------------------------------------------------------
# wrapper
# ---------------------------------------------------------------------------
def decoder_layer_forward(x, memory, src_mask, tgt_mask, params, *, n_heads,
                          eps=1e-6):
    B, S, D = x.shape
    M = memory.shape[1]
    d_ff = params['w1'].shape[1]
    assert D % n_heads == 0
    d_k = D // n_heads

    # Batch tile: fold batch elements until the projection matmuls see >=128
    # rows per grid step (or the whole batch).  On v7x keep B // bt even when
    # possible so both TensorCores get grid steps.
    bt = max(1, min(B, max(1, 128 // max(S, 1))))
    while B % bt:
        bt -= 1

    # Pack the many small parameter tensors into a few slabs (fewer DMAs); cast
    # the big weight matrices to bf16 (halves DMA, feeds the bf16 MXU path).
    qkv_w = jnp.stack([params[k] for k in
                       ('self_wq', 'self_wk', 'self_wv',
                        'src_wq', 'src_wk', 'src_wv')]
                      ).astype(jnp.bfloat16)                        # (6, D, D)
    attn_b = jnp.stack([params[k] for k in
                        ('self_bq', 'self_bk', 'self_bv', 'self_bo',
                         'src_bq', 'src_bk', 'src_bv', 'src_bo')])  # (8, D)
    # Output projections pre-split per head: (2*H, d_k, D).  Row block h of the
    # original (D, D) W_o multiplies head h's context.
    wo_h = jnp.concatenate(
        [params['self_wo'].reshape(n_heads, d_k, D),
         params['src_wo'].reshape(n_heads, d_k, D)], axis=0
    ).astype(jnp.bfloat16)                                          # (2H, dk, D)
    ln_g = jnp.stack([params['g1'], params['g2'], params['g3']])    # (3, D)
    ln_b = jnp.stack([params['b1'], params['b2'], params['b3']])    # (3, D)
    w1 = params['w1'].astype(jnp.bfloat16)                          # (D, d_ff)
    w2 = params['w2'].astype(jnp.bfloat16)                          # (d_ff, D)
    ff_b1 = params['ff_b1'].reshape(1, d_ff)
    ff_b2 = params['ff_b2'].reshape(1, D)

    # None mask == attend to everything.  Ship masks as int8 (0/1): quarters
    # the dominant per-step mask DMA vs f32 and handles bool/float inputs.
    if tgt_mask is None:
        tgt_mask_i8 = jnp.ones((B, S, S), jnp.int8)
    else:
        tgt_mask_i8 = (tgt_mask != 0).astype(jnp.int8)
    if src_mask is None:
        src_mask_i8 = jnp.ones((B, S, M), jnp.int8)
    else:
        src_mask_i8 = (src_mask != 0).astype(jnp.int8)

    kernel = functools.partial(_decoder_layer_kernel,
                               n_heads=n_heads, d_k=d_k, eps=eps)

    # Constant-index parameter slabs: single-buffered (Buffered(1)) so the
    # resident weights are not needlessly doubled in VMEM.
    def const_spec(shape):
        idx = (lambda i: (0,) * len(shape))
        return pl.BlockSpec(shape, idx, pipeline_mode=pl.Buffered(1))

    return pl.pallas_call(
        kernel,
        out_shape=jax.ShapeDtypeStruct((B, S, D), x.dtype),
        grid=(B // bt,),
        in_specs=[
            pl.BlockSpec((bt, S, D), lambda i: (i, 0, 0)),    # x
            pl.BlockSpec((bt, M, D), lambda i: (i, 0, 0)),    # memory
            pl.BlockSpec((bt, S, S), lambda i: (i, 0, 0)),    # tgt_mask (int8)
            pl.BlockSpec((bt, S, M), lambda i: (i, 0, 0)),    # src_mask (int8)
            const_spec((6, D, D)),                            # q/k/v weights
            const_spec((8, D)),                               # attn biases
            const_spec((2 * n_heads, d_k, D)),                # per-head W_o
            const_spec((3, D)),                               # LN gammas
            const_spec((3, D)),                               # LN betas
            const_spec((D, d_ff)),                            # FFN W1
            const_spec((1, d_ff)),                            # FFN b1
            const_spec((d_ff, D)),                            # FFN W2
            const_spec((1, D)),                               # FFN b2
        ],
        out_specs=pl.BlockSpec((bt, S, D), lambda i: (i, 0, 0)),
        compiler_params=pltpu.CompilerParams(
            dimension_semantics=("parallel",),     # batch tiles are independent
            # 48 MiB fits under v7x's 64 MiB physical VMEM; raise towards
            # 64-100 MiB on v5e/v6e (128 MiB physical) for bigger tiles.
            vmem_limit_bytes=48 * 1024 * 1024),
    )(x, memory, tgt_mask_i8, src_mask_i8, qkv_w, attn_b, wo_h, ln_g, ln_b,
      w1, ff_b1, w2, ff_b2)


# ---------------------------------------------------------------------------
# pure-JAX f32 reference (mirrors the PyTorch module exactly)
# ---------------------------------------------------------------------------
def _pure_jax_reference(x, memory, src_mask, tgt_mask, params, *, n_heads,
                        eps=1e-6):
    B, S, D = x.shape
    d_k = D // n_heads

    def layer_norm(v, g, b):
        mean = v.mean(-1, keepdims=True)
        var = ((v - mean) ** 2).sum(-1, keepdims=True) / (D - 1)   # unbiased
        std = jnp.sqrt(var)
        return g * (v - mean) / (std + eps) + b

    def mha(xq, xkv, mask, wq, bq, wk, bk, wv, bv, wo, bo):
        Sq, Sk = xq.shape[1], xkv.shape[1]
        q = (xq @ wq + bq).reshape(B, Sq, n_heads, d_k).transpose(0, 2, 1, 3)
        k = (xkv @ wk + bk).reshape(B, Sk, n_heads, d_k).transpose(0, 2, 1, 3)
        v = (xkv @ wv + bv).reshape(B, Sk, n_heads, d_k).transpose(0, 2, 1, 3)
        s = jnp.einsum('bhqd,bhkd->bhqk', q, k) / math.sqrt(d_k)
        s = jnp.where(mask[:, None, :, :] != 0, s, -1e9)
        p = jax.nn.softmax(s, axis=-1)
        ctx = jnp.einsum('bhqk,bhkd->bhqd', p, v)
        ctx = ctx.transpose(0, 2, 1, 3).reshape(B, Sq, D)
        return ctx @ wo + bo

    y1 = layer_norm(x, params['g1'], params['b1'])
    x = x + mha(y1, y1, tgt_mask,
                params['self_wq'], params['self_bq'], params['self_wk'],
                params['self_bk'], params['self_wv'], params['self_bv'],
                params['self_wo'], params['self_bo'])
    y2 = layer_norm(x, params['g2'], params['b2'])
    x = x + mha(y2, memory, src_mask,
                params['src_wq'], params['src_bq'], params['src_wk'],
                params['src_bk'], params['src_wv'], params['src_bv'],
                params['src_wo'], params['src_bo'])
    y3 = layer_norm(x, params['g3'], params['b3'])
    h = jnp.maximum(y3 @ params['w1'] + params['ff_b1'], 0.0)
    x = x + h @ params['w2'] + params['ff_b2']
    return x


if __name__ == "__main__":
    # size=32, h=4, d_ff=64 (dropout is declared but unused in forward)
    B, S, M, D, H, DFF = 2, 8, 16, 32, 4, 64

    key = jax.random.PRNGKey(0)
    keys = iter(jax.random.split(key, 32))

    def lin(shape, scale):
        return scale * jax.random.normal(next(keys), shape, jnp.float32)

    sD = 1.0 / math.sqrt(D)
    sF = 1.0 / math.sqrt(DFF)
    params = {
        # LayerNorm params mirror __init__: ones / zeros
        'g1': jnp.ones((D,), jnp.float32), 'b1': jnp.zeros((D,), jnp.float32),
        'g2': jnp.ones((D,), jnp.float32), 'b2': jnp.zeros((D,), jnp.float32),
        'g3': jnp.ones((D,), jnp.float32), 'b3': jnp.zeros((D,), jnp.float32),
        # attention / FFN linears (weights stored as (in, out))
        'self_wq': lin((D, D), sD), 'self_bq': lin((D,), sD),
        'self_wk': lin((D, D), sD), 'self_bk': lin((D,), sD),
        'self_wv': lin((D, D), sD), 'self_bv': lin((D,), sD),
        'self_wo': lin((D, D), sD), 'self_bo': lin((D,), sD),
        'src_wq': lin((D, D), sD), 'src_bq': lin((D,), sD),
        'src_wk': lin((D, D), sD), 'src_bk': lin((D,), sD),
        'src_wv': lin((D, D), sD), 'src_bv': lin((D,), sD),
        'src_wo': lin((D, D), sD), 'src_bo': lin((D,), sD),
        'w1': lin((D, DFF), sD), 'ff_b1': lin((DFF,), sD),
        'w2': lin((DFF, D), sF), 'ff_b2': lin((D,), sF),
    }

    x = jax.random.normal(next(keys), (B, S, D), jnp.float32)
    memory = jax.random.normal(next(keys), (B, M, D), jnp.float32)

    # causal mask for self-attention, full visibility for source attention
    tgt_mask = jnp.broadcast_to(jnp.tril(jnp.ones((S, S), jnp.float32)), (B, S, S))
    src_mask = jnp.ones((B, S, M), jnp.float32)

    out = decoder_layer_forward(x, memory, src_mask, tgt_mask, params, n_heads=H)
    jax.block_until_ready(out)

    ref = _pure_jax_reference(x, memory, src_mask, tgt_mask, params, n_heads=H)
    assert out.shape == (B, S, D)
    max_err = float(jnp.max(jnp.abs(out - ref)))
    # bf16 MXU operands -> relaxed tolerance vs the f32 reference
    assert jnp.allclose(out, ref, atol=5e-2, rtol=5e-2), f"max abs err {max_err}"
    print("KERNEL_OK")
</pallas_src>

<mosaic_0001>
module attributes {stable_mosaic.version = 11 : i64} {
  func.func @_decoder_layer_kernel(%arg0: i32, %arg1: memref<2x8x32xf32, #tpu.memory_space<vmem>>, %arg2: memref<2x16x32xf32, #tpu.memory_space<vmem>>, %arg3: memref<2x8x8xi8, #tpu.memory_space<vmem>>, %arg4: memref<2x8x16xi8, #tpu.memory_space<vmem>>, %arg5: memref<6x32x32xbf16, #tpu.memory_space<vmem>>, %arg6: memref<8x32xf32, #tpu.memory_space<vmem>>, %arg7: memref<8x8x32xbf16, #tpu.memory_space<vmem>>, %arg8: memref<3x32xf32, #tpu.memory_space<vmem>>, %arg9: memref<3x32xf32, #tpu.memory_space<vmem>>, %arg10: memref<32x64xbf16, #tpu.memory_space<vmem>>, %arg11: memref<1x64xf32, #tpu.memory_space<vmem>>, %arg12: memref<64x32xbf16, #tpu.memory_space<vmem>>, %arg13: memref<1x32xf32, #tpu.memory_space<vmem>>, %arg14: memref<2x8x32xf32, #tpu.memory_space<vmem>>) attributes {dimension_semantics = [#tpu.dimension_semantics<parallel>], iteration_bounds = array<i64: 1>, scalar_prefetch = 0 : i64, scratch_operands = 0 : i64, tpu.core_type = #tpu.core_type<tc>, window_params = [{transform_indices = @transform_0, window_bounds = array<i64: 2, 8, 32>}, {transform_indices = @transform_1, window_bounds = array<i64: 2, 16, 32>}, {transform_indices = @transform_2, window_bounds = array<i64: 2, 8, 8>}, {transform_indices = @transform_3, window_bounds = array<i64: 2, 8, 16>}, {pipeline_mode = #tpu.pipeline_mode<synchronous>, transform_indices = @transform_4, window_bounds = array<i64: 6, 32, 32>}, {pipeline_mode = #tpu.pipeline_mode<synchronous>, transform_indices = @transform_5, window_bounds = array<i64: 8, 32>}, {pipeline_mode = #tpu.pipeline_mode<synchronous>, transform_indices = @transform_6, window_bounds = array<i64: 8, 8, 32>}, {pipeline_mode = #tpu.pipeline_mode<synchronous>, transform_indices = @transform_7, window_bounds = array<i64: 3, 32>}, {pipeline_mode = #tpu.pipeline_mode<synchronous>, transform_indices = @transform_8, window_bounds = array<i64: 3, 32>}, {pipeline_mode = #tpu.pipeline_mode<synchronous>, transform_indices = @transform_9, window_bounds = array<i64: 32, 64>}, {pipeline_mode = #tpu.pipeline_mode<synchronous>, transform_indices = @transform_10, window_bounds = array<i64: 1, 64>}, {pipeline_mode = #tpu.pipeline_mode<synchronous>, transform_indices = @transform_11, window_bounds = array<i64: 64, 32>}, {pipeline_mode = #tpu.pipeline_mode<synchronous>, transform_indices = @transform_12, window_bounds = array<i64: 1, 32>}, {transform_indices = @transform_13, window_bounds = array<i64: 2, 8, 32>}]} {
    %c0 = arith.constant 0 : index
    %c0_0 = arith.constant 0 : index
    %c0_1 = arith.constant 0 : index
    %0 = vector.load %arg1[%c0, %c0_0, %c0_1] : memref<2x8x32xf32, #tpu.memory_space<vmem>>, vector<2x8x32xf32>
    %1 = vector.shape_cast %0 : vector<2x8x32xf32> to vector<16x32xf32>
    %c0_2 = arith.constant 0 : index
    %c0_3 = arith.constant 0 : index
    %c0_4 = arith.constant 0 : index
    %2 = vector.load %arg2[%c0_2, %c0_3, %c0_4] : memref<2x16x32xf32, #tpu.memory_space<vmem>>, vector<2x16x32xf32>
    %3 = vector.shape_cast %2 : vector<2x16x32xf32> to vector<32x32xf32>
    %c0_5 = arith.constant 0 : index
    %c0_6 = arith.constant 0 : index
    %4 = vector.load %arg8[%c0_5, %c0_6] : memref<3x32xf32, #tpu.memory_space<vmem>>, vector<1x32xf32>
    %c0_7 = arith.constant 0 : index
    %c0_8 = arith.constant 0 : index
    %5 = vector.load %arg9[%c0_7, %c0_8] : memref<3x32xf32, #tpu.memory_space<vmem>>, vector<1x32xf32>
    %cst = arith.constant dense<0.000000e+00> : vector<16xf32>
    %6 = vector.multi_reduction <add>, %1, %cst [1] : vector<16x32xf32> to vector<16xf32>
    %7 = vector.shape_cast %6 : vector<16xf32> to vector<16x1xf32>
    %cst_9 = arith.constant 3.200000e+01 : f32
    %8 = vector.broadcast %cst_9 : f32 to vector<16x1xf32>
    %9 = arith.divf %7, %8 : vector<16x1xf32>
    %10 = vector.broadcast %9 : vector<16x1xf32> to vector<16x32xf32>
    %11 = arith.subf %1, %10 : vector<16x32xf32>
    %12 = arith.mulf %11, %11 : vector<16x32xf32>
    %cst_10 = arith.constant dense<0.000000e+00> : vector<16xf32>
    %13 = vector.multi_reduction <add>, %12, %cst_10 [1] : vector<16x32xf32> to vector<16xf32>
    %14 = vector.shape_cast %13 : vector<16xf32> to vector<16x1xf32>
    %cst_11 = arith.constant 0.0322580636 : f32
    %15 = vector.broadcast %cst_11 : f32 to vector<16x1xf32>
    %16 = arith.mulf %14, %15 : vector<16x1xf32>
    %17 = math.sqrt %16 : vector<16x1xf32>
    %18 = vector.broadcast %4 : vector<1x32xf32> to vector<16x32xf32>
    %19 = arith.mulf %18, %11 : vector<16x32xf32>
    %cst_12 = arith.constant 9.99999997E-7 : f32
    %20 = vector.broadcast %cst_12 : f32 to vector<16x1xf32>
    %21 = arith.addf %17, %20 : vector<16x1xf32>
    %22 = vector.broadcast %21 : vector<16x1xf32> to vector<16x32xf32>
    %23 = arith.divf %19, %22 : vector<16x32xf32>
    %24 = vector.broadcast %5 : vector<1x32xf32> to vector<16x32xf32>
    %25 = arith.addf %23, %24 : vector<16x32xf32>
    %c0_13 = arith.constant 0 : index
    %c0_14 = arith.constant 0 : index
    %c0_15 = arith.constant 0 : index
    %26 = vector.load %arg5[%c0_13, %c0_14, %c0_15] : memref<6x32x32xbf16, #tpu.memory_space<vmem>>, vector<1x32x32xbf16>
    %27 = vector.shape_cast %26 : vector<1x32x32xbf16> to vector<32x32xbf16>
    %28 = arith.truncf %25 : vector<16x32xf32> to vector<16x32xbf16>
    %cst_16 = arith.constant dense<0.000000e+00> : vector<16x32xf32>
    %29 = tpu.matmul %28, %27, %cst_16 {dimension_numbers = #tpu.dot_dimension_numbers<[1], [0], [0], [1], [0, 0, 1, 1], [], []>} : vector<16x32xbf16>, vector<32x32xbf16>, vector<16x32xf32> -> vector<16x32xf32>
    %c0_17 = arith.constant 0 : index
    %c0_18 = arith.constant 0 : index
    %30 = vector.load %arg6[%c0_17, %c0_18] : memref<8x32xf32, #tpu.memory_space<vmem>>, vector<1x32xf32>
    %31 = vector.broadcast %30 : vector<1x32xf32> to vector<16x32xf32>
    %32 = arith.addf %29, %31 : vector<16x32xf32>
    %cst_19 = arith.constant 0.353553385 : f32
    %33 = vector.broadcast %cst_19 : f32 to vector<16x32xf32>
    %34 = arith.mulf %32, %33 : vector<16x32xf32>
    %c1 = arith.constant 1 : index
    %c0_20 = arith.constant 0 : index
    %c0_21 = arith.constant 0 : index
    %35 = vector.load %arg5[%c1, %c0_20, %c0_21] : memref<6x32x32xbf16, #tpu.memory_space<vmem>>, vector<1x32x32xbf16>
    %36 = vector.shape_cast %35 : vector<1x32x32xbf16> to vector<32x32xbf16>
    %37 = arith.truncf %25 : vector<16x32xf32> to vector<16x32xbf16>
    %cst_22 = arith.constant dense<0.000000e+00> : vector<16x32xf32>
    %38 = tpu.matmul %37, %36, %cst_22 {dimension_numbers = #tpu.dot_dimension_numbers<[1], [0], [0], [1], [0, 0, 1, 1], [], []>} : vector<16x32xbf16>, vector<32x32xbf16>, vector<16x32xf32> -> vector<16x32xf32>
    %c1_23 = arith.constant 1 : index
    %c0_24 = arith.constant 0 : index
    %39 = vector.load %arg6[%c1_23, %c0_24] : memref<8x32xf32, #tpu.memory_space<vmem>>, vector<1x32xf32>
    %40 = vector.broadcast %39 : vector<1x32xf32> to vector<16x32xf32>
    %41 = arith.addf %38, %40 : vector<16x32xf32>
    %c2 = arith.constant 2 : index
    %c0_25 = arith.constant 0 : index
    %c0_26 = arith.constant 0 : index
    %42 = vector.load %arg5[%c2, %c0_25, %c0_26] : memref<6x32x32xbf16, #tpu.memory_space<vmem>>, vector<1x32x32xbf16>
    %43 = vector.shape_cast %42 : vector<1x32x32xbf16> to vector<32x32xbf16>
    %44 = arith.truncf %25 : vector<16x32xf32> to vector<16x32xbf16>
    %cst_27 = arith.constant dense<0.000000e+00> : vector<16x32xf32>
    %45 = tpu.matmul %44, %43, %cst_27 {dimension_numbers = #tpu.dot_dimension_numbers<[1], [0], [0], [1], [0, 0, 1, 1], [], []>} : vector<16x32xbf16>, vector<32x32xbf16>, vector<16x32xf32> -> vector<16x32xf32>
    %c2_28 = arith.constant 2 : index
    %c0_29 = arith.constant 0 : index
    %46 = vector.load %arg6[%c2_28, %c0_29] : memref<8x32xf32, #tpu.memory_space<vmem>>, vector<1x32xf32>
    %47 = vector.broadcast %46 : vector<1x32xf32> to vector<16x32xf32>
    %48 = arith.addf %45, %47 : vector<16x32xf32>
    %49 = vector.shape_cast %34 : vector<16x32xf32> to vector<2x8x32xf32>
    %50 = vector.shape_cast %41 : vector<16x32xf32> to vector<2x8x32xf32>
    %51 = vector.shape_cast %48 : vector<16x32xf32> to vector<2x8x32xf32>
    %c0_30 = arith.constant 0 : index
    %c0_31 = arith.constant 0 : index
    %c0_32 = arith.constant 0 : index
    %52 = vector.load %arg3[%c0_30, %c0_31, %c0_32] : memref<2x8x8xi8, #tpu.memory_space<vmem>>, vector<2x8x8xi8>
    %53 = arith.sitofp %52 : vector<2x8x8xi8> to vector<2x8x8xf32>
    %cst_33 = arith.constant 1.000000e+00 : f32
    %54 = vector.broadcast %cst_33 : f32 to vector<2x8x8xf32>
    %55 = arith.subf %53, %54 : vector<2x8x8xf32>
    %cst_34 = arith.constant 1.000000e+09 : f32
    %56 = vector.broadcast %cst_34 : f32 to vector<2x8x8xf32>
    %57 = arith.mulf %55, %56 : vector<2x8x8xf32>
    %cst_35 = arith.constant 0.000000e+00 : f32
    %58 = vector.broadcast %cst_35 : f32 to vector<8x32xf32>
    %59 = vector.extract_strided_slice %49 {offsets = [0, 0, 0], sizes = [1, 8, 8], strides = [1, 1, 1]} : vector<2x8x32xf32> to vector<1x8x8xf32>
    %60 = vector.shape_cast %59 : vector<1x8x8xf32> to vector<8x8xf32>
    %61 = vector.extract_strided_slice %50 {offsets = [0, 0, 0], sizes = [1, 8, 8], strides = [1, 1, 1]} : vector<2x8x32xf32> to vector<1x8x8xf32>
    %62 = vector.shape_cast %61 : vector<1x8x8xf32> to vector<8x8xf32>
    %63 = vector.extract_strided_slice %51 {offsets = [0, 0, 0], sizes = [1, 8, 8], strides = [1, 1, 1]} : vector<2x8x32xf32> to vector<1x8x8xf32>
    %64 = vector.shape_cast %63 : vector<1x8x8xf32> to vector<8x8xf32>
    %65 = arith.truncf %60 : vector<8x8xf32> to vector<8x8xbf16>
    %66 = arith.truncf %62 : vector<8x8xf32> to vector<8x8xbf16>
    %cst_36 = arith.constant dense<0.000000e+00> : vector<8x8xf32>
    %67 = tpu.matmul %65, %66, %cst_36 {dimension_numbers = #tpu.dot_dimension_numbers<[1], [1], [0], [0], [0, 0, 1, 0], [], []>} : vector<8x8xbf16>, vector<8x8xbf16>, vector<8x8xf32> -> vector<8x8xf32>
    %68 = vector.extract_strided_slice %57 {offsets = [0, 0, 0], sizes = [1, 8, 8], strides = [1, 1, 1]} : vector<2x8x8xf32> to vector<1x8x8xf32>
    %69 = vector.shape_cast %68 : vector<1x8x8xf32> to vector<8x8xf32>
    %70 = arith.addf %67, %69 : vector<8x8xf32>
    %cst_37 = arith.constant dense<0xFF800000> : vector<8xf32>
    %71 = vector.multi_reduction <maximumf>, %70, %cst_37 [1] : vector<8x8xf32> to vector<8xf32>
    %72 = vector.shape_cast %71 : vector<8xf32> to vector<8x1xf32>
    %73 = vector.broadcast %72 : vector<8x1xf32> to vector<8x8xf32>
    %74 = arith.subf %70, %73 : vector<8x8xf32>
    %75 = math.exp %74 : vector<8x8xf32>
    %cst_38 = arith.constant dense<0.000000e+00> : vector<8xf32>
    %76 = vector.multi_reduction <add>, %75, %cst_38 [1] : vector<8x8xf32> to vector<8xf32>
    %77 = vector.shape_cast %76 : vector<8xf32> to vector<8x1xf32>
    %78 = arith.truncf %75 : vector<8x8xf32> to vector<8x8xbf16>
    %79 = arith.truncf %64 : vector<8x8xf32> to vector<8x8xbf16>
    %cst_39 = arith.constant dense<0.000000e+00> : vector<8x8xf32>
    %80 = tpu.matmul %78, %79, %cst_39 {dimension_numbers = #tpu.dot_dimension_numbers<[1], [0], [0], [1], [0, 0, 1, 1], [], []>} : vector<8x8xbf16>, vector<8x8xbf16>, vector<8x8xf32> -> vector<8x8xf32>
    %81 = tpu.reciprocal %77 : vector<8x1xf32> -> vector<8x1xf32>
    %82 = vector.broadcast %81 : vector<8x1xf32> to vector<8x8xf32>
    %83 = arith.mulf %80, %82 : vector<8x8xf32>
    %c0_40 = arith.constant 0 : index
    %c0_41 = arith.constant 0 : index
    %c0_42 = arith.constant 0 : index
    %84 = vector.load %arg7[%c0_40, %c0_41, %c0_42] : memref<8x8x32xbf16, #tpu.memory_space<vmem>>, vector<1x8x32xbf16>
    %85 = vector.shape_cast %84 : vector<1x8x32xbf16> to vector<8x32xbf16>
    %86 = arith.truncf %83 : vector<8x8xf32> to vector<8x8xbf16>
    %cst_43 = arith.constant dense<0.000000e+00> : vector<8x32xf32>
    %87 = tpu.matmul %86, %85, %cst_43 {dimension_numbers = #tpu.dot_dimension_numbers<[1], [0], [0], [1], [0, 0, 1, 1], [], []>} : vector<8x8xbf16>, vector<8x32xbf16>, vector<8x32xf32> -> vector<8x32xf32>
    %88 = arith.addf %58, %87 : vector<8x32xf32>
    %89 = vector.extract_strided_slice %49 {offsets = [0, 0, 8], sizes = [1, 8, 8], strides = [1, 1, 1]} : vector<2x8x32xf32> to vector<1x8x8xf32>
    %90 = vector.shape_cast %89 : vector<1x8x8xf32> to vector<8x8xf32>
    %91 = vector.extract_strided_slice %50 {offsets = [0, 0, 8], sizes = [1, 8, 8], strides = [1, 1, 1]} : vector<2x8x32xf32> to vector<1x8x8xf32>
    %92 = vector.shape_cast %91 : vector<1x8x8xf32> to vector<8x8xf32>
    %93 = vector.extract_strided_slice %51 {offsets = [0, 0, 8], sizes = [1, 8, 8], strides = [1, 1, 1]} : vector<2x8x32xf32> to vector<1x8x8xf32>
    %94 = vector.shape_cast %93 : vector<1x8x8xf32> to vector<8x8xf32>
    %95 = arith.truncf %90 : vector<8x8xf32> to vector<8x8xbf16>
    %96 = arith.truncf %92 : vector<8x8xf32> to vector<8x8xbf16>
    %cst_44 = arith.constant dense<0.000000e+00> : vector<8x8xf32>
    %97 = tpu.matmul %95, %96, %cst_44 {dimension_numbers = #tpu.dot_dimension_numbers<[1], [1], [0], [0], [0, 0, 1, 0], [], []>} : vector<8x8xbf16>, vector<8x8xbf16>, vector<8x8xf32> -> vector<8x8xf32>
    %98 = vector.extract_strided_slice %57 {offsets = [0, 0, 0], sizes = [1, 8, 8], strides = [1, 1, 1]} : vector<2x8x8xf32> to vector<1x8x8xf32>
    %99 = vector.shape_cast %98 : vector<1x8x8xf32> to vector<8x8xf32>
    %100 = arith.addf %97, %99 : vector<8x8xf32>
    %cst_45 = arith.constant dense<0xFF800000> : vector<8xf32>
    %101 = vector.multi_reduction <maximumf>, %100, %cst_45 [1] : vector<8x8xf32> to vector<8xf32>
    %102 = vector.shape_cast %101 : vector<8xf32> to vector<8x1xf32>
    %103 = vector.broadcast %102 : vector<8x1xf32> to vector<8x8xf32>
    %104 = arith.subf %100, %103 : vector<8x8xf32>
    %105 = math.exp %104 : vector<8x8xf32>
    %cst_46 = arith.constant dense<0.000000e+00> : vector<8xf32>
    %106 = vector.multi_reduction <add>, %105, %cst_46 [1] : vector<8x8xf32> to vector<8xf32>
    %107 = vector.shape_cast %106 : vector<8xf32> to vector<8x1xf32>
    %108 = arith.truncf %105 : vector<8x8xf32> to vector<8x8xbf16>
    %109 = arith.truncf %94 : vector<8x8xf32> to vector<8x8xbf16>
    %cst_47 = arith.constant dense<0.000000e+00> : vector<8x8xf32>
    %110 = tpu.matmul %108, %109, %cst_47 {dimension_numbers = #tpu.dot_dimension_numbers<[1], [0], [0], [1], [0, 0, 1, 1], [], []>} : vector<8x8xbf16>, vector<8x8xbf16>, vector<8x8xf32> -> vector<8x8xf32>
    %111 = tpu.reciprocal %107 : vector<8x1xf32> -> vector<8x1xf32>
    %112 = vector.broadcast %111 : vector<8x1xf32> to vector<8x8xf32>
    %113 = arith.mulf %110, %112 : vector<8x8xf32>
    %c1_48 = arith.constant 1 : index
    %c0_49 = arith.constant 0 : index
    %c0_50 = arith.constant 0 : index
    %114 = vector.load %arg7[%c1_48, %c0_49, %c0_50] : memref<8x8x32xbf16, #tpu.memory_space<vmem>>, vector<1x8x32xbf16>
    %115 = vector.shape_cast %114 : vector<1x8x32xbf16> to vector<8x32xbf16>
    %116 = arith.truncf %113 : vector<8x8xf32> to vector<8x8xbf16>
    %cst_51 = arith.constant dense<0.000000e+00> : vector<8x32xf32>
    %117 = tpu.matmul %116, %115, %cst_51 {dimension_numbers = #tpu.dot_dimension_numbers<[1], [0], [0], [1], [0, 0, 1, 1], [], []>} : vector<8x8xbf16>, vector<8x32xbf16>, vector<8x32xf32> -> vector<8x32xf32>
    %118 = arith.addf %88, %117 : vector<8x32xf32>
    %119 = vector.extract_strided_slice %49 {offsets = [0, 0, 16], sizes = [1, 8, 8], strides = [1, 1, 1]} : vector<2x8x32xf32> to vector<1x8x8xf32>
    %120 = vector.shape_cast %119 : vector<1x8x8xf32> to vector<8x8xf32>
    %121 = vector.extract_strided_slice %50 {offsets = [0, 0, 16], sizes = [1, 8, 8], strides = [1, 1, 1]} : vector<2x8x32xf32> to vector<1x8x8xf32>
    %122 = vector.shape_cast %121 : vector<1x8x8xf32> to vector<8x8xf32>
    %123 = vector.extract_strided_slice %51 {offsets = [0, 0, 16], sizes = [1, 8, 8], strides = [1, 1, 1]} : vector<2x8x32xf32> to vector<1x8x8xf32>
    %124 = vector.shape_cast %123 : vector<1x8x8xf32> to vector<8x8xf32>
    %125 = arith.truncf %120 : vector<8x8xf32> to vector<8x8xbf16>
    %126 = arith.truncf %122 : vector<8x8xf32> to vector<8x8xbf16>
    %cst_52 = arith.constant dense<0.000000e+00> : vector<8x8xf32>
    %127 = tpu.matmul %125, %126, %cst_52 {dimension_numbers = #tpu.dot_dimension_numbers<[1], [1], [0], [0], [0, 0, 1, 0], [], []>} : vector<8x8xbf16>, vector<8x8xbf16>, vector<8x8xf32> -> vector<8x8xf32>
    %128 = vector.extract_strided_slice %57 {offsets = [0, 0, 0], sizes = [1, 8, 8], strides = [1, 1, 1]} : vector<2x8x8xf32> to vector<1x8x8xf32>
    %129 = vector.shape_cast %128 : vector<1x8x8xf32> to vector<8x8xf32>
    %130 = arith.addf %127, %129 : vector<8x8xf32>
    %cst_53 = arith.constant dense<0xFF800000> : vector<8xf32>
    %131 = vector.multi_reduction <maximumf>, %130, %cst_53 [1] : vector<8x8xf32> to vector<8xf32>
    %132 = vector.shape_cast %131 : vector<8xf32> to vector<8x1xf32>
    %133 = vector.broadcast %132 : vector<8x1xf32> to vector<8x8xf32>
    %134 = arith.subf %130, %133 : vector<8x8xf32>
    %135 = math.exp %134 : vector<8x8xf32>
    %cst_54 = arith.constant dense<0.000000e+00> : vector<8xf32>
    %136 = vector.multi_reduction <add>, %135, %cst_54 [1] : vector<8x8xf32> to vector<8xf32>
    %137 = vector.shape_cast %136 : vector<8xf32> to vector<8x1xf32>
    %138 = arith.truncf %135 : vector<8x8xf32> to vector<8x8xbf16>
    %139 = arith.truncf %124 : vector<8x8xf32> to vector<8x8xbf16>
    %cst_55 = arith.constant dense<0.000000e+00> : vector<8x8xf32>
    %140 = tpu.matmul %138, %139, %cst_55 {dimension_numbers = #tpu.dot_dimension_numbers<[1], [0], [0], [1], [0, 0, 1, 1], [], []>} : vector<8x8xbf16>, vector<8x8xbf16>, vector<8x8xf32> -> vector<8x8xf32>
    %141 = tpu.reciprocal %137 : vector<8x1xf32> -> vector<8x1xf32>
    %142 = vector.broadcast %141 : vector<8x1xf32> to vector<8x8xf32>
    %143 = arith.mulf %140, %142 : vector<8x8xf32>
    %c2_56 = arith.constant 2 : index
    %c0_57 = arith.constant 0 : index
    %c0_58 = arith.constant 0 : index
    %144 = vector.load %arg7[%c2_56, %c0_57, %c0_58] : memref<8x8x32xbf16, #tpu.memory_space<vmem>>, vector<1x8x32xbf16>
    %145 = vector.shape_cast %144 : vector<1x8x32xbf16> to vector<8x32xbf16>
    %146 = arith.truncf %143 : vector<8x8xf32> to vector<8x8xbf16>
    %cst_59 = arith.constant dense<0.000000e+00> : vector<8x32xf32>
    %147 = tpu.matmul %146, %145, %cst_59 {dimension_numbers = #tpu.dot_dimension_numbers<[1], [0], [0], [1], [0, 0, 1, 1], [], []>} : vector<8x8xbf16>, vector<8x32xbf16>, vector<8x32xf32> -> vector<8x32xf32>
    %148 = arith.addf %118, %147 : vector<8x32xf32>
    %149 = vector.extract_strided_slice %49 {offsets = [0, 0, 24], sizes = [1, 8, 8], strides = [1, 1, 1]} : vector<2x8x32xf32> to vector<1x8x8xf32>
    %150 = vector.shape_cast %149 : vector<1x8x8xf32> to vector<8x8xf32>
    %151 = vector.extract_strided_slice %50 {offsets = [0, 0, 24], sizes = [1, 8, 8], strides = [1, 1, 1]} : vector<2x8x32xf32> to vector<1x8x8xf32>
    %152 = vector.shape_cast %151 : vector<1x8x8xf32> to vector<8x8xf32>
    %153 = vector.extract_strided_slice %51 {offsets = [0, 0, 24], sizes = [1, 8, 8], strides = [1, 1, 1]} : vector<2x8x32xf32> to vector<1x8x8xf32>
    %154 = vector.shape_cast %153 : vector<1x8x8xf32> to vector<8x8xf32>
    %155 = arith.truncf %150 : vector<8x8xf32> to vector<8x8xbf16>
    %156 = arith.truncf %152 : vector<8x8xf32> to vector<8x8xbf16>
    %cst_60 = arith.constant dense<0.000000e+00> : vector<8x8xf32>
    %157 = tpu.matmul %155, %156, %cst_60 {dimension_numbers = #tpu.dot_dimension_numbers<[1], [1], [0], [0], [0, 0, 1, 0], [], []>} : vector<8x8xbf16>, vector<8x8xbf16>, vector<8x8xf32> -> vector<8x8xf32>
    %158 = vector.extract_strided_slice %57 {offsets = [0, 0, 0], sizes = [1, 8, 8], strides = [1, 1, 1]} : vector<2x8x8xf32> to vector<1x8x8xf32>
    %159 = vector.shape_cast %158 : vector<1x8x8xf32> to vector<8x8xf32>
    %160 = arith.addf %157, %159 : vector<8x8xf32>
    %cst_61 = arith.constant dense<0xFF800000> : vector<8xf32>
    %161 = vector.multi_reduction <maximumf>, %160, %cst_61 [1] : vector<8x8xf32> to vector<8xf32>
    %162 = vector.shape_cast %161 : vector<8xf32> to vector<8x1xf32>
    %163 = vector.broadcast %162 : vector<8x1xf32> to vector<8x8xf32>
    %164 = arith.subf %160, %163 : vector<8x8xf32>
    %165 = math.exp %164 : vector<8x8xf32>
    %cst_62 = arith.constant dense<0.000000e+00> : vector<8xf32>
    %166 = vector.multi_reduction <add>, %165, %cst_62 [1] : vector<8x8xf32> to vector<8xf32>
    %167 = vector.shape_cast %166 : vector<8xf32> to vector<8x1xf32>
    %168 = arith.truncf %165 : vector<8x8xf32> to vector<8x8xbf16>
    %169 = arith.truncf %154 : vector<8x8xf32> to vector<8x8xbf16>
    %cst_63 = arith.constant dense<0.000000e+00> : vector<8x8xf32>
    %170 = tpu.matmul %168, %169, %cst_63 {dimension_numbers = #tpu.dot_dimension_numbers<[1], [0], [0], [1], [0, 0, 1, 1], [], []>} : vector<8x8xbf16>, vector<8x8xbf16>, vector<8x8xf32> -> vector<8x8xf32>
    %171 = tpu.reciprocal %167 : vector<8x1xf32> -> vector<8x1xf32>
    %172 = vector.broadcast %171 : vector<8x1xf32> to vector<8x8xf32>
    %173 = arith.mulf %170, %172 : vector<8x8xf32>
    %c3 = arith.constant 3 : index
    %c0_64 = arith.constant 0 : index
    %c0_65 = arith.constant 0 : index
    %174 = vector.load %arg7[%c3, %c0_64, %c0_65] : memref<8x8x32xbf16, #tpu.memory_space<vmem>>, vector<1x8x32xbf16>
    %175 = vector.shape_cast %174 : vector<1x8x32xbf16> to vector<8x32xbf16>
    %176 = arith.truncf %173 : vector<8x8xf32> to vector<8x8xbf16>
    %cst_66 = arith.constant dense<0.000000e+00> : vector<8x32xf32>
    %177 = tpu.matmul %176, %175, %cst_66 {dimension_numbers = #tpu.dot_dimension_numbers<[1], [0], [0], [1], [0, 0, 1, 1], [], []>} : vector<8x8xbf16>, vector<8x32xbf16>, vector<8x32xf32> -> vector<8x32xf32>
    %178 = arith.addf %148, %177 : vector<8x32xf32>
    %cst_67 = arith.constant 0.000000e+00 : f32
    %179 = vector.broadcast %cst_67 : f32 to vector<8x32xf32>
    %180 = vector.extract_strided_slice %49 {offsets = [1, 0, 0], sizes = [1, 8, 8], strides = [1, 1, 1]} : vector<2x8x32xf32> to vector<1x8x8xf32>
    %181 = vector.shape_cast %180 : vector<1x8x8xf32> to vector<8x8xf32>
    %182 = vector.extract_strided_slice %50 {offsets = [1, 0, 0], sizes = [1, 8, 8], strides = [1, 1, 1]} : vector<2x8x32xf32> to vector<1x8x8xf32>
    %183 = vector.shape_cast %182 : vector<1x8x8xf32> to vector<8x8xf32>
    %184 = vector.extract_strided_slice %51 {offsets = [1, 0, 0], sizes = [1, 8, 8], strides = [1, 1, 1]} : vector<2x8x32xf32> to vector<1x8x8xf32>
    %185 = vector.shape_cast %184 : vector<1x8x8xf32> to vector<8x8xf32>
    %186 = arith.truncf %181 : vector<8x8xf32> to vector<8x8xbf16>
    %187 = arith.truncf %183 : vector<8x8xf32> to vector<8x8xbf16>
    %cst_68 = arith.constant dense<0.000000e+00> : vector<8x8xf32>
    %188 = tpu.matmul %186, %187, %cst_68 {dimension_numbers = #tpu.dot_dimension_numbers<[1], [1], [0], [0], [0, 0, 1, 0], [], []>} : vector<8x8xbf16>, vector<8x8xbf16>, vector<8x8xf32> -> vector<8x8xf32>
    %189 = vector.extract_strided_slice %57 {offsets = [1, 0, 0], sizes = [1, 8, 8], strides = [1, 1, 1]} : vector<2x8x8xf32> to vector<1x8x8xf32>
    %190 = vector.shape_cast %189 : vector<1x8x8xf32> to vector<8x8xf32>
    %191 = arith.addf %188, %190 : vector<8x8xf32>
    %cst_69 = arith.constant dense<0xFF800000> : vector<8xf32>
    %192 = vector.multi_reduction <maximumf>, %191, %cst_69 [1] : vector<8x8xf32> to vector<8xf32>
    %193 = vector.shape_cast %192 : vector<8xf32> to vector<8x1xf32>
    %194 = vector.broadcast %193 : vector<8x1xf32> to vector<8x8xf32>
    %195 = arith.subf %191, %194 : vector<8x8xf32>
    %196 = math.exp %195 : vector<8x8xf32>
    %cst_70 = arith.constant dense<0.000000e+00> : vector<8xf32>
    %197 = vector.multi_reduction <add>, %196, %cst_70 [1] : vector<8x8xf32> to vector<8xf32>
    %198 = vector.shape_cast %197 : vector<8xf32> to vector<8x1xf32>
    %199 = arith.truncf %196 : vector<8x8xf32> to vector<8x8xbf16>
    %200 = arith.truncf %185 : vector<8x8xf32> to vector<8x8xbf16>
    %cst_71 = arith.constant dense<0.000000e+00> : vector<8x8xf32>
    %201 = tpu.matmul %199, %200, %cst_71 {dimension_numbers = #tpu.dot_dimension_numbers<[1], [0], [0], [1], [0, 0, 1, 1], [], []>} : vector<8x8xbf16>, vector<8x8xbf16>, vector<8x8xf32> -> vector<8x8xf32>
    %202 = tpu.reciprocal %198 : vector<8x1xf32> -> vector<8x1xf32>
    %203 = vector.broadcast %202 : vector<8x1xf32> to vector<8x8xf32>
    %204 = arith.mulf %201, %203 : vector<8x8xf32>
    %c0_72 = arith.constant 0 : index
    %c0_73 = arith.constant 0 : index
    %c0_74 = arith.constant 0 : index
    %205 = vector.load %arg7[%c0_72, %c0_73, %c0_74] : memref<8x8x32xbf16, #tpu.memory_space<vmem>>, vector<1x8x32xbf16>
    %206 = vector.shape_cast %205 : vector<1x8x32xbf16> to vector<8x32xbf16>
    %207 = arith.truncf %204 : vector<8x8xf32> to vector<8x8xbf16>
    %cst_75 = arith.constant dense<0.000000e+00> : vector<8x32xf32>
    %208 = tpu.matmul %207, %206, %cst_75 {dimension_numbers = #tpu.dot_dimension_numbers<[1], [0], [0], [1], [0, 0, 1, 1], [], []>} : vector<8x8xbf16>, vector<8x32xbf16>, vector<8x32xf32> -> vector<8x32xf32>
    %209 = arith.addf %179, %208 : vector<8x32xf32>
    %210 = vector.extract_strided_slice %49 {offsets = [1, 0, 8], sizes = [1, 8, 8], strides = [1, 1, 1]} : vector<2x8x32xf32> to vector<1x8x8xf32>
    %211 = vector.shape_cast %210 : vector<1x8x8xf32> to vector<8x8xf32>
    %212 = vector.extract_strided_slice %50 {offsets = [1, 0, 8], sizes = [1, 8, 8], strides = [1, 1, 1]} : vector<2x8x32xf32> to vector<1x8x8xf32>
    %213 = vector.shape_cast %212 : vector<1x8x8xf32> to vector<8x8xf32>
    %214 = vector.extract_strided_slice %51 {offsets = [1, 0, 8], sizes = [1, 8, 8], strides = [1, 1, 1]} : vector<2x8x32xf32> to vector<1x8x8xf32>
    %215 = vector.shape_cast %214 : vector<1x8x8xf32> to vector<8x8xf32>
    %216 = arith.truncf %211 : vector<8x8xf32> to vector<8x8xbf16>
    %217 = arith.truncf %213 : vector<8x8xf32> to vector<8x8xbf16>
    %cst_76 = arith.constant dense<0.000000e+00> : vector<8x8xf32>
    %218 = tpu.matmul %216, %217, %cst_76 {dimension_numbers = #tpu.dot_dimension_numbers<[1], [1], [0], [0], [0, 0, 1, 0], [], []>} : vector<8x8xbf16>, vector<8x8xbf16>, vector<8x8xf32> -> vector<8x8xf32>
    %219 = vector.extract_strided_slice %57 {offsets = [1, 0, 0], sizes = [1, 8, 8], strides = [1, 1, 1]} : vector<2x8x8xf32> to vector<1x8x8xf32>
    %220 = vector.shape_cast %219 : vector<1x8x8xf32> to vector<8x8xf32>
    %221 = arith.addf %218, %220 : vector<8x8xf32>
    %cst_77 = arith.constant dense<0xFF800000> : vector<8xf32>
    %222 = vector.multi_reduction <maximumf>, %221, %cst_77 [1] : vector<8x8xf32> to vector<8xf32>
    %223 = vector.shape_cast %222 : vector<8xf32> to vector<8x1xf32>
    %224 = vector.broadcast %223 : vector<8x1xf32> to vector<8x8xf32>
    %225 = arith.subf %221, %224 : vector<8x8xf32>
    %226 = math.exp %225 : vector<8x8xf32>
    %cst_78 = arith.constant dense<0.000000e+00> : vector<8xf32>
    %227 = vector.multi_reduction <add>, %226, %cst_78 [1] : vector<8x8xf32> to vector<8xf32>
    %228 = vector.shape_cast %227 : vector<8xf32> to vector<8x1xf32>
    %229 = arith.truncf %226 : vector<8x8xf32> to vector<8x8xbf16>
    %230 = arith.truncf %215 : vector<8x8xf32> to vector<8x8xbf16>
    %cst_79 = arith.constant dense<0.000000e+00> : vector<8x8xf32>
    %231 = tpu.matmul %229, %230, %cst_79 {dimension_numbers = #tpu.dot_dimension_numbers<[1], [0], [0], [1], [0, 0, 1, 1], [], []>} : vector<8x8xbf16>, vector<8x8xbf16>, vector<8x8xf32> -> vector<8x8xf32>
    %232 = tpu.reciprocal %228 : vector<8x1xf32> -> vector<8x1xf32>
    %233 = vector.broadcast %232 : vector<8x1xf32> to vector<8x8xf32>
    %234 = arith.mulf %231, %233 : vector<8x8xf32>
    %c1_80 = arith.constant 1 : index
    %c0_81 = arith.constant 0 : index
    %c0_82 = arith.constant 0 : index
    %235 = vector.load %arg7[%c1_80, %c0_81, %c0_82] : memref<8x8x32xbf16, #tpu.memory_space<vmem>>, vector<1x8x32xbf16>
    %236 = vector.shape_cast %235 : vector<1x8x32xbf16> to vector<8x32xbf16>
    %237 = arith.truncf %234 : vector<8x8xf32> to vector<8x8xbf16>
    %cst_83 = arith.constant dense<0.000000e+00> : vector<8x32xf32>
    %238 = tpu.matmul %237, %236, %cst_83 {dimension_numbers = #tpu.dot_dimension_numbers<[1], [0], [0], [1], [0, 0, 1, 1], [], []>} : vector<8x8xbf16>, vector<8x32xbf16>, vector<8x32xf32> -> vector<8x32xf32>
    %239 = arith.addf %209, %238 : vector<8x32xf32>
    %240 = vector.extract_strided_slice %49 {offsets = [1, 0, 16], sizes = [1, 8, 8], strides = [1, 1, 1]} : vector<2x8x32xf32> to vector<1x8x8xf32>
    %241 = vector.shape_cast %240 : vector<1x8x8xf32> to vector<8x8xf32>
    %242 = vector.extract_strided_slice %50 {offsets = [1, 0, 16], sizes = [1, 8, 8], strides = [1, 1, 1]} : vector<2x8x32xf32> to vector<1x8x8xf32>
    %243 = vector.shape_cast %242 : vector<1x8x8xf32> to vector<8x8xf32>
    %244 = vector.extract_strided_slice %51 {offsets = [1, 0, 16], sizes = [1, 8, 8], strides = [1, 1, 1]} : vector<2x8x32xf32> to vector<1x8x8xf32>
    %245 = vector.shape_cast %244 : vector<1x8x8xf32> to vector<8x8xf32>
    %246 = arith.truncf %241 : vector<8x8xf32> to vector<8x8xbf16>
    %247 = arith.truncf %243 : vector<8x8xf32> to vector<8x8xbf16>
    %cst_84 = arith.constant dense<0.000000e+00> : vector<8x8xf32>
    %248 = tpu.matmul %246, %247, %cst_84 {dimension_numbers = #tpu.dot_dimension_numbers<[1], [1], [0], [0], [0, 0, 1, 0], [], []>} : vector<8x8xbf16>, vector<8x8xbf16>, vector<8x8xf32> -> vector<8x8xf32>
    %249 = vector.extract_strided_slice %57 {offsets = [1, 0, 0], sizes = [1, 8, 8], strides = [1, 1, 1]} : vector<2x8x8xf32> to vector<1x8x8xf32>
    %250 = vector.shape_cast %249 : vector<1x8x8xf32> to vector<8x8xf32>
    %251 = arith.addf %248, %250 : vector<8x8xf32>
    %cst_85 = arith.constant dense<0xFF800000> : vector<8xf32>
    %252 = vector.multi_reduction <maximumf>, %251, %cst_85 [1] : vector<8x8xf32> to vector<8xf32>
    %253 = vector.shape_cast %252 : vector<8xf32> to vector<8x1xf32>
    %254 = vector.broadcast %253 : vector<8x1xf32> to vector<8x8xf32>
    %255 = arith.subf %251, %254 : vector<8x8xf32>
    %256 = math.exp %255 : vector<8x8xf32>
    %cst_86 = arith.constant dense<0.000000e+00> : vector<8xf32>
    %257 = vector.multi_reduction <add>, %256, %cst_86 [1] : vector<8x8xf32> to vector<8xf32>
    %258 = vector.shape_cast %257 : vector<8xf32> to vector<8x1xf32>
    %259 = arith.truncf %256 : vector<8x8xf32> to vector<8x8xbf16>
    %260 = arith.truncf %245 : vector<8x8xf32> to vector<8x8xbf16>
    %cst_87 = arith.constant dense<0.000000e+00> : vector<8x8xf32>
    %261 = tpu.matmul %259, %260, %cst_87 {dimension_numbers = #tpu.dot_dimension_numbers<[1], [0], [0], [1], [0, 0, 1, 1], [], []>} : vector<8x8xbf16>, vector<8x8xbf16>, vector<8x8xf32> -> vector<8x8xf32>
    %262 = tpu.reciprocal %258 : vector<8x1xf32> -> vector<8x1xf32>
    %263 = vector.broadcast %262 : vector<8x1xf32> to vector<8x8xf32>
    %264 = arith.mulf %261, %263 : vector<8x8xf32>
    %c2_88 = arith.constant 2 : index
    %c0_89 = arith.constant 0 : index
    %c0_90 = arith.constant 0 : index
    %265 = vector.load %arg7[%c2_88, %c0_89, %c0_90] : memref<8x8x32xbf16, #tpu.memory_space<vmem>>, vector<1x8x32xbf16>
    %266 = vector.shape_cast %265 : vector<1x8x32xbf16> to vector<8x32xbf16>
    %267 = arith.truncf %264 : vector<8x8xf32> to vector<8x8xbf16>
    %cst_91 = arith.constant dense<0.000000e+00> : vector<8x32xf32>
    %268 = tpu.matmul %267, %266, %cst_91 {dimension_numbers = #tpu.dot_dimension_numbers<[1], [0], [0], [1], [0, 0, 1, 1], [], []>} : vector<8x8xbf16>, vector<8x32xbf16>, vector<8x32xf32> -> vector<8x32xf32>
    %269 = arith.addf %239, %268 : vector<8x32xf32>
    %270 = vector.extract_strided_slice %49 {offsets = [1, 0, 24], sizes = [1, 8, 8], strides = [1, 1, 1]} : vector<2x8x32xf32> to vector<1x8x8xf32>
    %271 = vector.shape_cast %270 : vector<1x8x8xf32> to vector<8x8xf32>
    %272 = vector.extract_strided_slice %50 {offsets = [1, 0, 24], sizes = [1, 8, 8], strides = [1, 1, 1]} : vector<2x8x32xf32> to vector<1x8x8xf32>
    %273 = vector.shape_cast %272 : vector<1x8x8xf32> to vector<8x8xf32>
    %274 = vector.extract_strided_slice %51 {offsets = [1, 0, 24], sizes = [1, 8, 8], strides = [1, 1, 1]} : vector<2x8x32xf32> to vector<1x8x8xf32>
    %275 = vector.shape_cast %274 : vector<1x8x8xf32> to vector<8x8xf32>
    %276 = arith.truncf %271 : vector<8x8xf32> to vector<8x8xbf16>
    %277 = arith.truncf %273 : vector<8x8xf32> to vector<8x8xbf16>
    %cst_92 = arith.constant dense<0.000000e+00> : vector<8x8xf32>
    %278 = tpu.matmul %276, %277, %cst_92 {dimension_numbers = #tpu.dot_dimension_numbers<[1], [1], [0], [0], [0, 0, 1, 0], [], []>} : vector<8x8xbf16>, vector<8x8xbf16>, vector<8x8xf32> -> vector<8x8xf32>
    %279 = vector.extract_strided_slice %57 {offsets = [1, 0, 0], sizes = [1, 8, 8], strides = [1, 1, 1]} : vector<2x8x8xf32> to vector<1x8x8xf32>
    %280 = vector.shape_cast %279 : vector<1x8x8xf32> to vector<8x8xf32>
    %281 = arith.addf %278, %280 : vector<8x8xf32>
    %cst_93 = arith.constant dense<0xFF800000> : vector<8xf32>
    %282 = vector.multi_reduction <maximumf>, %281, %cst_93 [1] : vector<8x8xf32> to vector<8xf32>
    %283 = vector.shape_cast %282 : vector<8xf32> to vector<8x1xf32>
    %284 = vector.broadcast %283 : vector<8x1xf32> to vector<8x8xf32>
    %285 = arith.subf %281, %284 : vector<8x8xf32>
    %286 = math.exp %285 : vector<8x8xf32>
    %cst_94 = arith.constant dense<0.000000e+00> : vector<8xf32>
    %287 = vector.multi_reduction <add>, %286, %cst_94 [1] : vector<8x8xf32> to vector<8xf32>
    %288 = vector.shape_cast %287 : vector<8xf32> to vector<8x1xf32>
    %289 = arith.truncf %286 : vector<8x8xf32> to vector<8x8xbf16>
    %290 = arith.truncf %275 : vector<8x8xf32> to vector<8x8xbf16>
    %cst_95 = arith.constant dense<0.000000e+00> : vector<8x8xf32>
    %291 = tpu.matmul %289, %290, %cst_95 {dimension_numbers = #tpu.dot_dimension_numbers<[1], [0], [0], [1], [0, 0, 1, 1], [], []>} : vector<8x8xbf16>, vector<8x8xbf16>, vector<8x8xf32> -> vector<8x8xf32>
    %292 = tpu.reciprocal %288 : vector<8x1xf32> -> vector<8x1xf32>
    %293 = vector.broadcast %292 : vector<8x1xf32> to vector<8x8xf32>
    %294 = arith.mulf %291, %293 : vector<8x8xf32>
    %c3_96 = arith.constant 3 : index
    %c0_97 = arith.constant 0 : index
    %c0_98 = arith.constant 0 : index
    %295 = vector.load %arg7[%c3_96, %c0_97, %c0_98] : memref<8x8x32xbf16, #tpu.memory_space<vmem>>, vector<1x8x32xbf16>
    %296 = vector.shape_cast %295 : vector<1x8x32xbf16> to vector<8x32xbf16>
    %297 = arith.truncf %294 : vector<8x8xf32> to vector<8x8xbf16>
    %cst_99 = arith.constant dense<0.000000e+00> : vector<8x32xf32>
    %298 = tpu.matmul %297, %296, %cst_99 {dimension_numbers = #tpu.dot_dimension_numbers<[1], [0], [0], [1], [0, 0, 1, 1], [], []>} : vector<8x8xbf16>, vector<8x32xbf16>, vector<8x32xf32> -> vector<8x32xf32>
    %299 = arith.addf %269, %298 : vector<8x32xf32>
    %300 = tpu.concatenate %178, %299 in 0 : vector<8x32xf32>, vector<8x32xf32> -> vector<16x32xf32>
    %c3_100 = arith.constant 3 : index
    %c0_101 = arith.constant 0 : index
    %301 = vector.load %arg6[%c3_100, %c0_101] : memref<8x32xf32, #tpu.memory_space<vmem>>, vector<1x32xf32>
    %302 = vector.broadcast %301 : vector<1x32xf32> to vector<16x32xf32>
    %303 = arith.addf %300, %302 : vector<16x32xf32>
    %304 = arith.addf %1, %303 : vector<16x32xf32>
    %c1_102 = arith.constant 1 : index
    %c0_103 = arith.constant 0 : index
    %305 = vector.load %arg8[%c1_102, %c0_103] : memref<3x32xf32, #tpu.memory_space<vmem>>, vector<1x32xf32>
    %c1_104 = arith.constant 1 : index
    %c0_105 = arith.constant 0 : index
    %306 = vector.load %arg9[%c1_104, %c0_105] : memref<3x32xf32, #tpu.memory_space<vmem>>, vector<1x32xf32>
    %cst_106 = arith.constant dense<0.000000e+00> : vector<16xf32>
    %307 = vector.multi_reduction <add>, %304, %cst_106 [1] : vector<16x32xf32> to vector<16xf32>
    %308 = vector.shape_cast %307 : vector<16xf32> to vector<16x1xf32>
    %cst_107 = arith.constant 3.200000e+01 : f32
    %309 = vector.broadcast %cst_107 : f32 to vector<16x1xf32>
    %310 = arith.divf %308, %309 : vector<16x1xf32>
    %311 = vector.broadcast %310 : vector<16x1xf32> to vector<16x32xf32>
    %312 = arith.subf %304, %311 : vector<16x32xf32>
    %313 = arith.mulf %312, %312 : vector<16x32xf32>
    %cst_108 = arith.constant dense<0.000000e+00> : vector<16xf32>
    %314 = vector.multi_reduction <add>, %313, %cst_108 [1] : vector<16x32xf32> to vector<16xf32>
    %315 = vector.shape_cast %314 : vector<16xf32> to vector<16x1xf32>
    %cst_109 = arith.constant 0.0322580636 : f32
    %316 = vector.broadcast %cst_109 : f32 to vector<16x1xf32>
    %317 = arith.mulf %315, %316 : vector<16x1xf32>
    %318 = math.sqrt %317 : vector<16x1xf32>
    %319 = vector.broadcast %305 : vector<1x32xf32> to vector<16x32xf32>
    %320 = arith.mulf %319, %312 : vector<16x32xf32>
    %cst_110 = arith.constant 9.99999997E-7 : f32
    %321 = vector.broadcast %cst_110 : f32 to vector<16x1xf32>
    %322 = arith.addf %318, %321 : vector<16x1xf32>
    %323 = vector.broadcast %322 : vector<16x1xf32> to vector<16x32xf32>
    %324 = arith.divf %320, %323 : vector<16x32xf32>
    %325 = vector.broadcast %306 : vector<1x32xf32> to vector<16x32xf32>
    %326 = arith.addf %324, %325 : vector<16x32xf32>
    %c3_111 = arith.constant 3 : index
    %c0_112 = arith.constant 0 : index
    %c0_113 = arith.constant 0 : index
    %327 = vector.load %arg5[%c3_111, %c0_112, %c0_113] : memref<6x32x32xbf16, #tpu.memory_space<vmem>>, vector<1x32x32xbf16>
    %328 = vector.shape_cast %327 : vector<1x32x32xbf16> to vector<32x32xbf16>
    %329 = arith.truncf %326 : vector<16x32xf32> to vector<16x32xbf16>
    %cst_114 = arith.constant dense<0.000000e+00> : vector<16x32xf32>
    %330 = tpu.matmul %329, %328, %cst_114 {dimension_numbers = #tpu.dot_dimension_numbers<[1], [0], [0], [1], [0, 0, 1, 1], [], []>} : vector<16x32xbf16>, vector<32x32xbf16>, vector<16x32xf32> -> vector<16x32xf32>
    %c4 = arith.constant 4 : index
    %c0_115 = arith.constant 0 : index
    %331 = vector.load %arg6[%c4, %c0_115] : memref<8x32xf32, #tpu.memory_space<vmem>>, vector<1x32xf32>
    %332 = vector.broadcast %331 : vector<1x32xf32> to vector<16x32xf32>
    %333 = arith.addf %330, %332 : vector<16x32xf32>
    %cst_116 = arith.constant 0.353553385 : f32
    %334 = vector.broadcast %cst_116 : f32 to vector<16x32xf32>
    %335 = arith.mulf %333, %334 : vector<16x32xf32>
    %c4_117 = arith.constant 4 : index
    %c0_118 = arith.constant 0 : index
    %c0_119 = arith.constant 0 : index
    %336 = vector.load %arg5[%c4_117, %c0_118, %c0_119] : memref<6x32x32xbf16, #tpu.memory_space<vmem>>, vector<1x32x32xbf16>
    %337 = vector.shape_cast %336 : vector<1x32x32xbf16> to vector<32x32xbf16>
    %338 = arith.truncf %3 : vector<32x32xf32> to vector<32x32xbf16>
    %cst_120 = arith.constant dense<0.000000e+00> : vector<32x32xf32>
    %339 = tpu.matmul %338, %337, %cst_120 {dimension_numbers = #tpu.dot_dimension_numbers<[1], [0], [0], [1], [0, 0, 1, 1], [], []>} : vector<32x32xbf16>, vector<32x32xbf16>, vector<32x32xf32> -> vector<32x32xf32>
    %c5 = arith.constant 5 : index
    %c0_121 = arith.constant 0 : index
    %340 = vector.load %arg6[%c5, %c0_121] : memref<8x32xf32, #tpu.memory_space<vmem>>, vector<1x32xf32>
    %341 = vector.broadcast %340 : vector<1x32xf32> to vector<32x32xf32>
    %342 = arith.addf %339, %341 : vector<32x32xf32>
    %c5_122 = arith.constant 5 : index
    %c0_123 = arith.constant 0 : index
    %c0_124 = arith.constant 0 : index
    %343 = vector.load %arg5[%c5_122, %c0_123, %c0_124] : memref<6x32x32xbf16, #tpu.memory_space<vmem>>, vector<1x32x32xbf16>
    %344 = vector.shape_cast %343 : vector<1x32x32xbf16> to vector<32x32xbf16>
    %345 = arith.truncf %3 : vector<32x32xf32> to vector<32x32xbf16>
    %cst_125 = arith.constant dense<0.000000e+00> : vector<32x32xf32>
    %346 = tpu.matmul %345, %344, %cst_125 {dimension_numbers = #tpu.dot_dimension_numbers<[1], [0], [0], [1], [0, 0, 1, 1], [], []>} : vector<32x32xbf16>, vector<32x32xbf16>, vector<32x32xf32> -> vector<32x32xf32>
    %c6 = arith.constant 6 : index
    %c0_126 = arith.constant 0 : index
    %347 = vector.load %arg6[%c6, %c0_126] : memref<8x32xf32, #tpu.memory_space<vmem>>, vector<1x32xf32>
    %348 = vector.broadcast %347 : vector<1x32xf32> to vector<32x32xf32>
    %349 = arith.addf %346, %348 : vector<32x32xf32>
    %350 = vector.shape_cast %335 : vector<16x32xf32> to vector<2x8x32xf32>
    %351 = vector.shape_cast %342 : vector<32x32xf32> to vector<2x16x32xf32>
    %352 = vector.shape_cast %349 : vector<32x32xf32> to vector<2x16x32xf32>
    %c0_127 = arith.constant 0 : index
    %c0_128 = arith.constant 0 : index
    %c0_129 = arith.constant 0 : index
    %353 = vector.load %arg4[%c0_127, %c0_128, %c0_129] : memref<2x8x16xi8, #tpu.memory_space<vmem>>, vector<2x8x16xi8>
    %354 = arith.sitofp %353 : vector<2x8x16xi8> to vector<2x8x16xf32>
    %cst_130 = arith.constant 1.000000e+00 : f32
    %355 = vector.broadcast %cst_130 : f32 to vector<2x8x16xf32>
    %356 = arith.subf %354, %355 : vector<2x8x16xf32>
    %cst_131 = arith.constant 1.000000e+09 : f32
    %357 = vector.broadcast %cst_131 : f32 to vector<2x8x16xf32>
    %358 = arith.mulf %356, %357 : vector<2x8x16xf32>
    %cst_132 = arith.constant 0.000000e+00 : f32
    %359 = vector.broadcast %cst_132 : f32 to vector<8x32xf32>
    %360 = vector.extract_strided_slice %350 {offsets = [0, 0, 0], sizes = [1, 8, 8], strides = [1, 1, 1]} : vector<2x8x32xf32> to vector<1x8x8xf32>
    %361 = vector.shape_cast %360 : vector<1x8x8xf32> to vector<8x8xf32>
    %362 = vector.extract_strided_slice %351 {offsets = [0, 0, 0], sizes = [1, 16, 8], strides = [1, 1, 1]} : vector<2x16x32xf32> to vector<1x16x8xf32>
    %363 = vector.shape_cast %362 : vector<1x16x8xf32> to vector<16x8xf32>
    %364 = vector.extract_strided_slice %352 {offsets = [0, 0, 0], sizes = [1, 16, 8], strides = [1, 1, 1]} : vector<2x16x32xf32> to vector<1x16x8xf32>
    %365 = vector.shape_cast %364 : vector<1x16x8xf32> to vector<16x8xf32>
    %366 = arith.truncf %361 : vector<8x8xf32> to vector<8x8xbf16>
    %367 = arith.truncf %363 : vector<16x8xf32> to vector<16x8xbf16>
    %cst_133 = arith.constant dense<0.000000e+00> : vector<8x16xf32>
    %368 = tpu.matmul %366, %367, %cst_133 {dimension_numbers = #tpu.dot_dimension_numbers<[1], [1], [0], [0], [0, 0, 1, 0], [], []>} : vector<8x8xbf16>, vector<16x8xbf16>, vector<8x16xf32> -> vector<8x16xf32>
    %369 = vector.extract_strided_slice %358 {offsets = [0, 0, 0], sizes = [1, 8, 16], strides = [1, 1, 1]} : vector<2x8x16xf32> to vector<1x8x16xf32>
    %370 = vector.shape_cast %369 : vector<1x8x16xf32> to vector<8x16xf32>
    %371 = arith.addf %368, %370 : vector<8x16xf32>
    %cst_134 = arith.constant dense<0xFF800000> : vector<8xf32>
    %372 = vector.multi_reduction <maximumf>, %371, %cst_134 [1] : vector<8x16xf32> to vector<8xf32>
    %373 = vector.shape_cast %372 : vector<8xf32> to vector<8x1xf32>
    %374 = vector.broadcast %373 : vector<8x1xf32> to vector<8x16xf32>
    %375 = arith.subf %371, %374 : vector<8x16xf32>
    %376 = math.exp %375 : vector<8x16xf32>
    %cst_135 = arith.constant dense<0.000000e+00> : vector<8xf32>
    %377 = vector.multi_reduction <add>, %376, %cst_135 [1] : vector<8x16xf32> to vector<8xf32>
    %378 = vector.shape_cast %377 : vector<8xf32> to vector<8x1xf32>
    %379 = arith.truncf %376 : vector<8x16xf32> to vector<8x16xbf16>
    %380 = arith.truncf %365 : vector<16x8xf32> to vector<16x8xbf16>
    %cst_136 = arith.constant dense<0.000000e+00> : vector<8x8xf32>
    %381 = tpu.matmul %379, %380, %cst_136 {dimension_numbers = #tpu.dot_dimension_numbers<[1], [0], [0], [1], [0, 0, 1, 1], [], []>} : vector<8x16xbf16>, vector<16x8xbf16>, vector<8x8xf32> -> vector<8x8xf32>
    %382 = tpu.reciprocal %378 : vector<8x1xf32> -> vector<8x1xf32>
    %383 = vector.broadcast %382 : vector<8x1xf32> to vector<8x8xf32>
    %384 = arith.mulf %381, %383 : vector<8x8xf32>
    %c4_137 = arith.constant 4 : index
    %c0_138 = arith.constant 0 : index
    %c0_139 = arith.constant 0 : index
    %385 = vector.load %arg7[%c4_137, %c0_138, %c0_139] : memref<8x8x32xbf16, #tpu.memory_space<vmem>>, vector<1x8x32xbf16>
    %386 = vector.shape_cast %385 : vector<1x8x32xbf16> to vector<8x32xbf16>
    %387 = arith.truncf %384 : vector<8x8xf32> to vector<8x8xbf16>
    %cst_140 = arith.constant dense<0.000000e+00> : vector<8x32xf32>
    %388 = tpu.matmul %387, %386, %cst_140 {dimension_numbers = #tpu.dot_dimension_numbers<[1], [0], [0], [1], [0, 0, 1, 1], [], []>} : vector<8x8xbf16>, vector<8x32xbf16>, vector<8x32xf32> -> vector<8x32xf32>
    %389 = arith.addf %359, %388 : vector<8x32xf32>
    %390 = vector.extract_strided_slice %350 {offsets = [0, 0, 8], sizes = [1, 8, 8], strides = [1, 1, 1]} : vector<2x8x32xf32> to vector<1x8x8xf32>
    %391 = vector.shape_cast %390 : vector<1x8x8xf32> to vector<8x8xf32>
    %392 = vector.extract_strided_slice %351 {offsets = [0, 0, 8], sizes = [1, 16, 8], strides = [1, 1, 1]} : vector<2x16x32xf32> to vector<1x16x8xf32>
    %393 = vector.shape_cast %392 : vector<1x16x8xf32> to vector<16x8xf32>
    %394 = vector.extract_strided_slice %352 {offsets = [0, 0, 8], sizes = [1, 16, 8], strides = [1, 1, 1]} : vector<2x16x32xf32> to vector<1x16x8xf32>
    %395 = vector.shape_cast %394 : vector<1x16x8xf32> to vector<16x8xf32>
    %396 = arith.truncf %391 : vector<8x8xf32> to vector<8x8xbf16>
    %397 = arith.truncf %393 : vector<16x8xf32> to vector<16x8xbf16>
    %cst_141 = arith.constant dense<0.000000e+00> : vector<8x16xf32>
    %398 = tpu.matmul %396, %397, %cst_141 {dimension_numbers = #tpu.dot_dimension_numbers<[1], [1], [0], [0], [0, 0, 1, 0], [], []>} : vector<8x8xbf16>, vector<16x8xbf16>, vector<8x16xf32> -> vector<8x16xf32>
    %399 = vector.extract_strided_slice %358 {offsets = [0, 0, 0], sizes = [1, 8, 16], strides = [1, 1, 1]} : vector<2x8x16xf32> to vector<1x8x16xf32>
    %400 = vector.shape_cast %399 : vector<1x8x16xf32> to vector<8x16xf32>
    %401 = arith.addf %398, %400 : vector<8x16xf32>
    %cst_142 = arith.constant dense<0xFF800000> : vector<8xf32>
    %402 = vector.multi_reduction <maximumf>, %401, %cst_142 [1] : vector<8x16xf32> to vector<8xf32>
    %403 = vector.shape_cast %402 : vector<8xf32> to vector<8x1xf32>
    %404 = vector.broadcast %403 : vector<8x1xf32> to vector<8x16xf32>
    %405 = arith.subf %401, %404 : vector<8x16xf32>
    %406 = math.exp %405 : vector<8x16xf32>
    %cst_143 = arith.constant dense<0.000000e+00> : vector<8xf32>
    %407 = vector.multi_reduction <add>, %406, %cst_143 [1] : vector<8x16xf32> to vector<8xf32>
    %408 = vector.shape_cast %407 : vector<8xf32> to vector<8x1xf32>
    %409 = arith.truncf %406 : vector<8x16xf32> to vector<8x16xbf16>
    %410 = arith.truncf %395 : vector<16x8xf32> to vector<16x8xbf16>
    %cst_144 = arith.constant dense<0.000000e+00> : vector<8x8xf32>
    %411 = tpu.matmul %409, %410, %cst_144 {dimension_numbers = #tpu.dot_dimension_numbers<[1], [0], [0], [1], [0, 0, 1, 1], [], []>} : vector<8x16xbf16>, vector<16x8xbf16>, vector<8x8xf32> -> vector<8x8xf32>
    %412 = tpu.reciprocal %408 : vector<8x1xf32> -> vector<8x1xf32>
    %413 = vector.broadcast %412 : vector<8x1xf32> to vector<8x8xf32>
    %414 = arith.mulf %411, %413 : vector<8x8xf32>
    %c5_145 = arith.constant 5 : index
    %c0_146 = arith.constant 0 : index
    %c0_147 = arith.constant 0 : index
    %415 = vector.load %arg7[%c5_145, %c0_146, %c0_147] : memref<8x8x32xbf16, #tpu.memory_space<vmem>>, vector<1x8x32xbf16>
    %416 = vector.shape_cast %415 : vector<1x8x32xbf16> to vector<8x32xbf16>
    %417 = arith.truncf %414 : vector<8x8xf32> to vector<8x8xbf16>
    %cst_148 = arith.constant dense<0.000000e+00> : vector<8x32xf32>
    %418 = tpu.matmul %417, %416, %cst_148 {dimension_numbers = #tpu.dot_dimension_numbers<[1], [0], [0], [1], [0, 0, 1, 1], [], []>} : vector<8x8xbf16>, vector<8x32xbf16>, vector<8x32xf32> -> vector<8x32xf32>
    %419 = arith.addf %389, %418 : vector<8x32xf32>
    %420 = vector.extract_strided_slice %350 {offsets = [0, 0, 16], sizes = [1, 8, 8], strides = [1, 1, 1]} : vector<2x8x32xf32> to vector<1x8x8xf32>
    %421 = vector.shape_cast %420 : vector<1x8x8xf32> to vector<8x8xf32>
    %422 = vector.extract_strided_slice %351 {offsets = [0, 0, 16], sizes = [1, 16, 8], strides = [1, 1, 1]} : vector<2x16x32xf32> to vector<1x16x8xf32>
    %423 = vector.shape_cast %422 : vector<1x16x8xf32> to vector<16x8xf32>
    %424 = vector.extract_strided_slice %352 {offsets = [0, 0, 16], sizes = [1, 16, 8], strides = [1, 1, 1]} : vector<2x16x32xf32> to vector<1x16x8xf32>
    %425 = vector.shape_cast %424 : vector<1x16x8xf32> to vector<16x8xf32>
    %426 = arith.truncf %421 : vector<8x8xf32> to vector<8x8xbf16>
    %427 = arith.truncf %423 : vector<16x8xf32> to vector<16x8xbf16>
    %cst_149 = arith.constant dense<0.000000e+00> : vector<8x16xf32>
    %428 = tpu.matmul %426, %427, %cst_149 {dimension_numbers = #tpu.dot_dimension_numbers<[1], [1], [0], [0], [0, 0, 1, 0], [], []>} : vector<8x8xbf16>, vector<16x8xbf16>, vector<8x16xf32> -> vector<8x16xf32>
    %429 = vector.extract_strided_slice %358 {offsets = [0, 0, 0], sizes = [1, 8, 16], strides = [1, 1, 1]} : vector<2x8x16xf32> to vector<1x8x16xf32>
    %430 = vector.shape_cast %429 : vector<1x8x16xf32> to vector<8x16xf32>
    %431 = arith.addf %428, %430 : vector<8x16xf32>
    %cst_150 = arith.constant dense<0xFF800000> : vector<8xf32>
    %432 = vector.multi_reduction <maximumf>, %431, %cst_150 [1] : vector<8x16xf32> to vector<8xf32>
    %433 = vector.shape_cast %432 : vector<8xf32> to vector<8x1xf32>
    %434 = vector.broadcast %433 : vector<8x1xf32> to vector<8x16xf32>
    %435 = arith.subf %431, %434 : vector<8x16xf32>
    %436 = math.exp %435 : vector<8x16xf32>
    %cst_151 = arith.constant dense<0.000000e+00> : vector<8xf32>
    %437 = vector.multi_reduction <add>, %436, %cst_151 [1] : vector<8x16xf32> to vector<8xf32>
    %438 = vector.shape_cast %437 : vector<8xf32> to vector<8x1xf32>
    %439 = arith.truncf %436 : vector<8x16xf32> to vector<8x16xbf16>
    %440 = arith.truncf %425 : vector<16x8xf32> to vector<16x8xbf16>
    %cst_152 = arith.constant dense<0.000000e+00> : vector<8x8xf32>
    %441 = tpu.matmul %439, %440, %cst_152 {dimension_numbers = #tpu.dot_dimension_numbers<[1], [0], [0], [1], [0, 0, 1, 1], [], []>} : vector<8x16xbf16>, vector<16x8xbf16>, vector<8x8xf32> -> vector<8x8xf32>
    %442 = tpu.reciprocal %438 : vector<8x1xf32> -> vector<8x1xf32>
    %443 = vector.broadcast %442 : vector<8x1xf32> to vector<8x8xf32>
    %444 = arith.mulf %441, %443 : vector<8x8xf32>
    %c6_153 = arith.constant 6 : index
    %c0_154 = arith.constant 0 : index
    %c0_155 = arith.constant 0 : index
    %445 = vector.load %arg7[%c6_153, %c0_154, %c0_155] : memref<8x8x32xbf16, #tpu.memory_space<vmem>>, vector<1x8x32xbf16>
    %446 = vector.shape_cast %445 : vector<1x8x32xbf16> to vector<8x32xbf16>
    %447 = arith.truncf %444 : vector<8x8xf32> to vector<8x8xbf16>
    %cst_156 = arith.constant dense<0.000000e+00> : vector<8x32xf32>
    %448 = tpu.matmul %447, %446, %cst_156 {dimension_numbers = #tpu.dot_dimension_numbers<[1], [0], [0], [1], [0, 0, 1, 1], [], []>} : vector<8x8xbf16>, vector<8x32xbf16>, vector<8x32xf32> -> vector<8x32xf32>
    %449 = arith.addf %419, %448 : vector<8x32xf32>
    %450 = vector.extract_strided_slice %350 {offsets = [0, 0, 24], sizes = [1, 8, 8], strides = [1, 1, 1]} : vector<2x8x32xf32> to vector<1x8x8xf32>
    %451 = vector.shape_cast %450 : vector<1x8x8xf32> to vector<8x8xf32>
    %452 = vector.extract_strided_slice %351 {offsets = [0, 0, 24], sizes = [1, 16, 8], strides = [1, 1, 1]} : vector<2x16x32xf32> to vector<1x16x8xf32>
    %453 = vector.shape_cast %452 : vector<1x16x8xf32> to vector<16x8xf32>
    %454 = vector.extract_strided_slice %352 {offsets = [0, 0, 24], sizes = [1, 16, 8], strides = [1, 1, 1]} : vector<2x16x32xf32> to vector<1x16x8xf32>
    %455 = vector.shape_cast %454 : vector<1x16x8xf32> to vector<16x8xf32>
    %456 = arith.truncf %451 : vector<8x8xf32> to vector<8x8xbf16>
    %457 = arith.truncf %453 : vector<16x8xf32> to vector<16x8xbf16>
    %cst_157 = arith.constant dense<0.000000e+00> : vector<8x16xf32>
    %458 = tpu.matmul %456, %457, %cst_157 {dimension_numbers = #tpu.dot_dimension_numbers<[1], [1], [0], [0], [0, 0, 1, 0], [], []>} : vector<8x8xbf16>, vector<16x8xbf16>, vector<8x16xf32> -> vector<8x16xf32>
    %459 = vector.extract_strided_slice %358 {offsets = [0, 0, 0], sizes = [1, 8, 16], strides = [1, 1, 1]} : vector<2x8x16xf32> to vector<1x8x16xf32>
    %460 = vector.shape_cast %459 : vector<1x8x16xf32> to vector<8x16xf32>
    %461 = arith.addf %458, %460 : vector<8x16xf32>
    %cst_158 = arith.constant dense<0xFF800000> : vector<8xf32>
    %462 = vector.multi_reduction <maximumf>, %461, %cst_158 [1] : vector<8x16xf32> to vector<8xf32>
    %463 = vector.shape_cast %462 : vector<8xf32> to vector<8x1xf32>
    %464 = vector.broadcast %463 : vector<8x1xf32> to vector<8x16xf32>
    %465 = arith.subf %461, %464 : vector<8x16xf32>
    %466 = math.exp %465 : vector<8x16xf32>
    %cst_159 = arith.constant dense<0.000000e+00> : vector<8xf32>
    %467 = vector.multi_reduction <add>, %466, %cst_159 [1] : vector<8x16xf32> to vector<8xf32>
    %468 = vector.shape_cast %467 : vector<8xf32> to vector<8x1xf32>
    %469 = arith.truncf %466 : vector<8x16xf32> to vector<8x16xbf16>
    %470 = arith.truncf %455 : vector<16x8xf32> to vector<16x8xbf16>
    %cst_160 = arith.constant dense<0.000000e+00> : vector<8x8xf32>
    %471 = tpu.matmul %469, %470, %cst_160 {dimension_numbers = #tpu.dot_dimension_numbers<[1], [0], [0], [1], [0, 0, 1, 1], [], []>} : vector<8x16xbf16>, vector<16x8xbf16>, vector<8x8xf32> -> vector<8x8xf32>
    %472 = tpu.reciprocal %468 : vector<8x1xf32> -> vector<8x1xf32>
    %473 = vector.broadcast %472 : vector<8x1xf32> to vector<8x8xf32>
    %474 = arith.mulf %471, %473 : vector<8x8xf32>
    %c7 = arith.constant 7 : index
    %c0_161 = arith.constant 0 : index
    %c0_162 = arith.constant 0 : index
    %475 = vector.load %arg7[%c7, %c0_161, %c0_162] : memref<8x8x32xbf16, #tpu.memory_space<vmem>>, vector<1x8x32xbf16>
    %476 = vector.shape_cast %475 : vector<1x8x32xbf16> to vector<8x32xbf16>
    %477 = arith.truncf %474 : vector<8x8xf32> to vector<8x8xbf16>
    %cst_163 = arith.constant dense<0.000000e+00> : vector<8x32xf32>
    %478 = tpu.matmul %477, %476, %cst_163 {dimension_numbers = #tpu.dot_dimension_numbers<[1], [0], [0], [1], [0, 0, 1, 1], [], []>} : vector<8x8xbf16>, vector<8x32xbf16>, vector<8x32xf32> -> vector<8x32xf32>
    %479 = arith.addf %449, %478 : vector<8x32xf32>
    %cst_164 = arith.constant 0.000000e+00 : f32
    %480 = vector.broadcast %cst_164 : f32 to vector<8x32xf32>
    %481 = vector.extract_strided_slice %350 {offsets = [1, 0, 0], sizes = [1, 8, 8], strides = [1, 1, 1]} : vector<2x8x32xf32> to vector<1x8x8xf32>
    %482 = vector.shape_cast %481 : vector<1x8x8xf32> to vector<8x8xf32>
    %483 = vector.extract_strided_slice %351 {offsets = [1, 0, 0], sizes = [1, 16, 8], strides = [1, 1, 1]} : vector<2x16x32xf32> to vector<1x16x8xf32>
    %484 = vector.shape_cast %483 : vector<1x16x8xf32> to vector<16x8xf32>
    %485 = vector.extract_strided_slice %352 {offsets = [1, 0, 0], sizes = [1, 16, 8], strides = [1, 1, 1]} : vector<2x16x32xf32> to vector<1x16x8xf32>
    %486 = vector.shape_cast %485 : vector<1x16x8xf32> to vector<16x8xf32>
    %487 = arith.truncf %482 : vector<8x8xf32> to vector<8x8xbf16>
    %488 = arith.truncf %484 : vector<16x8xf32> to vector<16x8xbf16>
    %cst_165 = arith.constant dense<0.000000e+00> : vector<8x16xf32>
    %489 = tpu.matmul %487, %488, %cst_165 {dimension_numbers = #tpu.dot_dimension_numbers<[1], [1], [0], [0], [0, 0, 1, 0], [], []>} : vector<8x8xbf16>, vector<16x8xbf16>, vector<8x16xf32> -> vector<8x16xf32>
    %490 = vector.extract_strided_slice %358 {offsets = [1, 0, 0], sizes = [1, 8, 16], strides = [1, 1, 1]} : vector<2x8x16xf32> to vector<1x8x16xf32>
    %491 = vector.shape_cast %490 : vector<1x8x16xf32> to vector<8x16xf32>
    %492 = arith.addf %489, %491 : vector<8x16xf32>
    %cst_166 = arith.constant dense<0xFF800000> : vector<8xf32>
    %493 = vector.multi_reduction <maximumf>, %492, %cst_166 [1] : vector<8x16xf32> to vector<8xf32>
    %494 = vector.shape_cast %493 : vector<8xf32> to vector<8x1xf32>
    %495 = vector.broadcast %494 : vector<8x1xf32> to vector<8x16xf32>
    %496 = arith.subf %492, %495 : vector<8x16xf32>
    %497 = math.exp %496 : vector<8x16xf32>
    %cst_167 = arith.constant dense<0.000000e+00> : vector<8xf32>
    %498 = vector.multi_reduction <add>, %497, %cst_167 [1] : vector<8x16xf32> to vector<8xf32>
    %499 = vector.shape_cast %498 : vector<8xf32> to vector<8x1xf32>
    %500 = arith.truncf %497 : vector<8x16xf32> to vector<8x16xbf16>
    %501 = arith.truncf %486 : vector<16x8xf32> to vector<16x8xbf16>
    %cst_168 = arith.constant dense<0.000000e+00> : vector<8x8xf32>
    %502 = tpu.matmul %500, %501, %cst_168 {dimension_numbers = #tpu.dot_dimension_numbers<[1], [0], [0], [1], [0, 0, 1, 1], [], []>} : vector<8x16xbf16>, vector<16x8xbf16>, vector<8x8xf32> -> vector<8x8xf32>
    %503 = tpu.reciprocal %499 : vector<8x1xf32> -> vector<8x1xf32>
    %504 = vector.broadcast %503 : vector<8x1xf32> to vector<8x8xf32>
    %505 = arith.mulf %502, %504 : vector<8x8xf32>
    %c4_169 = arith.constant 4 : index
    %c0_170 = arith.constant 0 : index
    %c0_171 = arith.constant 0 : index
    %506 = vector.load %arg7[%c4_169, %c0_170, %c0_171] : memref<8x8x32xbf16, #tpu.memory_space<vmem>>, vector<1x8x32xbf16>
    %507 = vector.shape_cast %506 : vector<1x8x32xbf16> to vector<8x32xbf16>
    %508 = arith.truncf %505 : vector<8x8xf32> to vector<8x8xbf16>
    %cst_172 = arith.constant dense<0.000000e+00> : vector<8x32xf32>
    %509 = tpu.matmul %508, %507, %cst_172 {dimension_numbers = #tpu.dot_dimension_numbers<[1], [0], [0], [1], [0, 0, 1, 1], [], []>} : vector<8x8xbf16>, vector<8x32xbf16>, vector<8x32xf32> -> vector<8x32xf32>
    %510 = arith.addf %480, %509 : vector<8x32xf32>
    %511 = vector.extract_strided_slice %350 {offsets = [1, 0, 8], sizes = [1, 8, 8], strides = [1, 1, 1]} : vector<2x8x32xf32> to vector<1x8x8xf32>
    %512 = vector.shape_cast %511 : vector<1x8x8xf32> to vector<8x8xf32>
    %513 = vector.extract_strided_slice %351 {offsets = [1, 0, 8], sizes = [1, 16, 8], strides = [1, 1, 1]} : vector<2x16x32xf32> to vector<1x16x8xf32>
    %514 = vector.shape_cast %513 : vector<1x16x8xf32> to vector<16x8xf32>
    %515 = vector.extract_strided_slice %352 {offsets = [1, 0, 8], sizes = [1, 16, 8], strides = [1, 1, 1]} : vector<2x16x32xf32> to vector<1x16x8xf32>
    %516 = vector.shape_cast %515 : vector<1x16x8xf32> to vector<16x8xf32>
    %517 = arith.truncf %512 : vector<8x8xf32> to vector<8x8xbf16>
    %518 = arith.truncf %514 : vector<16x8xf32> to vector<16x8xbf16>
    %cst_173 = arith.constant dense<0.000000e+00> : vector<8x16xf32>
    %519 = tpu.matmul %517, %518, %cst_173 {dimension_numbers = #tpu.dot_dimension_numbers<[1], [1], [0], [0], [0, 0, 1, 0], [], []>} : vector<8x8xbf16>, vector<16x8xbf16>, vector<8x16xf32> -> vector<8x16xf32>
    %520 = vector.extract_strided_slice %358 {offsets = [1, 0, 0], sizes = [1, 8, 16], strides = [1, 1, 1]} : vector<2x8x16xf32> to vector<1x8x16xf32>
    %521 = vector.shape_cast %520 : vector<1x8x16xf32> to vector<8x16xf32>
    %522 = arith.addf %519, %521 : vector<8x16xf32>
    %cst_174 = arith.constant dense<0xFF800000> : vector<8xf32>
    %523 = vector.multi_reduction <maximumf>, %522, %cst_174 [1] : vector<8x16xf32> to vector<8xf32>
    %524 = vector.shape_cast %523 : vector<8xf32> to vector<8x1xf32>
    %525 = vector.broadcast %524 : vector<8x1xf32> to vector<8x16xf32>
    %526 = arith.subf %522, %525 : vector<8x16xf32>
    %527 = math.exp %526 : vector<8x16xf32>
    %cst_175 = arith.constant dense<0.000000e+00> : vector<8xf32>
    %528 = vector.multi_reduction <add>, %527, %cst_175 [1] : vector<8x16xf32> to vector<8xf32>
    %529 = vector.shape_cast %528 : vector<8xf32> to vector<8x1xf32>
    %530 = arith.truncf %527 : vector<8x16xf32> to vector<8x16xbf16>
    %531 = arith.truncf %516 : vector<16x8xf32> to vector<16x8xbf16>
    %cst_176 = arith.constant dense<0.000000e+00> : vector<8x8xf32>
    %532 = tpu.matmul %530, %531, %cst_176 {dimension_numbers = #tpu.dot_dimension_numbers<[1], [0], [0], [1], [0, 0, 1, 1], [], []>} : vector<8x16xbf16>, vector<16x8xbf16>, vector<8x8xf32> -> vector<8x8xf32>
    %533 = tpu.reciprocal %529 : vector<8x1xf32> -> vector<8x1xf32>
    %534 = vector.broadcast %533 : vector<8x1xf32> to vector<8x8xf32>
    %535 = arith.mulf %532, %534 : vector<8x8xf32>
    %c5_177 = arith.constant 5 : index
    %c0_178 = arith.constant 0 : index
    %c0_179 = arith.constant 0 : index
    %536 = vector.load %arg7[%c5_177, %c0_178, %c0_179] : memref<8x8x32xbf16, #tpu.memory_space<vmem>>, vector<1x8x32xbf16>
    %537 = vector.shape_cast %536 : vector<1x8x32xbf16> to vector<8x32xbf16>
    %538 = arith.truncf %535 : vector<8x8xf32> to vector<8x8xbf16>
    %cst_180 = arith.constant dense<0.000000e+00> : vector<8x32xf32>
    %539 = tpu.matmul %538, %537, %cst_180 {dimension_numbers = #tpu.dot_dimension_numbers<[1], [0], [0], [1], [0, 0, 1, 1], [], []>} : vector<8x8xbf16>, vector<8x32xbf16>, vector<8x32xf32> -> vector<8x32xf32>
    %540 = arith.addf %510, %539 : vector<8x32xf32>
    %541 = vector.extract_strided_slice %350 {offsets = [1, 0, 16], sizes = [1, 8, 8], strides = [1, 1, 1]} : vector<2x8x32xf32> to vector<1x8x8xf32>
    %542 = vector.shape_cast %541 : vector<1x8x8xf32> to vector<8x8xf32>
    %543 = vector.extract_strided_slice %351 {offsets = [1, 0, 16], sizes = [1, 16, 8], strides = [1, 1, 1]} : vector<2x16x32xf32> to vector<1x16x8xf32>
    %544 = vector.shape_cast %543 : vector<1x16x8xf32> to vector<16x8xf32>
    %545 = vector.extract_strided_slice %352 {offsets = [1, 0, 16], sizes = [1, 16, 8], strides = [1, 1, 1]} : vector<2x16x32xf32> to vector<1x16x8xf32>
    %546 = vector.shape_cast %545 : vector<1x16x8xf32> to vector<16x8xf32>
    %547 = arith.truncf %542 : vector<8x8xf32> to vector<8x8xbf16>
    %548 = arith.truncf %544 : vector<16x8xf32> to vector<16x8xbf16>
    %cst_181 = arith.constant dense<0.000000e+00> : vector<8x16xf32>
    %549 = tpu.matmul %547, %548, %cst_181 {dimension_numbers = #tpu.dot_dimension_numbers<[1], [1], [0], [0], [0, 0, 1, 0], [], []>} : vector<8x8xbf16>, vector<16x8xbf16>, vector<8x16xf32> -> vector<8x16xf32>
    %550 = vector.extract_strided_slice %358 {offsets = [1, 0, 0], sizes = [1, 8, 16], strides = [1, 1, 1]} : vector<2x8x16xf32> to vector<1x8x16xf32>
    %551 = vector.shape_cast %550 : vector<1x8x16xf32> to vector<8x16xf32>
    %552 = arith.addf %549, %551 : vector<8x16xf32>
    %cst_182 = arith.constant dense<0xFF800000> : vector<8xf32>
    %553 = vector.multi_reduction <maximumf>, %552, %cst_182 [1] : vector<8x16xf32> to vector<8xf32>
    %554 = vector.shape_cast %553 : vector<8xf32> to vector<8x1xf32>
    %555 = vector.broadcast %554 : vector<8x1xf32> to vector<8x16xf32>
    %556 = arith.subf %552, %555 : vector<8x16xf32>
    %557 = math.exp %556 : vector<8x16xf32>
    %cst_183 = arith.constant dense<0.000000e+00> : vector<8xf32>
    %558 = vector.multi_reduction <add>, %557, %cst_183 [1] : vector<8x16xf32> to vector<8xf32>
    %559 = vector.shape_cast %558 : vector<8xf32> to vector<8x1xf32>
    %560 = arith.truncf %557 : vector<8x16xf32> to vector<8x16xbf16>
    %561 = arith.truncf %546 : vector<16x8xf32> to vector<16x8xbf16>
    %cst_184 = arith.constant dense<0.000000e+00> : vector<8x8xf32>
    %562 = tpu.matmul %560, %561, %cst_184 {dimension_numbers = #tpu.dot_dimension_numbers<[1], [0], [0], [1], [0, 0, 1, 1], [], []>} : vector<8x16xbf16>, vector<16x8xbf16>, vector<8x8xf32> -> vector<8x8xf32>
    %563 = tpu.reciprocal %559 : vector<8x1xf32> -> vector<8x1xf32>
    %564 = vector.broadcast %563 : vector<8x1xf32> to vector<8x8xf32>
    %565 = arith.mulf %562, %564 : vector<8x8xf32>
    %c6_185 = arith.constant 6 : index
    %c0_186 = arith.constant 0 : index
    %c0_187 = arith.constant 0 : index
    %566 = vector.load %arg7[%c6_185, %c0_186, %c0_187] : memref<8x8x32xbf16, #tpu.memory_space<vmem>>, vector<1x8x32xbf16>
    %567 = vector.shape_cast %566 : vector<1x8x32xbf16> to vector<8x32xbf16>
    %568 = arith.truncf %565 : vector<8x8xf32> to vector<8x8xbf16>
    %cst_188 = arith.constant dense<0.000000e+00> : vector<8x32xf32>
    %569 = tpu.matmul %568, %567, %cst_188 {dimension_numbers = #tpu.dot_dimension_numbers<[1], [0], [0], [1], [0, 0, 1, 1], [], []>} : vector<8x8xbf16>, vector<8x32xbf16>, vector<8x32xf32> -> vector<8x32xf32>
    %570 = arith.addf %540, %569 : vector<8x32xf32>
    %571 = vector.extract_strided_slice %350 {offsets = [1, 0, 24], sizes = [1, 8, 8], strides = [1, 1, 1]} : vector<2x8x32xf32> to vector<1x8x8xf32>
    %572 = vector.shape_cast %571 : vector<1x8x8xf32> to vector<8x8xf32>
    %573 = vector.extract_strided_slice %351 {offsets = [1, 0, 24], sizes = [1, 16, 8], strides = [1, 1, 1]} : vector<2x16x32xf32> to vector<1x16x8xf32>
    %574 = vector.shape_cast %573 : vector<1x16x8xf32> to vector<16x8xf32>
    %575 = vector.extract_strided_slice %352 {offsets = [1, 0, 24], sizes = [1, 16, 8], strides = [1, 1, 1]} : vector<2x16x32xf32> to vector<1x16x8xf32>
    %576 = vector.shape_cast %575 : vector<1x16x8xf32> to vector<16x8xf32>
    %577 = arith.truncf %572 : vector<8x8xf32> to vector<8x8xbf16>
    %578 = arith.truncf %574 : vector<16x8xf32> to vector<16x8xbf16>
    %cst_189 = arith.constant dense<0.000000e+00> : vector<8x16xf32>
    %579 = tpu.matmul %577, %578, %cst_189 {dimension_numbers = #tpu.dot_dimension_numbers<[1], [1], [0], [0], [0, 0, 1, 0], [], []>} : vector<8x8xbf16>, vector<16x8xbf16>, vector<8x16xf32> -> vector<8x16xf32>
    %580 = vector.extract_strided_slice %358 {offsets = [1, 0, 0], sizes = [1, 8, 16], strides = [1, 1, 1]} : vector<2x8x16xf32> to vector<1x8x16xf32>
    %581 = vector.shape_cast %580 : vector<1x8x16xf32> to vector<8x16xf32>
    %582 = arith.addf %579, %581 : vector<8x16xf32>
    %cst_190 = arith.constant dense<0xFF800000> : vector<8xf32>
    %583 = vector.multi_reduction <maximumf>, %582, %cst_190 [1] : vector<8x16xf32> to vector<8xf32>
    %584 = vector.shape_cast %583 : vector<8xf32> to vector<8x1xf32>
    %585 = vector.broadcast %584 : vector<8x1xf32> to vector<8x16xf32>
    %586 = arith.subf %582, %585 : vector<8x16xf32>
    %587 = math.exp %586 : vector<8x16xf32>
    %cst_191 = arith.constant dense<0.000000e+00> : vector<8xf32>
    %588 = vector.multi_reduction <add>, %587, %cst_191 [1] : vector<8x16xf32> to vector<8xf32>
    %589 = vector.shape_cast %588 : vector<8xf32> to vector<8x1xf32>
    %590 = arith.truncf %587 : vector<8x16xf32> to vector<8x16xbf16>
    %591 = arith.truncf %576 : vector<16x8xf32> to vector<16x8xbf16>
    %cst_192 = arith.constant dense<0.000000e+00> : vector<8x8xf32>
    %592 = tpu.matmul %590, %591, %cst_192 {dimension_numbers = #tpu.dot_dimension_numbers<[1], [0], [0], [1], [0, 0, 1, 1], [], []>} : vector<8x16xbf16>, vector<16x8xbf16>, vector<8x8xf32> -> vector<8x8xf32>
    %593 = tpu.reciprocal %589 : vector<8x1xf32> -> vector<8x1xf32>
    %594 = vector.broadcast %593 : vector<8x1xf32> to vector<8x8xf32>
    %595 = arith.mulf %592, %594 : vector<8x8xf32>
    %c7_193 = arith.constant 7 : index
    %c0_194 = arith.constant 0 : index
    %c0_195 = arith.constant 0 : index
    %596 = vector.load %arg7[%c7_193, %c0_194, %c0_195] : memref<8x8x32xbf16, #tpu.memory_space<vmem>>, vector<1x8x32xbf16>
    %597 = vector.shape_cast %596 : vector<1x8x32xbf16> to vector<8x32xbf16>
    %598 = arith.truncf %595 : vector<8x8xf32> to vector<8x8xbf16>
    %cst_196 = arith.constant dense<0.000000e+00> : vector<8x32xf32>
    %599 = tpu.matmul %598, %597, %cst_196 {dimension_numbers = #tpu.dot_dimension_numbers<[1], [0], [0], [1], [0, 0, 1, 1], [], []>} : vector<8x8xbf16>, vector<8x32xbf16>, vector<8x32xf32> -> vector<8x32xf32>
    %600 = arith.addf %570, %599 : vector<8x32xf32>
    %601 = tpu.concatenate %479, %600 in 0 : vector<8x32xf32>, vector<8x32xf32> -> vector<16x32xf32>
    %c7_197 = arith.constant 7 : index
    %c0_198 = arith.constant 0 : index
    %602 = vector.load %arg6[%c7_197, %c0_198] : memref<8x32xf32, #tpu.memory_space<vmem>>, vector<1x32xf32>
    %603 = vector.broadcast %602 : vector<1x32xf32> to vector<16x32xf32>
    %604 = arith.addf %601, %603 : vector<16x32xf32>
    %605 = arith.addf %304, %604 : vector<16x32xf32>
    %c2_199 = arith.constant 2 : index
    %c0_200 = arith.constant 0 : index
    %606 = vector.load %arg8[%c2_199, %c0_200] : memref<3x32xf32, #tpu.memory_space<vmem>>, vector<1x32xf32>
    %c2_201 = arith.constant 2 : index
    %c0_202 = arith.constant 0 : index
    %607 = vector.load %arg9[%c2_201, %c0_202] : memref<3x32xf32, #tpu.memory_space<vmem>>, vector<1x32xf32>
    %cst_203 = arith.constant dense<0.000000e+00> : vector<16xf32>
    %608 = vector.multi_reduction <add>, %605, %cst_203 [1] : vector<16x32xf32> to vector<16xf32>
    %609 = vector.shape_cast %608 : vector<16xf32> to vector<16x1xf32>
    %cst_204 = arith.constant 3.200000e+01 : f32
    %610 = vector.broadcast %cst_204 : f32 to vector<16x1xf32>
    %611 = arith.divf %609, %610 : vector<16x1xf32>
    %612 = vector.broadcast %611 : vector<16x1xf32> to vector<16x32xf32>
    %613 = arith.subf %605, %612 : vector<16x32xf32>
    %614 = arith.mulf %613, %613 : vector<16x32xf32>
    %cst_205 = arith.constant dense<0.000000e+00> : vector<16xf32>
    %615 = vector.multi_reduction <add>, %614, %cst_205 [1] : vector<16x32xf32> to vector<16xf32>
    %616 = vector.shape_cast %615 : vector<16xf32> to vector<16x1xf32>
    %cst_206 = arith.constant 0.0322580636 : f32
    %617 = vector.broadcast %cst_206 : f32 to vector<16x1xf32>
    %618 = arith.mulf %616, %617 : vector<16x1xf32>
    %619 = math.sqrt %618 : vector<16x1xf32>
    %620 = vector.broadcast %606 : vector<1x32xf32> to vector<16x32xf32>
    %621 = arith.mulf %620, %613 : vector<16x32xf32>
    %cst_207 = arith.constant 9.99999997E-7 : f32
    %622 = vector.broadcast %cst_207 : f32 to vector<16x1xf32>
    %623 = arith.addf %619, %622 : vector<16x1xf32>
    %624 = vector.broadcast %623 : vector<16x1xf32> to vector<16x32xf32>
    %625 = arith.divf %621, %624 : vector<16x32xf32>
    %626 = vector.broadcast %607 : vector<1x32xf32> to vector<16x32xf32>
    %627 = arith.addf %625, %626 : vector<16x32xf32>
    %c0_208 = arith.constant 0 : index
    %c0_209 = arith.constant 0 : index
    %628 = vector.load %arg10[%c0_208, %c0_209] : memref<32x64xbf16, #tpu.memory_space<vmem>>, vector<32x64xbf16>
    %629 = arith.truncf %627 : vector<16x32xf32> to vector<16x32xbf16>
    %cst_210 = arith.constant dense<0.000000e+00> : vector<16x64xf32>
    %630 = tpu.matmul %629, %628, %cst_210 {dimension_numbers = #tpu.dot_dimension_numbers<[1], [0], [0], [1], [0, 0, 1, 1], [], []>} : vector<16x32xbf16>, vector<32x64xbf16>, vector<16x64xf32> -> vector<16x64xf32>
    %c0_211 = arith.constant 0 : index
    %c0_212 = arith.constant 0 : index
    %631 = vector.load %arg11[%c0_211, %c0_212] : memref<1x64xf32, #tpu.memory_space<vmem>>, vector<1x64xf32>
    %632 = vector.broadcast %631 : vector<1x64xf32> to vector<16x64xf32>
    %633 = arith.addf %630, %632 : vector<16x64xf32>
    %cst_213 = arith.constant 0.000000e+00 : f32
    %634 = vector.broadcast %cst_213 : f32 to vector<16x64xf32>
    %635 = arith.maximumf %633, %634 : vector<16x64xf32>
    %c0_214 = arith.constant 0 : index
    %c0_215 = arith.constant 0 : index
    %636 = vector.load %arg12[%c0_214, %c0_215] : memref<64x32xbf16, #tpu.memory_space<vmem>>, vector<64x32xbf16>
    %637 = arith.truncf %635 : vector<16x64xf32> to vector<16x64xbf16>
    %cst_216 = arith.constant dense<0.000000e+00> : vector<16x32xf32>
    %638 = tpu.matmul %637, %636, %cst_216 {dimension_numbers = #tpu.dot_dimension_numbers<[1], [0], [0], [1], [0, 0, 1, 1], [], []>} : vector<16x64xbf16>, vector<64x32xbf16>, vector<16x32xf32> -> vector<16x32xf32>
    %639 = arith.addf %605, %638 : vector<16x32xf32>
    %c0_217 = arith.constant 0 : index
    %c0_218 = arith.constant 0 : index
    %640 = vector.load %arg13[%c0_217, %c0_218] : memref<1x32xf32, #tpu.memory_space<vmem>>, vector<1x32xf32>
    %641 = vector.broadcast %640 : vector<1x32xf32> to vector<16x32xf32>
    %642 = arith.addf %639, %641 : vector<16x32xf32>
    %643 = vector.shape_cast %642 : vector<16x32xf32> to vector<2x8x32xf32>
    %c0_219 = arith.constant 0 : index
    %c0_220 = arith.constant 0 : index
    %c0_221 = arith.constant 0 : index
    %644 = vector.load %arg14[%c0_219, %c0_220, %c0_221] : memref<2x8x32xf32, #tpu.memory_space<vmem>>, vector<2x8x32xf32>
    tpu.vector_store %arg14[%c0_219, %c0_220, %c0_221], %643 {strides = array<i32>} : memref<2x8x32xf32, #tpu.memory_space<vmem>>, vector<2x8x32xf32>,
    return
  }
  func.func @transform_0(%arg0: i32) -> (i32, i32, i32) {
    %c0_i32 = arith.constant 0 : i32
    %c0_i32_0 = arith.constant 0 : i32
    %c0_i32_1 = arith.constant 0 : i32
    return %arg0, %c0_i32, %c0_i32_0 : i32, i32, i32
  }
  func.func @transform_1(%arg0: i32) -> (i32, i32, i32) {
    %c0_i32 = arith.constant 0 : i32
    %c0_i32_0 = arith.constant 0 : i32
    %c0_i32_1 = arith.constant 0 : i32
    return %arg0, %c0_i32, %c0_i32_0 : i32, i32, i32
  }
  func.func @transform_2(%arg0: i32) -> (i32, i32, i32) {
    %c0_i32 = arith.constant 0 : i32
    %c0_i32_0 = arith.constant 0 : i32
    %c0_i32_1 = arith.constant 0 : i32
    return %arg0, %c0_i32, %c0_i32_0 : i32, i32, i32
  }
  func.func @transform_3(%arg0: i32) -> (i32, i32, i32) {
    %c0_i32 = arith.constant 0 : i32
    %c0_i32_0 = arith.constant 0 : i32
    %c0_i32_1 = arith.constant 0 : i32
    return %arg0, %c0_i32, %c0_i32_0 : i32, i32, i32
  }
  func.func @transform_4(%arg0: i32) -> (i32, i32, i32) {
    %c0_i32 = arith.constant 0 : i32
    %c0_i32_0 = arith.constant 0 : i32
    %c0_i32_1 = arith.constant 0 : i32
    %c0_i32_2 = arith.constant 0 : i32
    return %c0_i32, %c0_i32_0, %c0_i32_1 : i32, i32, i32
  }
  func.func @transform_5(%arg0: i32) -> (i32, i32) {
    %c0_i32 = arith.constant 0 : i32
    %c0_i32_0 = arith.constant 0 : i32
    %c0_i32_1 = arith.constant 0 : i32
    return %c0_i32, %c0_i32_0 : i32, i32
  }
  func.func @transform_6(%arg0: i32) -> (i32, i32, i32) {
    %c0_i32 = arith.constant 0 : i32
    %c0_i32_0 = arith.constant 0 : i32
    %c0_i32_1 = arith.constant 0 : i32
    %c0_i32_2 = arith.constant 0 : i32
    return %c0_i32, %c0_i32_0, %c0_i32_1 : i32, i32, i32
  }
  func.func @transform_7(%arg0: i32) -> (i32, i32) {
    %c0_i32 = arith.constant 0 : i32
    %c0_i32_0 = arith.constant 0 : i32
    %c0_i32_1 = arith.constant 0 : i32
    return %c0_i32, %c0_i32_0 : i32, i32
  }
  func.func @transform_8(%arg0: i32) -> (i32, i32) {
    %c0_i32 = arith.constant 0 : i32
    %c0_i32_0 = arith.constant 0 : i32
    %c0_i32_1 = arith.constant 0 : i32
    return %c0_i32, %c0_i32_0 : i32, i32
  }
  func.func @transform_9(%arg0: i32) -> (i32, i32) {
    %c0_i32 = arith.constant 0 : i32
    %c0_i32_0 = arith.constant 0 : i32
    %c0_i32_1 = arith.constant 0 : i32
    return %c0_i32, %c0_i32_0 : i32, i32
  }
  func.func @transform_10(%arg0: i32) -> (i32, i32) {
    %c0_i32 = arith.constant 0 : i32
    %c0_i32_0 = arith.constant 0 : i32
    %c0_i32_1 = arith.constant 0 : i32
    return %c0_i32, %c0_i32_0 : i32, i32
  }
  func.func @transform_11(%arg0: i32) -> (i32, i32) {
    %c0_i32 = arith.constant 0 : i32
    %c0_i32_0 = arith.constant 0 : i32
    %c0_i32_1 = arith.constant 0 : i32
    return %c0_i32, %c0_i32_0 : i32, i32
  }
  func.func @transform_12(%arg0: i32) -> (i32, i32) {
    %c0_i32 = arith.constant 0 : i32
    %c0_i32_0 = arith.constant 0 : i32
    %c0_i32_1 = arith.constant 0 : i32
    return %c0_i32, %c0_i32_0 : i32, i32
  }
  func.func @transform_13(%arg0: i32) -> (i32, i32, i32) {
    %c0_i32 = arith.constant 0 : i32
    %c0_i32_0 = arith.constant 0 : i32
    %c0_i32_1 = arith.constant 0 : i32
    return %arg0, %c0_i32, %c0_i32_0 : i32, i32, i32
  }
}

</mosaic_0001>

<llo_original>
// kernel: tpu_custom_call.1
$region0: #{tpu_custom_call.1}
  #allocation0 [shape = 'u32[]', space=smem, size = 0x4, offset = 0x4, fixed_abs, tag = 'smem constant byte address 0x4 - core index']
  #allocation1 [shape = 'u32[144,128]{1,0:T(1,128)}', space=vmem, size = 0x12000, scoped, tag = 'internal scratch']
  %s0 = inlined_call_operand.hbm [shape: f32[2,8,32], index: 0, kind: input, shape index: {}]
  %s1 = inlined_call_operand.vmem [shape: f32[2,16,32], index: 1, kind: input, shape index: {}]
  %s2 = inlined_call_operand.hbm [shape: s8[2,8,8], index: 2, kind: input, shape index: {}]
  %s3 = inlined_call_operand.hbm [shape: s8[2,8,16], index: 3, kind: input, shape index: {}]
  %s4 = inlined_call_operand.hbm [shape: bf16[6,32,32], index: 4, kind: input, shape index: {}]
  %s5 = inlined_call_operand.hbm [shape: f32[8,32], index: 5, kind: input, shape index: {}]
  %s6 = inlined_call_operand.vmem [shape: bf16[8,8,32], index: 6, kind: input, shape index: {}]
  %s7 = inlined_call_operand.hbm [shape: f32[3,32], index: 7, kind: input, shape index: {}]
  %s8 = inlined_call_operand.hbm [shape: f32[3,32], index: 8, kind: input, shape index: {}]
  %s9 = inlined_call_operand.hbm [shape: bf16[32,64], index: 9, kind: input, shape index: {}]
  %s10 = inlined_call_operand.vmem [shape: f32[1,64], index: 10, kind: input, shape index: {}]
  %s11 = inlined_call_operand.vmem [shape: bf16[64,32], index: 11, kind: input, shape index: {}]
  %s12 = inlined_call_operand.vmem [shape: f32[1,32], index: 12, kind: input, shape index: {}]
  %s13 = inlined_call_operand.hbm [shape: f32[2,8,32], index: 13, kind: output, shape index: {}]
  %s14 = sld [smem:[#allocation0]]
  $region94: #{tpu_custom_call.1} parent=0
    _
  %s16 = ssub.s32 1, %s14
  %s17 = scalar_select 0, %s16, %s14
  $region1: #{tpu_custom_call.1} parent=0
    #allocation2 [shape = 'u8[8192]{0}', space=vmem, size = 0x2000, scoped, tag = 'input window, operand 0, single buffered']
    #allocation3 [shape = 's32[1]{0}', space=sflag, size = 0x4, scoped, tag = 'scoped memory for tpu_custom_call.1']
    #allocation4 [shape = 's32[1]{0}', space=sflag, size = 0x4, scoped, tag = 'scoped memory for tpu_custom_call.1']
    #allocation5 [shape = 'u8[2048]{0}', space=vmem, size = 0x800, scoped, tag = 'input window, operand 2, single buffered']
    #allocation6 [shape = 's32[1]{0}', space=sflag, size = 0x4, scoped, tag = 'scoped memory for tpu_custom_call.1']
    #allocation7 [shape = 'u8[2048]{0}', space=vmem, size = 0x800, scoped, tag = 'input window, operand 3, single buffered']
    #allocation8 [shape = 'u8[49152]{0}', space=vmem, size = 0xc000, scoped, tag = 'input window, operand 4, single buffered']
    #allocation9 [shape = 's32[1]{0}', space=sflag, size = 0x4, scoped, tag = 'scoped memory for tpu_custom_call.1']
    #allocation10 [shape = 'u8[4096]{0}', space=vmem, size = 0x1000, scoped, tag = 'input window, operand 5, single buffered']
    #allocation11 [shape = 'u8[2048]{0}', space=vmem, size = 0x800, scoped, tag = 'input window, operand 7, single buffered']
    #allocation12 [shape = 's32[1]{0}', space=sflag, size = 0x4, scoped, tag = 'scoped memory for tpu_custom_call.1']
    #allocation13 [shape = 'u8[2048]{0}', space=vmem, size = 0x800, scoped, tag = 'input window, operand 8, single buffered']
    #allocation14 [shape = 'u8[8192]{0}', space=vmem, size = 0x2000, scoped, tag = 'input window, operand 9, single buffered']
    #allocation15 [shape = 's32[1]{0}', space=sflag, size = 0x4, scoped, tag = 'scoped memory for tpu_custom_call.1']
    #allocation16 [shape = 'u8[8192]{0}', space=vmem, size = 0x2000, scoped, tag = 'output window, operand 0, single buffered']
    %18 = vsyncpa [#allocation3], 0
    %19 = vsyncpa [#allocation6], 0
    %20 = vsyncpa [#allocation9], 0
    %21 = vsyncpa [#allocation12], 0
    %22 = vsyncpa [#allocation15], 0
    %23 = vsyncpa [#allocation4], 0
    // Predicated region
    $region2: #{tpu_custom_call.1} parent=1 // pred_check
      _
    $region3: #{tpu_custom_call.1} parent=1 // pred_check_branch
      %25 = sbr.rel (0) target = $region5
    $region4: #{tpu_custom_call.1} parent=1 // pred_region
      %s27 = ssub.s32 256, 256
      %28 = vsyncadd [#allocation3], %s27
      %s29 = sshll.u32 [#allocation2], 4
      %s30 = int_to_ptr.vmem [resolvable:$true] %s29
      %35 = dma.hbm_to_vmem [thread:$0]  %s0, 256, %s30, [#allocation3], 128, 128, 8
    $region5: #{tpu_custom_call.1} parent=1 // pred_fallthru
      _
    // Predicated region
    $region6: #{tpu_custom_call.1} parent=1 // pred_check
      _
    $region7: #{tpu_custom_call.1} parent=1 // pred_check_branch
      %37 = sbr.rel (0) target = $region9
    $region8: #{tpu_custom_call.1} parent=1 // pred_region
      _
    $region9: #{tpu_custom_call.1} parent=1 // pred_fallthru
      _
    // Predicated region
    $region10: #{tpu_custom_call.1} parent=1 // pred_check
      _
    $region11: #{tpu_custom_call.1} parent=1 // pred_check_branch
      %39 = sbr.rel (0) target = $region13
    $region12: #{tpu_custom_call.1} parent=1 // pred_region
      %s41 = ssub.s32 64, 64
      %42 = vsyncadd [#allocation6], %s41
      %s43 = sshll.u32 [#allocation5], 4
      %s44 = int_to_ptr.vmem [resolvable:$true] %s43
      %49 = dma.hbm_to_vmem [thread:$0]  %s2, 64, %s44, [#allocation6], 32, 32, 2
    $region13: #{tpu_custom_call.1} parent=1 // pred_fallthru
      _
    // Predicated region
    $region14: #{tpu_custom_call.1} parent=1 // pred_check
      _
    $region15: #{tpu_custom_call.1} parent=1 // pred_check_branch
      %51 = sbr.rel (0) target = $region17
    $region16: #{tpu_custom_call.1} parent=1 // pred_region
      %s53 = ssub.s32 64, 64
      %54 = vsyncadd [#allocation6], %s53
      %s55 = sshll.u32 [#allocation7], 4
      %s56 = int_to_ptr.vmem [resolvable:$true] %s55
      %61 = dma.hbm_to_vmem [thread:$0]  %s3, 64, %s56, [#allocation6], 32, 32, 2
    $region17: #{tpu_custom_call.1} parent=1 // pred_fallthru
      _
    // Predicated region
    $region18: #{tpu_custom_call.1} parent=1 // pred_check
      _
    $region19: #{tpu_custom_call.1} parent=1 // pred_check_branch
      %63 = sbr.rel (0) target = $region21
    $region20: #{tpu_custom_call.1} parent=1 // pred_region
      %s65 = ssub.s32 1536, 1536
      %66 = vsyncadd [#allocation9], %s65
      %s67 = sshll.u32 [#allocation8], 4
      %s68 = int_to_ptr.vmem [resolvable:$true] %s67
      %73 = dma.hbm_to_vmem [thread:$0]  %s4, 1536, %s68, [#allocation9], 64, 64, 4
    $region21: #{tpu_custom_call.1} parent=1 // pred_fallthru
      _
    // Predicated region
    $region22: #{tpu_custom_call.1} parent=1 // pred_check
      _
    $region23: #{tpu_custom_call.1} parent=1 // pred_check_branch
      %75 = sbr.rel (0) target = $region25
    $region24: #{tpu_custom_call.1} parent=1 // pred_region
      %s77 = ssub.s32 128, 128
      %78 = vsyncadd [#allocation9], %s77
      %s80 = sshll.u32 [#allocation10], 4
      %s81 = int_to_ptr.vmem [resolvable:$true] %s80
      %83 = dma.hbm_to_vmem [thread:$0]  %s5, 128, %s81, [#allocation9]
    $region25: #{tpu_custom_call.1} parent=1 // pred_fallthru
      _
    // Predicated region
    $region26: #{tpu_custom_call.1} parent=1 // pred_check
      _
    $region27: #{tpu_custom_call.1} parent=1 // pred_check_branch
      %85 = sbr.rel (0) target = $region29
    $region28: #{tpu_custom_call.1} parent=1 // pred_region
      _
    $region29: #{tpu_custom_call.1} parent=1 // pred_fallthru
      _
    // Predicated region
    $region30: #{tpu_custom_call.1} parent=1 // pred_check
      _
    $region31: #{tpu_custom_call.1} parent=1 // pred_check_branch
      %87 = sbr.rel (0) target = $region33
    $region32: #{tpu_custom_call.1} parent=1 // pred_region
      %s89 = ssub.s32 64, 64
      %90 = vsyncadd [#allocation12], %s89
      %s92 = sshll.u32 [#allocation11], 4
      %s93 = int_to_ptr.vmem [resolvable:$true] %s92
      %95 = dma.hbm_to_vmem [thread:$0]  %s7, 64, %s93, [#allocation12]
    $region33: #{tpu_custom_call.1} parent=1 // pred_fallthru
      _
    // Predicated region
    $region34: #{tpu_custom_call.1} parent=1 // pred_check
      _
    $region35: #{tpu_custom_call.1} parent=1 // pred_check_branch
      %97 = sbr.rel (0) target = $region37
    $region36: #{tpu_custom_call.1} parent=1 // pred_region
      %s99 = ssub.s32 64, 64
      %100 = vsyncadd [#allocation12], %s99
      %s102 = sshll.u32 [#allocation13], 4
      %s103 = int_to_ptr.vmem [resolvable:$true] %s102
      %105 = dma.hbm_to_vmem [thread:$0]  %s8, 64, %s103, [#allocation12]
    $region37: #{tpu_custom_call.1} parent=1 // pred_fallthru
      _
    // Predicated region
    $region38: #{tpu_custom_call.1} parent=1 // pred_check
      _
    $region39: #{tpu_custom_call.1} parent=1 // pred_check_branch
      %107 = sbr.rel (0) target = $region41
    $region40: #{tpu_custom_call.1} parent=1 // pred_region
      %s109 = ssub.s32 256, 256
      %110 = vsyncadd [#allocation15], %s109
      %s111 = sshll.u32 [#allocation14], 4
      %s112 = int_to_ptr.vmem [resolvable:$true] %s111
      %117 = dma.hbm_to_vmem [thread:$0]  %s9, 256, %s112, [#allocation15], 64, 64, 4
    $region41: #{tpu_custom_call.1} parent=1 // pred_fallthru
      _
    // Predicated region
    $region42: #{tpu_custom_call.1} parent=1 // pred_check
      _
    $region43: #{tpu_custom_call.1} parent=1 // pred_check_branch
      %119 = sbr.rel (0) target = $region45
    $region44: #{tpu_custom_call.1} parent=1 // pred_region
      _
    $region45: #{tpu_custom_call.1} parent=1 // pred_fallthru
      _
    // Predicated region
    $region46: #{tpu_custom_call.1} parent=1 // pred_check
      _
    $region47: #{tpu_custom_call.1} parent=1 // pred_check_branch
      %121 = sbr.rel (0) target = $region49
    $region48: #{tpu_custom_call.1} parent=1 // pred_region
      _
    $region49: #{tpu_custom_call.1} parent=1 // pred_fallthru
      _
    // Predicated region
    $region50: #{tpu_custom_call.1} parent=1 // pred_check
      _
    $region51: #{tpu_custom_call.1} parent=1 // pred_check_branch
      %123 = sbr.rel (0) target = $region53
    $region52: #{tpu_custom_call.1} parent=1 // pred_region
      _
    $region53: #{tpu_custom_call.1} parent=1 // pred_fallthru
      _
    // Predicated region
    $region54: #{tpu_custom_call.1} parent=1 // pred_check
      _
    $region55: #{tpu_custom_call.1} parent=1 // pred_check_branch
      %125 = sbr.rel (0) target = $region57
    $region56: #{tpu_custom_call.1} parent=1 // pred_region
      %126 = dma.done [#allocation3], 256
    $region57: #{tpu_custom_call.1} parent=1 // pred_fallthru
      _
    // Predicated region
    $region58: #{tpu_custom_call.1} parent=1 // pred_check
      _
    $region59: #{tpu_custom_call.1} parent=1 // pred_check_branch
      %128 = sbr.rel (0) target = $region61
    $region60: #{tpu_custom_call.1} parent=1 // pred_region
      %129 = dma.done [#allocation6], 64
    $region61: #{tpu_custom_call.1} parent=1 // pred_fallthru
      _
    // Predicated region
    $region62: #{tpu_custom_call.1} parent=1 // pred_check
      _
    $region63: #{tpu_custom_call.1} parent=1 // pred_check_branch
      %131 = sbr.rel (0) target = $region65
    $region64: #{tpu_custom_call.1} parent=1 // pred_region
      %132 = dma.done [#allocation6], 64
    $region65: #{tpu_custom_call.1} parent=1 // pred_fallthru
      _
    // Predicated region
    $region66: #{tpu_custom_call.1} parent=1 // pred_check
      _
    $region67: #{tpu_custom_call.1} parent=1 // pred_check_branch
      %134 = sbr.rel (0) target = $region69
    $region68: #{tpu_custom_call.1} parent=1 // pred_region
      %135 = dma.done [#allocation9], 1536
    $region69: #{tpu_custom_call.1} parent=1 // pred_fallthru
      _
    // Predicated region
    $region70: #{tpu_custom_call.1} parent=1 // pred_check
      _
    $region71: #{tpu_custom_call.1} parent=1 // pred_check_branch
      %137 = sbr.rel (0) target = $region73
    $region72: #{tpu_custom_call.1} parent=1 // pred_region
      %138 = dma.done [#allocation9], 128
    $region73: #{tpu_custom_call.1} parent=1 // pred_fallthru
      _
    // Predicated region
    $region74: #{tpu_custom_call.1} parent=1 // pred_check
      _
    $region75: #{tpu_custom_call.1} parent=1 // pred_check_branch
      %140 = sbr.rel (0) target = $region77
    $region76: #{tpu_custom_call.1} parent=1 // pred_region
      %141 = dma.done [#allocation12], 64
    $region77: #{tpu_custom_call.1} parent=1 // pred_fallthru
      _
    // Predicated region
    $region78: #{tpu_custom_call.1} parent=1 // pred_check
      _
    $region79: #{tpu_custom_call.1} parent=1 // pred_check_branch
      %143 = sbr.rel (0) target = $region81
    $region80: #{tpu_custom_call.1} parent=1 // pred_region
      %144 = dma.done [#allocation12], 64
    $region81: #{tpu_custom_call.1} parent=1 // pred_fallthru
      _
    // Predicated region
    $region82: #{tpu_custom_call.1} parent=1 // pred_check
      _
    $region83: #{tpu_custom_call.1} parent=1 // pred_check_branch
      %146 = sbr.rel (0) target = $region85
    $region84: #{tpu_custom_call.1} parent=1 // pred_region
      %147 = dma.done [#allocation15], 256
    $region85: #{tpu_custom_call.1} parent=1 // pred_fallthru
      _
    %v149 = vld [vmem:[#allocation2] sm:$0xff]
    %v150 = vld [vmem:[#allocation2 + $0x8] sm:$0xff]
    %v151 = vld [vmem:[%s1] sm:$0xff]
    %v152 = vld [vmem:[%s1 + $0x8] sm:$0xff]
    %v153 = vld [vmem:[%s1 + $0x10] sm:$0xff]
    %v154 = vld [vmem:[%s1 + $0x18] sm:$0xff]
    %v155 = vld [vmem:[#allocation11] sm:$0x1]
    %v156 = vld [vmem:[#allocation13] sm:$0x1]
    %vm157 = vcmask 261120
    %v158 = vsel %vm157, %v149, 0.0
    %159 = vadd.xlane.f32.xlu0 %v158
    %v160 = vpop.xlane.xlu0 %159
    %v161 = vsel %vm157, %v150, 0.0
    %162 = vadd.xlane.f32.xlu0 %v161
    %v163 = vpop.xlane.xlu0 %162
    %v164 = vrcp.pop 32.0
    %v165 = vmul.f32 %v160, %v164
    %v166 = vmul.f32 %v163, %v164
    %v167 = vsub.f32 %v149, %v165
    %v168 = vsub.f32 %v150, %v166
    %v169 = vmul.f32 %v167, %v167
    %v170 = vmul.f32 %v168, %v168
    %v171 = vsel %vm157, %v169, 0.0
    %172 = vadd.xlane.f32.xlu0 %v171
    %v173 = vpop.xlane.xlu0 %172
    %v174 = vsel %vm157, %v170, 0.0
    %175 = vadd.xlane.f32.xlu0 %v174
    %v176 = vpop.xlane.xlu0 %175
    %v177 = vmul.f32 %v173, 0.032258064
    %v178 = vmul.f32 %v176, 0.032258064
    %v179 = vrsqrt.pop %v177
    %v180 = vmul.f32 %v177, %v179
    %vm181 = vcmp.eq.f32.partialorder %v177, inf
    %v182 = vsel %vm181, %v177, %v180
    %vm183 = vcmp.eq.f32.partialorder %v177, 0.0
    %v184 = vand.u32 %v177, 2147483648
    %v185 = vsel %vm183, %v184, %v182
    %v186 = vrsqrt.pop %v178
    %v187 = vmul.f32 %v178, %v186
    %vm188 = vcmp.eq.f32.partialorder %v178, inf
    %v189 = vsel %vm188, %v178, %v187
    %vm190 = vcmp.eq.f32.partialorder %v178, 0.0
    %v191 = vand.u32 %v178, 2147483648
    %v192 = vsel %vm190, %v191, %v189
    %v193 = vlaneseq
    %v194 = vshrl.u32 %v193, 7
    %v195 = vsub.s32 0, %v194
    %v196 = vrot.slane %v155, %v195
    %v197 = vmul.f32 %v196, %v167
    %v198 = vmul.f32 %v196, %v168
    %v199 = vadd.f32 %v185, 1e-06
    %v200 = vadd.f32 %v192, 1e-06
    %v201 = vrcp.pop %v199
    %v202 = vmul.f32 %v197, %v201
    %v203 = vrcp.pop %v200
    %v204 = vmul.f32 %v198, %v203
    %v205 = vlaneseq
    %v206 = vshrl.u32 %v205, 7
    %v207 = vsub.s32 0, %v206
    %v208 = vrot.slane %v156, %v207
    %v209 = vadd.f32 %v202, %v208
    %v210 = vadd.f32 %v204, %v208
    %v211 = vld [vmem:[#allocation8] sm:$0xf]
    %v212 = vld [vmem:[#allocation8 + $0x4] sm:$0xf]
    %v213 = vld [vmem:[#allocation8 + $0x8] sm:$0xf]
    %v214 = vld [vmem:[#allocation8 + $0xc] sm:$0xf]
    %v215 = vpack.c.bf16 %v210, %v209
    %v216 = vld [vmem:[#allocation10] sm:$0x1]
    %v217 = vlaneseq
    %v218 = vshrl.u32 %v217, 7
    %v219 = vsub.s32 0, %v218
    %v220 = vrot.slane %v216, %v219
    %v225 = vunpack.c.l.b16 %v211
    %v226 = vunpack.c.l.b16 %v212
    %v227 = vunpack.c.l.b16 %v213
    %v228 = vunpack.c.l.b16 %v214
    %v229 = vpack.c.b16 %v226, %v225
    %v230 = vpack.c.b16 %v228, %v227
    %v234 = vsel %vm157, %v215, 0
    %236 = vmatprep.subr.bf16.mxu0 0
    %237 = vmatpush1.bf16.msra.mxu0 %v229
    %238 = vmatprep.subr.bf16.mxu0 0
    %239 = vmatpush1.bf16.msra.mxu0 %v230
    %240 = vmatprep.subr.bf16.mxu0 0
    %241 = vmatpush1.bf16.msra.mxu0 0
    %242 = vmatprep.subr.bf16.mxu0 0
    %243 = vmatpush1.bf16.msra.mxu0 0
    %244 = vmatprep.subr.bf16.mxu0 0
    %245 = vmatpush1.bf16.msra.mxu0 0
    %246 = vmatprep.subr.bf16.mxu0 0
    %247 = vmatpush1.bf16.msra.mxu0 0
    %248 = vmatprep.subr.bf16.mxu0 0
    %249 = vmatpush1.bf16.msra.mxu0 0
    %250 = vmatprep.subr.bf16.mxu0 0
    %251 = vmatpush1.bf16.msra.mxu0 0
    %252 = vmatprep.subr.bf16.mxu0 0
    %253 = vmatpush1.bf16.msra.mxu0 0
    %254 = vmatprep.subr.bf16.mxu0 0
    %255 = vmatpush1.bf16.msra.mxu0 0
    %256 = vmatprep.subr.bf16.mxu0 0
    %257 = vmatpush1.bf16.msra.mxu0 0
    %258 = vmatprep.subr.bf16.mxu0 0
    %259 = vmatpush1.bf16.msra.mxu0 0
    %260 = vmatprep.subr.bf16.mxu0 0
    %261 = vmatpush1.bf16.msra.mxu0 0
    %262 = vmatprep.subr.bf16.mxu0 0
    %263 = vmatpush1.bf16.msra.mxu0 0
    %264 = vmatprep.subr.bf16.mxu0 0
    %265 = vmatpush1.bf16.msra.mxu0 0
    %266 = vmatprep.subr.bf16.mxu0 0
    %267 = vmatpush1.bf16.msra.mxu0 0
    %268 = vmatprep.mubr.bf16.mxu0 0
    %269 = vmatmul.mubr.bf16.gmra.mrb[0].mxu0 %v234
    %v270 = vpop.f32.mrb[0].mxu0
    %v271 = vadd.f32 %v220, %v270
    %v272 = vpop.f32.mrb[0].mxu0
    %v273 = vpop.f32.mrb[0].mxu0
    %v274 = vadd.f32 %v220, %v273
    %v275 = vpop.f32.mrb[0].mxu0
    %276 = vdwg.mxu0
    %v277 = vmul.f32 %v271, 0.35355338
    %v278 = vmul.f32 %v274, 0.35355338
    %s279 = scalar_lea.vmem [#allocation8], 16
    %v280 = vld [vmem:[%s279] sm:$0xf]
    %v281 = vld [vmem:[%s279 + $0x4] sm:$0xf]
    %v282 = vld [vmem:[%s279 + $0x8] sm:$0xf]
    %v283 = vld [vmem:[%s279 + $0xc] sm:$0xf]
    %v284 = vld [vmem:[#allocation10 + $0x1] sm:$0x1]
    %v285 = vlaneseq
    %v286 = vshrl.u32 %v285, 7
    %v287 = vsub.s32 0, %v286
    %v288 = vrot.slane %v284, %v287
    %v293 = vunpack.c.l.b16 %v280
    %v294 = vunpack.c.l.b16 %v281
    %v295 = vunpack.c.l.b16 %v282
    %v296 = vunpack.c.l.b16 %v283
    %v297 = vpack.c.b16 %v294, %v293
    %v298 = vpack.c.b16 %v296, %v295
    %301 = vmatprep.subr.bf16.mxu0 0
    %302 = vmatpush1.bf16.msra.mxu0 %v297
    %303 = vmatprep.subr.bf16.mxu0 0
    %304 = vmatpush1.bf16.msra.mxu0 %v298
    %305 = vmatprep.subr.bf16.mxu0 0
    %306 = vmatpush1.bf16.msra.mxu0 0
    %307 = vmatprep.subr.bf16.mxu0 0
    %308 = vmatpush1.bf16.msra.mxu0 0
    %309 = vmatprep.subr.bf16.mxu0 0
    %310 = vmatpush1.bf16.msra.mxu0 0
    %311 = vmatprep.subr.bf16.mxu0 0
    %312 = vmatpush1.bf16.msra.mxu0 0
    %313 = vmatprep.subr.bf16.mxu0 0
    %314 = vmatpush1.bf16.msra.mxu0 0
    %315 = vmatprep.subr.bf16.mxu0 0
    %316 = vmatpush1.bf16.msra.mxu0 0
    %317 = vmatprep.subr.bf16.mxu0 0
    %318 = vmatpush1.bf16.msra.mxu0 0
    %319 = vmatprep.subr.bf16.mxu0 0
    %320 = vmatpush1.bf16.msra.mxu0 0
    %321 = vmatprep.subr.bf16.mxu0 0
    %322 = vmatpush1.bf16.msra.mxu0 0
    %323 = vmatprep.subr.bf16.mxu0 0
    %324 = vmatpush1.bf16.msra.mxu0 0
    %325 = vmatprep.subr.bf16.mxu0 0
    %326 = vmatpush1.bf16.msra.mxu0 0
    %327 = vmatprep.subr.bf16.mxu0 0
    %328 = vmatpush1.bf16.msra.mxu0 0
    %329 = vmatprep.subr.bf16.mxu0 0
    %330 = vmatpush1.bf16.msra.mxu0 0
    %331 = vmatprep.subr.bf16.mxu0 0
    %332 = vmatpush1.bf16.msra.mxu0 0
    %333 = vmatprep.mubr.bf16.mxu0 0
    %334 = vmatmul.mubr.bf16.gmra.mrb[0].mxu0 %v234
    %v335 = vpop.f32.mrb[0].mxu0
    %v336 = vadd.f32 %v288, %v335
    %v337 = vpop.f32.mrb[0].mxu0
    %v338 = vpop.f32.mrb[0].mxu0
    %v339 = vadd.f32 %v288, %v338
    %v340 = vpop.f32.mrb[0].mxu0
    %341 = vdwg.mxu0
    %s342 = scalar_lea.vmem [#allocation8], 32
    %v343 = vld [vmem:[%s342] sm:$0xf]
    %v344 = vld [vmem:[%s342 + $0x4] sm:$0xf]
    %v345 = vld [vmem:[%s342 + $0x8] sm:$0xf]
    %v346 = vld [vmem:[%s342 + $0xc] sm:$0xf]
    %v347 = vld [vmem:[#allocation10 + $0x2] sm:$0x1]
    %v348 = vlaneseq
    %v349 = vshrl.u32 %v348, 7
    %v350 = vsub.s32 0, %v349
    %v351 = vrot.slane %v347, %v350
    %v356 = vunpack.c.l.b16 %v343
    %v357 = vunpack.c.l.b16 %v344
    %v358 = vunpack.c.l.b16 %v345
    %v359 = vunpack.c.l.b16 %v346
    %v360 = vpack.c.b16 %v357, %v356
    %v361 = vpack.c.b16 %v359, %v358
    %364 = vmatprep.subr.bf16.mxu0 0
    %365 = vmatpush1.bf16.msra.mxu0 %v360
    %366 = vmatprep.subr.bf16.mxu0 0
    %367 = vmatpush1.bf16.msra.mxu0 %v361
    %368 = vmatprep.subr.bf16.mxu0 0
    %369 = vmatpush1.bf16.msra.mxu0 0
    %370 = vmatprep.subr.bf16.mxu0 0
    %371 = vmatpush1.bf16.msra.mxu0 0
    %372 = vmatprep.subr.bf16.mxu0 0
    %373 = vmatpush1.bf16.msra.mxu0 0
    %374 = vmatprep.subr.bf16.mxu0 0
    %375 = vmatpush1.bf16.msra.mxu0 0
    %376 = vmatprep.subr.bf16.mxu0 0
    %377 = vmatpush1.bf16.msra.mxu0 0
    %378 = vmatprep.subr.bf16.mxu0 0
    %379 = vmatpush1.bf16.msra.mxu0 0
    %380 = vmatprep.subr.bf16.mxu0 0
    %381 = vmatpush1.bf16.msra.mxu0 0
    %382 = vmatprep.subr.bf16.mxu0 0
    %383 = vmatpush1.bf16.msra.mxu0 0
    %384 = vmatprep.subr.bf16.mxu0 0
    %385 = vmatpush1.bf16.msra.mxu0 0
    %386 = vmatprep.subr.bf16.mxu0 0
    %387 = vmatpush1.bf16.msra.mxu0 0
    %388 = vmatprep.subr.bf16.mxu0 0
    %389 = vmatpush1.bf16.msra.mxu0 0
    %390 = vmatprep.subr.bf16.mxu0 0
    %391 = vmatpush1.bf16.msra.mxu0 0
    %392 = vmatprep.subr.bf16.mxu0 0
    %393 = vmatpush1.bf16.msra.mxu0 0
    %394 = vmatprep.subr.bf16.mxu0 0
    %395 = vmatpush1.bf16.msra.mxu0 0
    %396 = vmatprep.mubr.bf16.mxu0 0
    %397 = vmatmul.mubr.bf16.gmra.mrb[0].mxu0 %v234
    %v398 = vpop.f32.mrb[0].mxu0
    %v399 = vadd.f32 %v351, %v398
    %v400 = vpop.f32.mrb[0].mxu0
    %v401 = vpop.f32.mrb[0].mxu0
    %v402 = vadd.f32 %v351, %v401
    %v403 = vpop.f32.mrb[0].mxu0
    %404 = vdwg.mxu0
    %v405 = vld [vmem:[#allocation5] sm:$0x3]
    %v406 = vld [vmem:[#allocation5 + $0x2] sm:$0x3]
    %v407 = vunpack.c.0.s8 %v405
    %v408 = vunpack.c.0.s8 %v406
    %v409 = vcvt.s32.f32 %v407
    %v410 = vcvt.s32.f32 %v408
    %v411 = vsub.f32 %v409, 1.0
    %v412 = vsub.f32 %v410, 1.0
    %v413 = vmul.f32 %v411, 1e+09
    %v414 = vmul.f32 %v412, 1e+09
    %v415 = vpack.c.bf16 %v277, %v277
    %v416 = vpack.c.bf16 %v336, %v336
    %vm417 = vcmask 64512
    %v419 = vsel %vm417, %v415, 0
    %v422 = vsel %vm417, %v416, 0
    %424 = vmatprep.subr.bf16.mxu0 0
    %425 = vmatpush1.bf16.xpose.msra.mxu0 %v422
    %426 = vmatprep.subr.bf16.mxu0 0
    %427 = vmatpush1.bf16.xpose.msra.mxu0 0
    %428 = vmatprep.subr.bf16.mxu0 0
    %429 = vmatpush1.bf16.xpose.msra.mxu0 0
    %430 = vmatprep.subr.bf16.mxu0 0
    %431 = vmatpush1.bf16.xpose.msra.mxu0 0
    %432 = vmatprep.subr.bf16.mxu0 0
    %433 = vmatpush1.bf16.xpose.msra.mxu0 0
    %434 = vmatprep.subr.bf16.mxu0 0
    %435 = vmatpush1.bf16.xpose.msra.mxu0 0
    %436 = vmatprep.subr.bf16.mxu0 0
    %437 = vmatpush1.bf16.xpose.msra.mxu0 0
    %438 = vmatprep.subr.bf16.mxu0 0
    %439 = vmatpush1.bf16.xpose.msra.mxu0 0
    %440 = vmatprep.subr.bf16.mxu0 0
    %441 = vmatpush1.bf16.xpose.msra.mxu0 0
    %442 = vmatprep.subr.bf16.mxu0 0
    %443 = vmatpush1.bf16.xpose.msra.mxu0 0
    %444 = vmatprep.subr.bf16.mxu0 0
    %445 = vmatpush1.bf16.xpose.msra.mxu0 0
    %446 = vmatprep.subr.bf16.mxu0 0
    %447 = vmatpush1.bf16.xpose.msra.mxu0 0
    %448 = vmatprep.subr.bf16.mxu0 0
    %449 = vmatpush1.bf16.xpose.msra.mxu0 0
    %450 = vmatprep.subr.bf16.mxu0 0
    %451 = vmatpush1.bf16.xpose.msra.mxu0 0
    %452 = vmatprep.subr.bf16.mxu0 0
    %453 = vmatpush1.bf16.xpose.msra.mxu0 0
    %454 = vmatprep.subr.bf16.mxu0 0
    %455 = vmatpush1.bf16.xpose.msra.mxu0 0
    %456 = vmatprep.mubr.bf16.mxu0 0
    %457 = vmatmul.mubr.bf16.gmra.mrb[0].mxu0 %v419
    %v458 = vpop.f32.mrb[0].mxu0
    %v459 = vadd.f32 %v413, %v458
    %v460 = vpop.f32.mrb[0].mxu0
    %v461 = vpop.f32.mrb[0].mxu0
    %v462 = vpop.f32.mrb[0].mxu0
    %463 = vdwg.mxu0
    %v464 = vsel %vm417, %v459, -inf
    %465 = vmax.xlane.f32.xlu0 %v464
    %v466 = vpop.xlane.xlu0 %465
    %v467 = vsub.f32 %v459, %v466
    %v468 = vmul.f32 %v467, 1.442695
    %v469 = vpow.pop %v468
    %v470 = vsel %vm417, %v469, 0.0
    %471 = vadd.xlane.f32.xlu0 %v470
    %v472 = vpop.xlane.xlu0 %471
    %v473 = vpack.c.bf16 %v469, %v469
    %v474 = vpack.c.bf16 %v399, %v399
    %v476 = vsel %vm417, %v473, 0
    %vm478 = vcmask 1043456
    %v480 = vsel %vm478, %v474, 0
    %482 = vmatprep.subr.bf16.mxu0 0
    %483 = vmatpush1.bf16.msra.mxu0 %v480
    %484 = vmatprep.subr.bf16.mxu0 0
    %485 = vmatpush1.bf16.msra.mxu0 0
    %486 = vmatprep.subr.bf16.mxu0 0
    %487 = vmatpush1.bf16.msra.mxu0 0
    %488 = vmatprep.subr.bf16.mxu0 0
    %489 = vmatpush1.bf16.msra.mxu0 0
    %490 = vmatprep.subr.bf16.mxu0 0
    %491 = vmatpush1.bf16.msra.mxu0 0
    %492 = vmatprep.subr.bf16.mxu0 0
    %493 = vmatpush1.bf16.msra.mxu0 0
    %494 = vmatprep.subr.bf16.mxu0 0
    %495 = vmatpush1.bf16.msra.mxu0 0
    %496 = vmatprep.subr.bf16.mxu0 0
    %497 = vmatpush1.bf16.msra.mxu0 0
    %498 = vmatprep.subr.bf16.mxu0 0
    %499 = vmatpush1.bf16.msra.mxu0 0
    %500 = vmatprep.subr.bf16.mxu0 0
    %501 = vmatpush1.bf16.msra.mxu0 0
    %502 = vmatprep.subr.bf16.mxu0 0
    %503 = vmatpush1.bf16.msra.mxu0 0
    %504 = vmatprep.subr.bf16.mxu0 0
    %505 = vmatpush1.bf16.msra.mxu0 0
    %506 = vmatprep.subr.bf16.mxu0 0
    %507 = vmatpush1.bf16.msra.mxu0 0
    %508 = vmatprep.subr.bf16.mxu0 0
    %509 = vmatpush1.bf16.msra.mxu0 0
    %510 = vmatprep.subr.bf16.mxu0 0
    %511 = vmatpush1.bf16.msra.mxu0 0
    %512 = vmatprep.subr.bf16.mxu0 0
    %513 = vmatpush1.bf16.msra.mxu0 0
    %514 = vmatprep.mubr.bf16.mxu0 0
    %515 = vmatmul.mubr.bf16.gmra.mrb[0].mxu0 %v476
    %v516 = vpop.f32.mrb[0].mxu0
    %v517 = vadd.f32 0.0, %v516
    %v518 = vpop.f32.mrb[0].mxu0
    %v519 = vpop.f32.mrb[0].mxu0
    %v520 = vpop.f32.mrb[0].mxu0
    %521 = vdwg.mxu0
    %v522 = vrcp.pop %v472
    %v523 = vmul.f32 %v517, %v522
    %v524 = vld [vmem:[%s6] sm:$0xf]
    %v525 = vpack.c.bf16 %v523, %v523
    %527 = vrot.lane.b32.xlu0 %v415, 120
    %v528 = vpop.permute.xlu0 %527
    %530 = vrot.lane.b32.xlu0 %v416, 120
    %v531 = vpop.permute.xlu0 %530
    %v533 = vsel %vm417, %v528, 0
    %v536 = vsel %vm417, %v531, 0
    %538 = vmatprep.subr.bf16.mxu0 0
    %539 = vmatpush1.bf16.xpose.msra.mxu0 %v536
    %540 = vmatprep.subr.bf16.mxu0 0
    %541 = vmatpush1.bf16.xpose.msra.mxu0 0
    %542 = vmatprep.subr.bf16.mxu0 0
    %543 = vmatpush1.bf16.xpose.msra.mxu0 0
    %544 = vmatprep.subr.bf16.mxu0 0
    %545 = vmatpush1.bf16.xpose.msra.mxu0 0
    %546 = vmatprep.subr.bf16.mxu0 0
    %547 = vmatpush1.bf16.xpose.msra.mxu0 0
    %548 = vmatprep.subr.bf16.mxu0 0
    %549 = vmatpush1.bf16.xpose.msra.mxu0 0
    %550 = vmatprep.subr.bf16.mxu0 0
    %551 = vmatpush1.bf16.xpose.msra.mxu0 0
    %552 = vmatprep.subr.bf16.mxu0 0
    %553 = vmatpush1.bf16.xpose.msra.mxu0 0
    %554 = vmatprep.subr.bf16.mxu0 0
    %555 = vmatpush1.bf16.xpose.msra.mxu0 0
    %556 = vmatprep.subr.bf16.mxu0 0
    %557 = vmatpush1.bf16.xpose.msra.mxu0 0
    %558 = vmatprep.subr.bf16.mxu0 0
    %559 = vmatpush1.bf16.xpose.msra.mxu0 0
    %560 = vmatprep.subr.bf16.mxu0 0
    %561 = vmatpush1.bf16.xpose.msra.mxu0 0
    %562 = vmatprep.subr.bf16.mxu0 0
    %563 = vmatpush1.bf16.xpose.msra.mxu0 0
    %564 = vmatprep.subr.bf16.mxu0 0
    %565 = vmatpush1.bf16.xpose.msra.mxu0 0
    %566 = vmatprep.subr.bf16.mxu0 0
    %567 = vmatpush1.bf16.xpose.msra.mxu0 0
    %568 = vmatprep.subr.bf16.mxu0 0
    %569 = vmatpush1.bf16.xpose.msra.mxu0 0
    %570 = vmatprep.mubr.bf16.mxu0 0
    %571 = vmatmul.mubr.bf16.gmra.mrb[0].mxu0 %v533
    %v572 = vpop.f32.mrb[0].mxu0
    %v573 = vadd.f32 %v413, %v572
    %v574 = vpop.f32.mrb[0].mxu0
    %v575 = vpop.f32.mrb[0].mxu0
    %v576 = vpop.f32.mrb[0].mxu0
    %577 = vdwg.mxu0
    %v578 = vsel %vm417, %v573, -inf
    %579 = vmax.xlane.f32.xlu0 %v578
    %v580 = vpop.xlane.xlu0 %579
    %v581 = vsub.f32 %v573, %v580
    %v582 = vmul.f32 %v581, 1.442695
    %v583 = vpow.pop %v582
    %v584 = vsel %vm417, %v583, 0.0
    %585 = vadd.xlane.f32.xlu0 %v584
    %v586 = vpop.xlane.xlu0 %585
    %v587 = vpack.c.bf16 %v583, %v583
    %589 = vrot.lane.b32.xlu0 %v474, 120
    %v590 = vpop.permute.xlu0 %589
    %v592 = vsel %vm417, %v587, 0
    %v595 = vsel %vm478, %v590, 0
    %597 = vmatprep.subr.bf16.mxu0 0
    %598 = vmatpush1.bf16.msra.mxu0 %v595
    %599 = vmatprep.subr.bf16.mxu0 0
    %600 = vmatpush1.bf16.msra.mxu0 0
    %601 = vmatprep.subr.bf16.mxu0 0
    %602 = vmatpush1.bf16.msra.mxu0 0
    %603 = vmatprep.subr.bf16.mxu0 0
    %604 = vmatpush1.bf16.msra.mxu0 0
    %605 = vmatprep.subr.bf16.mxu0 0
    %606 = vmatpush1.bf16.msra.mxu0 0
    %607 = vmatprep.subr.bf16.mxu0 0
    %608 = vmatpush1.bf16.msra.mxu0 0
    %609 = vmatprep.subr.bf16.mxu0 0
    %610 = vmatpush1.bf16.msra.mxu0 0
    %611 = vmatprep.subr.bf16.mxu0 0
    %612 = vmatpush1.bf16.msra.mxu0 0
    %613 = vmatprep.subr.bf16.mxu0 0
    %614 = vmatpush1.bf16.msra.mxu0 0
    %615 = vmatprep.subr.bf16.mxu0 0
    %616 = vmatpush1.bf16.msra.mxu0 0
    %617 = vmatprep.subr.bf16.mxu0 0
    %618 = vmatpush1.bf16.msra.mxu0 0
    %619 = vmatprep.subr.bf16.mxu0 0
    %620 = vmatpush1.bf16.msra.mxu0 0
    %621 = vmatprep.subr.bf16.mxu0 0
    %622 = vmatpush1.bf16.msra.mxu0 0
    %623 = vmatprep.subr.bf16.mxu0 0
    %624 = vmatpush1.bf16.msra.mxu0 0
    %625 = vmatprep.subr.bf16.mxu0 0
    %626 = vmatpush1.bf16.msra.mxu0 0
    %627 = vmatprep.subr.bf16.mxu0 0
    %628 = vmatpush1.bf16.msra.mxu0 0
    %629 = vmatprep.mubr.bf16.mxu0 0
    %630 = vmatmul.mubr.bf16.gmra.mrb[0].mxu0 %v592
    %v631 = vpop.f32.mrb[0].mxu0
    %v632 = vadd.f32 0.0, %v631
    %v633 = vpop.f32.mrb[0].mxu0
    %v634 = vpop.f32.mrb[0].mxu0
    %v635 = vpop.f32.mrb[0].mxu0
    %636 = vdwg.mxu0
    %v637 = vrcp.pop %v586
    %v638 = vmul.f32 %v632, %v637
    %s639 = scalar_lea.vmem %s6, 4
    %v640 = vld [vmem:[%s639] sm:$0xf]
    %v641 = vpack.c.bf16 %v638, %v638
    %v643 = vsel %vm417, %v641, 0
    %v646 = vsel %vm478, %v640, 0
    %648 = vmatprep.subr.bf16.mxu0 0
    %649 = vmatpush1.bf16.msra.mxu0 %v646
    %650 = vmatprep.subr.bf16.mxu0 0
    %651 = vmatpush1.bf16.msra.mxu0 0
    %652 = vmatprep.subr.bf16.mxu0 0
    %653 = vmatpush1.bf16.msra.mxu0 0
    %654 = vmatprep.subr.bf16.mxu0 0
    %655 = vmatpush1.bf16.msra.mxu0 0
    %656 = vmatprep.subr.bf16.mxu0 0
    %657 = vmatpush1.bf16.msra.mxu0 0
    %658 = vmatprep.subr.bf16.mxu0 0
    %659 = vmatpush1.bf16.msra.mxu0 0
    %660 = vmatprep.subr.bf16.mxu0 0
    %661 = vmatpush1.bf16.msra.mxu0 0
    %662 = vmatprep.subr.bf16.mxu0 0
    %663 = vmatpush1.bf16.msra.mxu0 0
    %664 = vmatprep.subr.bf16.mxu0 0
    %665 = vmatpush1.bf16.msra.mxu0 0
    %666 = vmatprep.subr.bf16.mxu0 0
    %667 = vmatpush1.bf16.msra.mxu0 0
    %668 = vmatprep.subr.bf16.mxu0 0
    %669 = vmatpush1.bf16.msra.mxu0 0
    %670 = vmatprep.subr.bf16.mxu0 0
    %671 = vmatpush1.bf16.msra.mxu0 0
    %672 = vmatprep.subr.bf16.mxu0 0
    %673 = vmatpush1.bf16.msra.mxu0 0
    %674 = vmatprep.subr.bf16.mxu0 0
    %675 = vmatpush1.bf16.msra.mxu0 0
    %676 = vmatprep.subr.bf16.mxu0 0
    %677 = vmatpush1.bf16.msra.mxu0 0
    %678 = vmatprep.subr.bf16.mxu0 0
    %679 = vmatpush1.bf16.msra.mxu0 0
    %680 = vmatprep.mubr.bf16.mxu0 0
    %681 = vmatmul.mubr.bf16.gmra.mrb[0].mxu0 %v643
    %v682 = vpop.f32.mrb[0].mxu0
    %v683 = vadd.f32 0.0, %v682
    %v684 = vpop.f32.mrb[0].mxu0
    %v685 = vpop.f32.mrb[0].mxu0
    %v686 = vpop.f32.mrb[0].mxu0
    %687 = vdwg.mxu0
    %v689 = vsel %vm417, %v525, 0
    %v692 = vsel %vm478, %v524, 0
    %694 = vmatprep.subr.bf16.mxu0 0
    %695 = vmatpush1.bf16.msra.mxu0 %v692
    %696 = vmatprep.subr.bf16.mxu0 0
    %697 = vmatpush1.bf16.msra.mxu0 0
    %698 = vmatprep.subr.bf16.mxu0 0
    %699 = vmatpush1.bf16.msra.mxu0 0
    %700 = vmatprep.subr.bf16.mxu0 0
    %701 = vmatpush1.bf16.msra.mxu0 0
    %702 = vmatprep.subr.bf16.mxu0 0
    %703 = vmatpush1.bf16.msra.mxu0 0
    %704 = vmatprep.subr.bf16.mxu0 0
    %705 = vmatpush1.bf16.msra.mxu0 0
    %706 = vmatprep.subr.bf16.mxu0 0
    %707 = vmatpush1.bf16.msra.mxu0 0
    %708 = vmatprep.subr.bf16.mxu0 0
    %709 = vmatpush1.bf16.msra.mxu0 0
    %710 = vmatprep.subr.bf16.mxu0 0
    %711 = vmatpush1.bf16.msra.mxu0 0
    %712 = vmatprep.subr.bf16.mxu0 0
    %713 = vmatpush1.bf16.msra.mxu0 0
    %714 = vmatprep.subr.bf16.mxu0 0
    %715 = vmatpush1.bf16.msra.mxu0 0
    %716 = vmatprep.subr.bf16.mxu0 0
    %717 = vmatpush1.bf16.msra.mxu0 0
    %718 = vmatprep.subr.bf16.mxu0 0
    %719 = vmatpush1.bf16.msra.mxu0 0
    %720 = vmatprep.subr.bf16.mxu0 0
    %721 = vmatpush1.bf16.msra.mxu0 0
    %722 = vmatprep.subr.bf16.mxu0 0
    %723 = vmatpush1.bf16.msra.mxu0 0
    %724 = vmatprep.subr.bf16.mxu0 0
    %725 = vmatpush1.bf16.msra.mxu0 0
    %726 = vmatprep.mubr.bf16.mxu0 0
    %727 = vmatmul.mubr.bf16.gmra.mrb[0].mxu0 %v689
    %v728 = vpop.f32.mrb[0].mxu0
    %v729 = vadd.f32 %v683, %v728
    %v730 = vpop.f32.mrb[0].mxu0
    %v731 = vpop.f32.mrb[0].mxu0
    %v732 = vpop.f32.mrb[0].mxu0
    %733 = vdwg.mxu0
    %734 = vrot.lane.b32.xlu0 %v415, 112
    %v735 = vpop.permute.xlu0 %734
    %736 = vrot.lane.b32.xlu0 %v416, 112
    %v737 = vpop.permute.xlu0 %736
    %v739 = vsel %vm417, %v735, 0
    %v742 = vsel %vm417, %v737, 0
    %744 = vmatprep.subr.bf16.mxu0 0
    %745 = vmatpush1.bf16.xpose.msra.mxu0 %v742
    %746 = vmatprep.subr.bf16.mxu0 0
    %747 = vmatpush1.bf16.xpose.msra.mxu0 0
    %748 = vmatprep.subr.bf16.mxu0 0
    %749 = vmatpush1.bf16.xpose.msra.mxu0 0
    %750 = vmatprep.subr.bf16.mxu0 0
    %751 = vmatpush1.bf16.xpose.msra.mxu0 0
    %752 = vmatprep.subr.bf16.mxu0 0
    %753 = vmatpush1.bf16.xpose.msra.mxu0 0
    %754 = vmatprep.subr.bf16.mxu0 0
    %755 = vmatpush1.bf16.xpose.msra.mxu0 0
    %756 = vmatprep.subr.bf16.mxu0 0
    %757 = vmatpush1.bf16.xpose.msra.mxu0 0
    %758 = vmatprep.subr.bf16.mxu0 0
    %759 = vmatpush1.bf16.xpose.msra.mxu0 0
    %760 = vmatprep.subr.bf16.mxu0 0
    %761 = vmatpush1.bf16.xpose.msra.mxu0 0
    %762 = vmatprep.subr.bf16.mxu0 0
    %763 = vmatpush1.bf16.xpose.msra.mxu0 0
    %764 = vmatprep.subr.bf16.mxu0 0
    %765 = vmatpush1.bf16.xpose.msra.mxu0 0
    %766 = vmatprep.subr.bf16.mxu0 0
    %767 = vmatpush1.bf16.xpose.msra.mxu0 0
    %768 = vmatprep.subr.bf16.mxu0 0
    %769 = vmatpush1.bf16.xpose.msra.mxu0 0
    %770 = vmatprep.subr.bf16.mxu0 0
    %771 = vmatpush1.bf16.xpose.msra.mxu0 0
    %772 = vmatprep.subr.bf16.mxu0 0
    %773 = vmatpush1.bf16.xpose.msra.mxu0 0
    %774 = vmatprep.subr.bf16.mxu0 0
    %775 = vmatpush1.bf16.xpose.msra.mxu0 0
    %776 = vmatprep.mubr.bf16.mxu0 0
    %777 = vmatmul.mubr.bf16.gmra.mrb[0].mxu0 %v739
    %v778 = vpop.f32.mrb[0].mxu0
    %v779 = vadd.f32 %v413, %v778
    %v780 = vpop.f32.mrb[0].mxu0
    %v781 = vpop.f32.mrb[0].mxu0
    %v782 = vpop.f32.mrb[0].mxu0
    %783 = vdwg.mxu0
    %v784 = vsel %vm417, %v779, -inf
    %785 = vmax.xlane.f32.xlu0 %v784
    %v786 = vpop.xlane.xlu0 %785
    %v787 = vsub.f32 %v779, %v786
    %v788 = vmul.f32 %v787, 1.442695
    %v789 = vpow.pop %v788
    %v790 = vsel %vm417, %v789, 0.0
    %791 = vadd.xlane.f32.xlu0 %v790
    %v792 = vpop.xlane.xlu0 %791
    %v793 = vpack.c.bf16 %v789, %v789
    %794 = vrot.lane.b32.xlu0 %v474, 112
    %v795 = vpop.permute.xlu0 %794
    %v797 = vsel %vm417, %v793, 0
    %v800 = vsel %vm478, %v795, 0
    %802 = vmatprep.subr.bf16.mxu0 0
    %803 = vmatpush1.bf16.msra.mxu0 %v800
    %804 = vmatprep.subr.bf16.mxu0 0
    %805 = vmatpush1.bf16.msra.mxu0 0
    %806 = vmatprep.subr.bf16.mxu0 0
    %807 = vmatpush1.bf16.msra.mxu0 0
    %808 = vmatprep.subr.bf16.mxu0 0
    %809 = vmatpush1.bf16.msra.mxu0 0
    %810 = vmatprep.subr.bf16.mxu0 0
    %811 = vmatpush1.bf16.msra.mxu0 0
    %812 = vmatprep.subr.bf16.mxu0 0
    %813 = vmatpush1.bf16.msra.mxu0 0
    %814 = vmatprep.subr.bf16.mxu0 0
    %815 = vmatpush1.bf16.msra.mxu0 0
    %816 = vmatprep.subr.bf16.mxu0 0
    %817 = vmatpush1.bf16.msra.mxu0 0
    %818 = vmatprep.subr.bf16.mxu0 0
    %819 = vmatpush1.bf16.msra.mxu0 0
    %820 = vmatprep.subr.bf16.mxu0 0
    %821 = vmatpush1.bf16.msra.mxu0 0
    %822 = vmatprep.subr.bf16.mxu0 0
    %823 = vmatpush1.bf16.msra.mxu0 0
    %824 = vmatprep.subr.bf16.mxu0 0
    %825 = vmatpush1.bf16.msra.mxu0 0
    %826 = vmatprep.subr.bf16.mxu0 0
    %827 = vmatpush1.bf16.msra.mxu0 0
    %828 = vmatprep.subr.bf16.mxu0 0
    %829 = vmatpush1.bf16.msra.mxu0 0
    %830 = vmatprep.subr.bf16.mxu0 0
    %831 = vmatpush1.bf16.msra.mxu0 0
    %832 = vmatprep.subr.bf16.mxu0 0
    %833 = vmatpush1.bf16.msra.mxu0 0
    %834 = vmatprep.mubr.bf16.mxu0 0
    %835 = vmatmul.mubr.bf16.gmra.mrb[0].mxu0 %v797
    %v836 = vpop.f32.mrb[0].mxu0
    %v837 = vadd.f32 0.0, %v836
    %v838 = vpop.f32.mrb[0].mxu0
    %v839 = vpop.f32.mrb[0].mxu0
    %v840 = vpop.f32.mrb[0].mxu0
    %841 = vdwg.mxu0
    %v842 = vrcp.pop %v792
    %v843 = vmul.f32 %v837, %v842
    %s844 = scalar_lea.vmem %s6, 8
    %v845 = vld [vmem:[%s844] sm:$0xf]
    %v846 = vpack.c.bf16 %v843, %v843
    %v848 = vsel %vm417, %v846, 0
    %v851 = vsel %vm478, %v845, 0
    %853 = vmatprep.subr.bf16.mxu0 0
    %854 = vmatpush1.bf16.msra.mxu0 %v851
    %855 = vmatprep.subr.bf16.mxu0 0
    %856 = vmatpush1.bf16.msra.mxu0 0
    %857 = vmatprep.subr.bf16.mxu0 0
    %858 = vmatpush1.bf16.msra.mxu0 0
    %859 = vmatprep.subr.bf16.mxu0 0
    %860 = vmatpush1.bf16.msra.mxu0 0
    %861 = vmatprep.subr.bf16.mxu0 0
    %862 = vmatpush1.bf16.msra.mxu0 0
    %863 = vmatprep.subr.bf16.mxu0 0
    %864 = vmatpush1.bf16.msra.mxu0 0
    %865 = vmatprep.subr.bf16.mxu0 0
    %866 = vmatpush1.bf16.msra.mxu0 0
    %867 = vmatprep.subr.bf16.mxu0 0
    %868 = vmatpush1.bf16.msra.mxu0 0
    %869 = vmatprep.subr.bf16.mxu0 0
    %870 = vmatpush1.bf16.msra.mxu0 0
    %871 = vmatprep.subr.bf16.mxu0 0
    %872 = vmatpush1.bf16.msra.mxu0 0
    %873 = vmatprep.subr.bf16.mxu0 0
    %874 = vmatpush1.bf16.msra.mxu0 0
    %875 = vmatprep.subr.bf16.mxu0 0
    %876 = vmatpush1.bf16.msra.mxu0 0
    %877 = vmatprep.subr.bf16.mxu0 0
    %878 = vmatpush1.bf16.msra.mxu0 0
    %879 = vmatprep.subr.bf16.mxu0 0
    %880 = vmatpush1.bf16.msra.mxu0 0
    %881 = vmatprep.subr.bf16.mxu0 0
    %882 = vmatpush1.bf16.msra.mxu0 0
    %883 = vmatprep.subr.bf16.mxu0 0
    %884 = vmatpush1.bf16.msra.mxu0 0
    %885 = vmatprep.mubr.bf16.mxu0 0
    %886 = vmatmul.mubr.bf16.gmra.mrb[0].mxu0 %v848
    %v887 = vpop.f32.mrb[0].mxu0
    %v888 = vadd.f32 0.0, %v887
    %v889 = vpop.f32.mrb[0].mxu0
    %v890 = vpop.f32.mrb[0].mxu0
    %v891 = vpop.f32.mrb[0].mxu0
    %892 = vdwg.mxu0
    %v893 = vadd.f32 %v729, %v888
    %894 = vrot.lane.b32.xlu0 %v415, 104
    %v895 = vpop.permute.xlu0 %894
    %896 = vrot.lane.b32.xlu0 %v416, 104
    %v897 = vpop.permute.xlu0 %896
    %v899 = vsel %vm417, %v895, 0
    %v902 = vsel %vm417, %v897, 0
    %904 = vmatprep.subr.bf16.mxu0 0
    %905 = vmatpush1.bf16.xpose.msra.mxu0 %v902
    %906 = vmatprep.subr.bf16.mxu0 0
    %907 = vmatpush1.bf16.xpose.msra.mxu0 0
    %908 = vmatprep.subr.bf16.mxu0 0
    %909 = vmatpush1.bf16.xpose.msra.mxu0 0
    %910 = vmatprep.subr.bf16.mxu0 0
    %911 = vmatpush1.bf16.xpose.msra.mxu0 0
    %912 = vmatprep.subr.bf16.mxu0 0
    %913 = vmatpush1.bf16.xpose.msra.mxu0 0
    %914 = vmatprep.subr.bf16.mxu0 0
    %915 = vmatpush1.bf16.xpose.msra.mxu0 0
    %916 = vmatprep.subr.bf16.mxu0 0
    %917 = vmatpush1.bf16.xpose.msra.mxu0 0
    %918 = vmatprep.subr.bf16.mxu0 0
    %919 = vmatpush1.bf16.xpose.msra.mxu0 0
    %920 = vmatprep.subr.bf16.mxu0 0
    %921 = vmatpush1.bf16.xpose.msra.mxu0 0
    %922 = vmatprep.subr.bf16.mxu0 0
    %923 = vmatpush1.bf16.xpose.msra.mxu0 0
    %924 = vmatprep.subr.bf16.mxu0 0
    %925 = vmatpush1.bf16.xpose.msra.mxu0 0
    %926 = vmatprep.subr.bf16.mxu0 0
    %927 = vmatpush1.bf16.xpose.msra.mxu0 0
    %928 = vmatprep.subr.bf16.mxu0 0
    %929 = vmatpush1.bf16.xpose.msra.mxu0 0
    %930 = vmatprep.subr.bf16.mxu0 0
    %931 = vmatpush1.bf16.xpose.msra.mxu0 0
    %932 = vmatprep.subr.bf16.mxu0 0
    %933 = vmatpush1.bf16.xpose.msra.mxu0 0
    %934 = vmatprep.subr.bf16.mxu0 0
    %935 = vmatpush1.bf16.xpose.msra.mxu0 0
    %936 = vmatprep.mubr.bf16.mxu0 0
    %937 = vmatmul.mubr.bf16.gmra.mrb[0].mxu0 %v899
    %v938 = vpop.f32.mrb[0].mxu0
    %v939 = vadd.f32 %v413, %v938
    %v940 = vpop.f32.mrb[0].mxu0
    %v941 = vpop.f32.mrb[0].mxu0
    %v942 = vpop.f32.mrb[0].mxu0
    %943 = vdwg.mxu0
    %v944 = vsel %vm417, %v939, -inf
    %945 = vmax.xlane.f32.xlu0 %v944
    %v946 = vpop.xlane.xlu0 %945
    %v947 = vsub.f32 %v939, %v946
    %v948 = vmul.f32 %v947, 1.442695
    %v949 = vpow.pop %v948
    %v950 = vsel %vm417, %v949, 0.0
    %951 = vadd.xlane.f32.xlu0 %v950
    %v952 = vpop.xlane.xlu0 %951
    %v953 = vpack.c.bf16 %v949, %v949
    %954 = vrot.lane.b32.xlu0 %v474, 104
    %v955 = vpop.permute.xlu0 %954
    %v957 = vsel %vm417, %v953, 0
    %v960 = vsel %vm478, %v955, 0
    %962 = vmatprep.subr.bf16.mxu0 0
    %963 = vmatpush1.bf16.msra.mxu0 %v960
    %964 = vmatprep.subr.bf16.mxu0 0
    %965 = vmatpush1.bf16.msra.mxu0 0
    %966 = vmatprep.subr.bf16.mxu0 0
    %967 = vmatpush1.bf16.msra.mxu0 0
    %968 = vmatprep.subr.bf16.mxu0 0
    %969 = vmatpush1.bf16.msra.mxu0 0
    %970 = vmatprep.subr.bf16.mxu0 0
    %971 = vmatpush1.bf16.msra.mxu0 0
    %972 = vmatprep.subr.bf16.mxu0 0
    %973 = vmatpush1.bf16.msra.mxu0 0
    %974 = vmatprep.subr.bf16.mxu0 0
    %975 = vmatpush1.bf16.msra.mxu0 0
    %976 = vmatprep.subr.bf16.mxu0 0
    %977 = vmatpush1.bf16.msra.mxu0 0
    %978 = vmatprep.subr.bf16.mxu0 0
    %979 = vmatpush1.bf16.msra.mxu0 0
    %980 = vmatprep.subr.bf16.mxu0 0
    %981 = vmatpush1.bf16.msra.mxu0 0
    %982 = vmatprep.subr.bf16.mxu0 0
    %983 = vmatpush1.bf16.msra.mxu0 0
    %984 = vmatprep.subr.bf16.mxu0 0
    %985 = vmatpush1.bf16.msra.mxu0 0
    %986 = vmatprep.subr.bf16.mxu0 0
    %987 = vmatpush1.bf16.msra.mxu0 0
    %988 = vmatprep.subr.bf16.mxu0 0
    %989 = vmatpush1.bf16.msra.mxu0 0
    %990 = vmatprep.subr.bf16.mxu0 0
    %991 = vmatpush1.bf16.msra.mxu0 0
    %992 = vmatprep.subr.bf16.mxu0 0
    %993 = vmatpush1.bf16.msra.mxu0 0
    %994 = vmatprep.mubr.bf16.mxu0 0
    %995 = vmatmul.mubr.bf16.gmra.mrb[0].mxu0 %v957
    %v996 = vpop.f32.mrb[0].mxu0
    %v997 = vadd.f32 0.0, %v996
    %v998 = vpop.f32.mrb[0].mxu0
    %v999 = vpop.f32.mrb[0].mxu0
    %v1000 = vpop.f32.mrb[0].mxu0
    %1001 = vdwg.mxu0
    %v1002 = vrcp.pop %v952
    %v1003 = vmul.f32 %v997, %v1002
    %s1004 = scalar_lea.vmem %s6, 12
    %v1005 = vld [vmem:[%s1004] sm:$0xf]
    %v1006 = vpack.c.bf16 %v1003, %v1003
    %v1008 = vsel %vm417, %v1006, 0
    %v1011 = vsel %vm478, %v1005, 0
    %1013 = vmatprep.subr.bf16.mxu0 0
    %1014 = vmatpush1.bf16.msra.mxu0 %v1011
    %1015 = vmatprep.subr.bf16.mxu0 0
    %1016 = vmatpush1.bf16.msra.mxu0 0
    %1017 = vmatprep.subr.bf16.mxu0 0
    %1018 = vmatpush1.bf16.msra.mxu0 0
    %1019 = vmatprep.subr.bf16.mxu0 0
    %1020 = vmatpush1.bf16.msra.mxu0 0
    %1021 = vmatprep.subr.bf16.mxu0 0
    %1022 = vmatpush1.bf16.msra.mxu0 0
    %1023 = vmatprep.subr.bf16.mxu0 0
    %1024 = vmatpush1.bf16.msra.mxu0 0
    %1025 = vmatprep.subr.bf16.mxu0 0
    %1026 = vmatpush1.bf16.msra.mxu0 0
    %1027 = vmatprep.subr.bf16.mxu0 0
    %1028 = vmatpush1.bf16.msra.mxu0 0
    %1029 = vmatprep.subr.bf16.mxu0 0
    %1030 = vmatpush1.bf16.msra.mxu0 0
    %1031 = vmatprep.subr.bf16.mxu0 0
    %1032 = vmatpush1.bf16.msra.mxu0 0
    %1033 = vmatprep.subr.bf16.mxu0 0
    %1034 = vmatpush1.bf16.msra.mxu0 0
    %1035 = vmatprep.subr.bf16.mxu0 0
    %1036 = vmatpush1.bf16.msra.mxu0 0
    %1037 = vmatprep.subr.bf16.mxu0 0
    %1038 = vmatpush1.bf16.msra.mxu0 0
    %1039 = vmatprep.subr.bf16.mxu0 0
    %1040 = vmatpush1.bf16.msra.mxu0 0
    %1041 = vmatprep.subr.bf16.mxu0 0
    %1042 = vmatpush1.bf16.msra.mxu0 0
    %1043 = vmatprep.subr.bf16.mxu0 0
    %1044 = vmatpush1.bf16.msra.mxu0 0
    %1045 = vmatprep.mubr.bf16.mxu0 0
    %1046 = vmatmul.mubr.bf16.gmra.mrb[0].mxu0 %v1008
    %v1047 = vpop.f32.mrb[0].mxu0
    %v1048 = vadd.f32 0.0, %v1047
    %v1049 = vpop.f32.mrb[0].mxu0
    %v1050 = vpop.f32.mrb[0].mxu0
    %v1051 = vpop.f32.mrb[0].mxu0
    %1052 = vdwg.mxu0
    %v1053 = vadd.f32 %v893, %v1048
    %v1054 = vpack.c.bf16 %v278, %v278
    %v1055 = vpack.c.bf16 %v339, %v339
    %v1057 = vsel %vm417, %v1054, 0
    %v1060 = vsel %vm417, %v1055, 0
    %1062 = vmatprep.subr.bf16.mxu0 0
    %1063 = vmatpush1.bf16.xpose.msra.mxu0 %v1060
    %1064 = vmatprep.subr.bf16.mxu0 0
    %1065 = vmatpush1.bf16.xpose.msra.mxu0 0
    %1066 = vmatprep.subr.bf16.mxu0 0
    %1067 = vmatpush1.bf16.xpose.msra.mxu0 0
    %1068 = vmatprep.subr.bf16.mxu0 0
    %1069 = vmatpush1.bf16.xpose.msra.mxu0 0
    %1070 = vmatprep.subr.bf16.mxu0 0
    %1071 = vmatpush1.bf16.xpose.msra.mxu0 0
    %1072 = vmatprep.subr.bf16.mxu0 0
    %1073 = vmatpush1.bf16.xpose.msra.mxu0 0
    %1074 = vmatprep.subr.bf16.mxu0 0
    %1075 = vmatpush1.bf16.xpose.msra.mxu0 0
    %1076 = vmatprep.subr.bf16.mxu0 0
    %1077 = vmatpush1.bf16.xpose.msra.mxu0 0
    %1078 = vmatprep.subr.bf16.mxu0 0
    %1079 = vmatpush1.bf16.xpose.msra.mxu0 0
    %1080 = vmatprep.subr.bf16.mxu0 0
    %1081 = vmatpush1.bf16.xpose.msra.mxu0 0
    %1082 = vmatprep.subr.bf16.mxu0 0
    %1083 = vmatpush1.bf16.xpose.msra.mxu0 0
    %1084 = vmatprep.subr.bf16.mxu0 0
    %1085 = vmatpush1.bf16.xpose.msra.mxu0 0
    %1086 = vmatprep.subr.bf16.mxu0 0
    %1087 = vmatpush1.bf16.xpose.msra.mxu0 0
    %1088 = vmatprep.subr.bf16.mxu0 0
    %1089 = vmatpush1.bf16.xpose.msra.mxu0 0
    %1090 = vmatprep.subr.bf16.mxu0 0
    %1091 = vmatpush1.bf16.xpose.msra.mxu0 0
    %1092 = vmatprep.subr.bf16.mxu0 0
    %1093 = vmatpush1.bf16.xpose.msra.mxu0 0
    %1094 = vmatprep.mubr.bf16.mxu0 0
    %1095 = vmatmul.mubr.bf16.gmra.mrb[0].mxu0 %v1057
    %v1096 = vpop.f32.mrb[0].mxu0
    %v1097 = vadd.f32 %v414, %v1096
    %v1098 = vpop.f32.mrb[0].mxu0
    %v1099 = vpop.f32.mrb[0].mxu0
    %v1100 = vpop.f32.mrb[0].mxu0
    %1101 = vdwg.mxu0
    %v1102 = vsel %vm417, %v1097, -inf
    %1103 = vmax.xlane.f32.xlu0 %v1102
    %v1104 = vpop.xlane.xlu0 %1103
    %v1105 = vsub.f32 %v1097, %v1104
    %v1106 = vmul.f32 %v1105, 1.442695
    %v1107 = vpow.pop %v1106
    %v1108 = vsel %vm417, %v1107, 0.0
    %1109 = vadd.xlane.f32.xlu0 %v1108
    %v1110 = vpop.xlane.xlu0 %1109
    %v1111 = vpack.c.bf16 %v1107, %v1107
    %v1112 = vpack.c.bf16 %v402, %v402
    %v1114 = vsel %vm417, %v1111, 0
    %v1117 = vsel %vm478, %v1112, 0
    %1119 = vmatprep.subr.bf16.mxu0 0
    %1120 = vmatpush1.bf16.msra.mxu0 %v1117
    %1121 = vmatprep.subr.bf16.mxu0 0
    %1122 = vmatpush1.bf16.msra.mxu0 0
    %1123 = vmatprep.subr.bf16.mxu0 0
    %1124 = vmatpush1.bf16.msra.mxu0 0
    %1125 = vmatprep.subr.bf16.mxu0 0
    %1126 = vmatpush1.bf16.msra.mxu0 0
    %1127 = vmatprep.subr.bf16.mxu0 0
    %1128 = vmatpush1.bf16.msra.mxu0 0
    %1129 = vmatprep.subr.bf16.mxu0 0
    %1130 = vmatpush1.bf16.msra.mxu0 0
    %1131 = vmatprep.subr.bf16.mxu0 0
    %1132 = vmatpush1.bf16.msra.mxu0 0
    %1133 = vmatprep.subr.bf16.mxu0 0
    %1134 = vmatpush1.bf16.msra.mxu0 0
    %1135 = vmatprep.subr.bf16.mxu0 0
    %1136 = vmatpush1.bf16.msra.mxu0 0
    %1137 = vmatprep.subr.bf16.mxu0 0
    %1138 = vmatpush1.bf16.msra.mxu0 0
    %1139 = vmatprep.subr.bf16.mxu0 0
    %1140 = vmatpush1.bf16.msra.mxu0 0
    %1141 = vmatprep.subr.bf16.mxu0 0
    %1142 = vmatpush1.bf16.msra.mxu0 0
    %1143 = vmatprep.subr.bf16.mxu0 0
    %1144 = vmatpush1.bf16.msra.mxu0 0
    %1145 = vmatprep.subr.bf16.mxu0 0
    %1146 = vmatpush1.bf16.msra.mxu0 0
    %1147 = vmatprep.subr.bf16.mxu0 0
    %1148 = vmatpush1.bf16.msra.mxu0 0
    %1149 = vmatprep.subr.bf16.mxu0 0
    %1150 = vmatpush1.bf16.msra.mxu0 0
    %1151 = vmatprep.mubr.bf16.mxu0 0
    %1152 = vmatmul.mubr.bf16.gmra.mrb[0].mxu0 %v1114
    %v1153 = vpop.f32.mrb[0].mxu0
    %v1154 = vadd.f32 0.0, %v1153
    %v1155 = vpop.f32.mrb[0].mxu0
    %v1156 = vpop.f32.mrb[0].mxu0
    %v1157 = vpop.f32.mrb[0].mxu0
    %1158 = vdwg.mxu0
    %v1159 = vrcp.pop %v1110
    %v1160 = vmul.f32 %v1154, %v1159
    %v1161 = vpack.c.bf16 %v1160, %v1160
    %1163 = vrot.lane.b32.xlu0 %v1054, 120
    %v1164 = vpop.permute.xlu0 %1163
    %1166 = vrot.lane.b32.xlu0 %v1055, 120
    %v1167 = vpop.permute.xlu0 %1166
    %v1169 = vsel %vm417, %v1164, 0
    %v1172 = vsel %vm417, %v1167, 0
    %1174 = vmatprep.subr.bf16.mxu0 0
    %1175 = vmatpush1.bf16.xpose.msra.mxu0 %v1172
    %1176 = vmatprep.subr.bf16.mxu0 0
    %1177 = vmatpush1.bf16.xpose.msra.mxu0 0
    %1178 = vmatprep.subr.bf16.mxu0 0
    %1179 = vmatpush1.bf16.xpose.msra.mxu0 0
    %1180 = vmatprep.subr.bf16.mxu0 0
    %1181 = vmatpush1.bf16.xpose.msra.mxu0 0
    %1182 = vmatprep.subr.bf16.mxu0 0
    %1183 = vmatpush1.bf16.xpose.msra.mxu0 0
    %1184 = vmatprep.subr.bf16.mxu0 0
    %1185 = vmatpush1.bf16.xpose.msra.mxu0 0
    %1186 = vmatprep.subr.bf16.mxu0 0
    %1187 = vmatpush1.bf16.xpose.msra.mxu0 0
    %1188 = vmatprep.subr.bf16.mxu0 0
    %1189 = vmatpush1.bf16.xpose.msra.mxu0 0
    %1190 = vmatprep.subr.bf16.mxu0 0
    %1191 = vmatpush1.bf16.xpose.msra.mxu0 0
    %1192 = vmatprep.subr.bf16.mxu0 0
    %1193 = vmatpush1.bf16.xpose.msra.mxu0 0
    %1194 = vmatprep.subr.bf16.mxu0 0
    %1195 = vmatpush1.bf16.xpose.msra.mxu0 0
    %1196 = vmatprep.subr.bf16.mxu0 0
    %1197 = vmatpush1.bf16.xpose.msra.mxu0 0
    %1198 = vmatprep.subr.bf16.mxu0 0
    %1199 = vmatpush1.bf16.xpose.msra.mxu0 0
    %1200 = vmatprep.subr.bf16.mxu0 0
    %1201 = vmatpush1.bf16.xpose.msra.mxu0 0
    %1202 = vmatprep.subr.bf16.mxu0 0
    %1203 = vmatpush1.bf16.xpose.msra.mxu0 0
    %1204 = vmatprep.subr.bf16.mxu0 0
    %1205 = vmatpush1.bf16.xpose.msra.mxu0 0
    %1206 = vmatprep.mubr.bf16.mxu0 0
    %1207 = vmatmul.mubr.bf16.gmra.mrb[0].mxu0 %v1169
    %v1208 = vpop.f32.mrb[0].mxu0
    %v1209 = vadd.f32 %v414, %v1208
    %v1210 = vpop.f32.mrb[0].mxu0
    %v1211 = vpop.f32.mrb[0].mxu0
    %v1212 = vpop.f32.mrb[0].mxu0
    %1213 = vdwg.mxu0
    %v1214 = vsel %vm417, %v1209, -inf
    %1215 = vmax.xlane.f32.xlu0 %v1214
    %v1216 = vpop.xlane.xlu0 %1215
    %v1217 = vsub.f32 %v1209, %v1216
    %v1218 = vmul.f32 %v1217, 1.442695
    %v1219 = vpow.pop %v1218
    %v1220 = vsel %vm417, %v1219, 0.0
    %1221 = vadd.xlane.f32.xlu0 %v1220
    %v1222 = vpop.xlane.xlu0 %1221
    %v1223 = vpack.c.bf16 %v1219, %v1219
    %1225 = vrot.lane.b32.xlu0 %v1112, 120
    %v1226 = vpop.permute.xlu0 %1225
    %v1228 = vsel %vm417, %v1223, 0
    %v1231 = vsel %vm478, %v1226, 0
    %1233 = vmatprep.subr.bf16.mxu0 0
    %1234 = vmatpush1.bf16.msra.mxu0 %v1231
    %1235 = vmatprep.subr.bf16.mxu0 0
    %1236 = vmatpush1.bf16.msra.mxu0 0
    %1237 = vmatprep.subr.bf16.mxu0 0
    %1238 = vmatpush1.bf16.msra.mxu0 0
    %1239 = vmatprep.subr.bf16.mxu0 0
    %1240 = vmatpush1.bf16.msra.mxu0 0
    %1241 = vmatprep.subr.bf16.mxu0 0
    %1242 = vmatpush1.bf16.msra.mxu0 0
    %1243 = vmatprep.subr.bf16.mxu0 0
    %1244 = vmatpush1.bf16.msra.mxu0 0
    %1245 = vmatprep.subr.bf16.mxu0 0
    %1246 = vmatpush1.bf16.msra.mxu0 0
    %1247 = vmatprep.subr.bf16.mxu0 0
    %1248 = vmatpush1.bf16.msra.mxu0 0
    %1249 = vmatprep.subr.bf16.mxu0 0
    %1250 = vmatpush1.bf16.msra.mxu0 0
    %1251 = vmatprep.subr.bf16.mxu0 0
    %1252 = vmatpush1.bf16.msra.mxu0 0
    %1253 = vmatprep.subr.bf16.mxu0 0
    %1254 = vmatpush1.bf16.msra.mxu0 0
    %1255 = vmatprep.subr.bf16.mxu0 0
    %1256 = vmatpush1.bf16.msra.mxu0 0
    %1257 = vmatprep.subr.bf16.mxu0 0
    %1258 = vmatpush1.bf16.msra.mxu0 0
    %1259 = vmatprep.subr.bf16.mxu0 0
    %1260 = vmatpush1.bf16.msra.mxu0 0
    %1261 = vmatprep.subr.bf16.mxu0 0
    %1262 = vmatpush1.bf16.msra.mxu0 0
    %1263 = vmatprep.subr.bf16.mxu0 0
    %1264 = vmatpush1.bf16.msra.mxu0 0
    %1265 = vmatprep.mubr.bf16.mxu0 0
    %1266 = vmatmul.mubr.bf16.gmra.mrb[0].mxu0 %v1228
    %v1267 = vpop.f32.mrb[0].mxu0
    %v1268 = vadd.f32 0.0, %v1267
    %v1269 = vpop.f32.mrb[0].mxu0
    %v1270 = vpop.f32.mrb[0].mxu0
    %v1271 = vpop.f32.mrb[0].mxu0
    %1272 = vdwg.mxu0
    %v1273 = vrcp.pop %v1222
    %v1274 = vmul.f32 %v1268, %v1273
    %v1275 = vpack.c.bf16 %v1274, %v1274
    %v1277 = vsel %vm417, %v1275, 0
    %1279 = vmatprep.subr.bf16.mxu0 0
    %1280 = vmatpush1.bf16.msra.mxu0 %v646
    %1281 = vmatprep.subr.bf16.mxu0 0
    %1282 = vmatpush1.bf16.msra.mxu0 0
    %1283 = vmatprep.subr.bf16.mxu0 0
    %1284 = vmatpush1.bf16.msra.mxu0 0
    %1285 = vmatprep.subr.bf16.mxu0 0
    %1286 = vmatpush1.bf16.msra.mxu0 0
    %1287 = vmatprep.subr.bf16.mxu0 0
    %1288 = vmatpush1.bf16.msra.mxu0 0
    %1289 = vmatprep.subr.bf16.mxu0 0
    %1290 = vmatpush1.bf16.msra.mxu0 0
    %1291 = vmatprep.subr.bf16.mxu0 0
    %1292 = vmatpush1.bf16.msra.mxu0 0
    %1293 = vmatprep.subr.bf16.mxu0 0
    %1294 = vmatpush1.bf16.msra.mxu0 0
    %1295 = vmatprep.subr.bf16.mxu0 0
    %1296 = vmatpush1.bf16.msra.mxu0 0
    %1297 = vmatprep.subr.bf16.mxu0 0
    %1298 = vmatpush1.bf16.msra.mxu0 0
    %1299 = vmatprep.subr.bf16.mxu0 0
    %1300 = vmatpush1.bf16.msra.mxu0 0
    %1301 = vmatprep.subr.bf16.mxu0 0
    %1302 = vmatpush1.bf16.msra.mxu0 0
    %1303 = vmatprep.subr.bf16.mxu0 0
    %1304 = vmatpush1.bf16.msra.mxu0 0
    %1305 = vmatprep.subr.bf16.mxu0 0
    %1306 = vmatpush1.bf16.msra.mxu0 0
    %1307 = vmatprep.subr.bf16.mxu0 0
    %1308 = vmatpush1.bf16.msra.mxu0 0
    %1309 = vmatprep.subr.bf16.mxu0 0
    %1310 = vmatpush1.bf16.msra.mxu0 0
    %1311 = vmatprep.mubr.bf16.mxu0 0
    %1312 = vmatmul.mubr.bf16.gmra.mrb[0].mxu0 %v1277
    %v1313 = vpop.f32.mrb[0].mxu0
    %v1314 = vadd.f32 0.0, %v1313
    %v1315 = vpop.f32.mrb[0].mxu0
    %v1316 = vpop.f32.mrb[0].mxu0
    %v1317 = vpop.f32.mrb[0].mxu0
    %1318 = vdwg.mxu0
    %v1320 = vsel %vm417, %v1161, 0
    %1322 = vmatprep.subr.bf16.mxu0 0
    %1323 = vmatpush1.bf16.msra.mxu0 %v692
    %1324 = vmatprep.subr.bf16.mxu0 0
    %1325 = vmatpush1.bf16.msra.mxu0 0
    %1326 = vmatprep.subr.bf16.mxu0 0
    %1327 = vmatpush1.bf16.msra.mxu0 0
    %1328 = vmatprep.subr.bf16.mxu0 0
    %1329 = vmatpush1.bf16.msra.mxu0 0
    %1330 = vmatprep.subr.bf16.mxu0 0
    %1331 = vmatpush1.bf16.msra.mxu0 0
    %1332 = vmatprep.subr.bf16.mxu0 0
    %1333 = vmatpush1.bf16.msra.mxu0 0
    %1334 = vmatprep.subr.bf16.mxu0 0
    %1335 = vmatpush1.bf16.msra.mxu0 0
    %1336 = vmatprep.subr.bf16.mxu0 0
    %1337 = vmatpush1.bf16.msra.mxu0 0
    %1338 = vmatprep.subr.bf16.mxu0 0
    %1339 = vmatpush1.bf16.msra.mxu0 0
    %1340 = vmatprep.subr.bf16.mxu0 0
    %1341 = vmatpush1.bf16.msra.mxu0 0
    %1342 = vmatprep.subr.bf16.mxu0 0
    %1343 = vmatpush1.bf16.msra.mxu0 0
    %1344 = vmatprep.subr.bf16.mxu0 0
    %1345 = vmatpush1.bf16.msra.mxu0 0
    %1346 = vmatprep.subr.bf16.mxu0 0
    %1347 = vmatpush1.bf16.msra.mxu0 0
    %1348 = vmatprep.subr.bf16.mxu0 0
    %1349 = vmatpush1.bf16.msra.mxu0 0
    %1350 = vmatprep.subr.bf16.mxu0 0
    %1351 = vmatpush1.bf16.msra.mxu0 0
    %1352 = vmatprep.subr.bf16.mxu0 0
    %1353 = vmatpush1.bf16.msra.mxu0 0
    %1354 = vmatprep.mubr.bf16.mxu0 0
    %1355 = vmatmul.mubr.bf16.gmra.mrb[0].mxu0 %v1320
    %v1356 = vpop.f32.mrb[0].mxu0
    %v1357 = vadd.f32 %v1314, %v1356
    %v1358 = vpop.f32.mrb[0].mxu0
    %v1359 = vpop.f32.mrb[0].mxu0
    %v1360 = vpop.f32.mrb[0].mxu0
    %1361 = vdwg.mxu0
    %1362 = vrot.lane.b32.xlu0 %v1054, 112
    %v1363 = vpop.permute.xlu0 %1362
    %1364 = vrot.lane.b32.xlu0 %v1055, 112
    %v1365 = vpop.permute.xlu0 %1364
    %v1367 = vsel %vm417, %v1363, 0
    %v1370 = vsel %vm417, %v1365, 0
    %1372 = vmatprep.subr.bf16.mxu0 0
    %1373 = vmatpush1.bf16.xpose.msra.mxu0 %v1370
    %1374 = vmatprep.subr.bf16.mxu0 0
    %1375 = vmatpush1.bf16.xpose.msra.mxu0 0
    %1376 = vmatprep.subr.bf16.mxu0 0
    %1377 = vmatpush1.bf16.xpose.msra.mxu0 0
    %1378 = vmatprep.subr.bf16.mxu0 0
    %1379 = vmatpush1.bf16.xpose.msra.mxu0 0
    %1380 = vmatprep.subr.bf16.mxu0 0
    %1381 = vmatpush1.bf16.xpose.msra.mxu0 0
    %1382 = vmatprep.subr.bf16.mxu0 0
    %1383 = vmatpush1.bf16.xpose.msra.mxu0 0
    %1384 = vmatprep.subr.bf16.mxu0 0
    %1385 = vmatpush1.bf16.xpose.msra.mxu0 0
    %1386 = vmatprep.subr.bf16.mxu0 0
    %1387 = vmatpush1.bf16.xpose.msra.mxu0 0
    %1388 = vmatprep.subr.bf16.mxu0 0
    %1389 = vmatpush1.bf16.xpose.msra.mxu0 0
    %1390 = vmatprep.subr.bf16.mxu0 0
    %1391 = vmatpush1.bf16.xpose.msra.mxu0 0
    %1392 = vmatprep.subr.bf16.mxu0 0
    %1393 = vmatpush1.bf16.xpose.msra.mxu0 0
    %1394 = vmatprep.subr.bf16.mxu0 0
    %1395 = vmatpush1.bf16.xpose.msra.mxu0 0
    %1396 = vmatprep.subr.bf16.mxu0 0
    %1397 = vmatpush1.bf16.xpose.msra.mxu0 0
    %1398 = vmatprep.subr.bf16.mxu0 0
    %1399 = vmatpush1.bf16.xpose.msra.mxu0 0
    %1400 = vmatprep.subr.bf16.mxu0 0
    %1401 = vmatpush1.bf16.xpose.msra.mxu0 0
    %1402 = vmatprep.subr.bf16.mxu0 0
    %1403 = vmatpush1.bf16.xpose.msra.mxu0 0
    %1404 = vmatprep.mubr.bf16.mxu0 0
    %1405 = vmatmul.mubr.bf16.gmra.mrb[0].mxu0 %v1367
    %v1406 = vpop.f32.mrb[0].mxu0
    %v1407 = vadd.f32 %v414, %v1406
    %v1408 = vpop.f32.mrb[0].mxu0
    %v1409 = vpop.f32.mrb[0].mxu0
    %v1410 = vpop.f32.mrb[0].mxu0
    %1411 = vdwg.mxu0
    %v1412 = vsel %vm417, %v1407, -inf
    %1413 = vmax.xlane.f32.xlu0 %v1412
    %v1414 = vpop.xlane.xlu0 %1413
    %v1415 = vsub.f32 %v1407, %v1414
    %v1416 = vmul.f32 %v1415, 1.442695
    %v1417 = vpow.pop %v1416
    %v1418 = vsel %vm417, %v1417, 0.0
    %1419 = vadd.xlane.f32.xlu0 %v1418
    %v1420 = vpop.xlane.xlu0 %1419
    %v1421 = vpack.c.bf16 %v1417, %v1417
    %1422 = vrot.lane.b32.xlu0 %v1112, 112
    %v1423 = vpop.permute.xlu0 %1422
    %v1425 = vsel %vm417, %v1421, 0
    %v1428 = vsel %vm478, %v1423, 0
    %1430 = vmatprep.subr.bf16.mxu0 0
    %1431 = vmatpush1.bf16.msra.mxu0 %v1428
    %1432 = vmatprep.subr.bf16.mxu0 0
    %1433 = vmatpush1.bf16.msra.mxu0 0
    %1434 = vmatprep.subr.bf16.mxu0 0
    %1435 = vmatpush1.bf16.msra.mxu0 0
    %1436 = vmatprep.subr.bf16.mxu0 0
    %1437 = vmatpush1.bf16.msra.mxu0 0
    %1438 = vmatprep.subr.bf16.mxu0 0
    %1439 = vmatpush1.bf16.msra.mxu0 0
    %1440 = vmatprep.subr.bf16.mxu0 0
    %1441 = vmatpush1.bf16.msra.mxu0 0
    %1442 = vmatprep.subr.bf16.mxu0 0
    %1443 = vmatpush1.bf16.msra.mxu0 0
    %1444 = vmatprep.subr.bf16.mxu0 0
    %1445 = vmatpush1.bf16.msra.mxu0 0
    %1446 = vmatprep.subr.bf16.mxu0 0
    %1447 = vmatpush1.bf16.msra.mxu0 0
    %1448 = vmatprep.subr.bf16.mxu0 0
    %1449 = vmatpush1.bf16.msra.mxu0 0
    %1450 = vmatprep.subr.bf16.mxu0 0
    %1451 = vmatpush1.bf16.msra.mxu0 0
    %1452 = vmatprep.subr.bf16.mxu0 0
    %1453 = vmatpush1.bf16.msra.mxu0 0
    %1454 = vmatprep.subr.bf16.mxu0 0
    %1455 = vmatpush1.bf16.msra.mxu0 0
    %1456 = vmatprep.subr.bf16.mxu0 0
    %1457 = vmatpush1.bf16.msra.mxu0 0
    %1458 = vmatprep.subr.bf16.mxu0 0
    %1459 = vmatpush1.bf16.msra.mxu0 0
    %1460 = vmatprep.subr.bf16.mxu0 0
    %1461 = vmatpush1.bf16.msra.mxu0 0
    %1462 = vmatprep.mubr.bf16.mxu0 0
    %1463 = vmatmul.mubr.bf16.gmra.mrb[0].mxu0 %v1425
    %v1464 = vpop.f32.mrb[0].mxu0
    %v1465 = vadd.f32 0.0, %v1464
    %v1466 = vpop.f32.mrb[0].mxu0
    %v1467 = vpop.f32.mrb[0].mxu0
    %v1468 = vpop.f32.mrb[0].mxu0
    %1469 = vdwg.mxu0
    %v1470 = vrcp.pop %v1420
    %v1471 = vmul.f32 %v1465, %v1470
    %v1472 = vpack.c.bf16 %v1471, %v1471
    %v1474 = vsel %vm417, %v1472, 0
    %1476 = vmatprep.subr.bf16.mxu0 0
    %1477 = vmatpush1.bf16.msra.mxu0 %v851
    %1478 = vmatprep.subr.bf16.mxu0 0
    %1479 = vmatpush1.bf16.msra.mxu0 0
    %1480 = vmatprep.subr.bf16.mxu0 0
    %1481 = vmatpush1.bf16.msra.mxu0 0
    %1482 = vmatprep.subr.bf16.mxu0 0
    %1483 = vmatpush1.bf16.msra.mxu0 0
    %1484 = vmatprep.subr.bf16.mxu0 0
    %1485 = vmatpush1.bf16.msra.mxu0 0
    %1486 = vmatprep.subr.bf16.mxu0 0
    %1487 = vmatpush1.bf16.msra.mxu0 0
    %1488 = vmatprep.subr.bf16.mxu0 0
    %1489 = vmatpush1.bf16.msra.mxu0 0
    %1490 = vmatprep.subr.bf16.mxu0 0
    %1491 = vmatpush1.bf16.msra.mxu0 0
    %1492 = vmatprep.subr.bf16.mxu0 0
    %1493 = vmatpush1.bf16.msra.mxu0 0
    %1494 = vmatprep.subr.bf16.mxu0 0
    %1495 = vmatpush1.bf16.msra.mxu0 0
    %1496 = vmatprep.subr.bf16.mxu0 0
    %1497 = vmatpush1.bf16.msra.mxu0 0
    %1498 = vmatprep.subr.bf16.mxu0 0
    %1499 = vmatpush1.bf16.msra.mxu0 0
    %1500 = vmatprep.subr.bf16.mxu0 0
    %1501 = vmatpush1.bf16.msra.mxu0 0
    %1502 = vmatprep.subr.bf16.mxu0 0
    %1503 = vmatpush1.bf16.msra.mxu0 0
    %1504 = vmatprep.subr.bf16.mxu0 0
    %1505 = vmatpush1.bf16.msra.mxu0 0
    %1506 = vmatprep.subr.bf16.mxu0 0
    %1507 = vmatpush1.bf16.msra.mxu0 0
    %1508 = vmatprep.mubr.bf16.mxu0 0
    %1509 = vmatmul.mubr.bf16.gmra.mrb[0].mxu0 %v1474
    %v1510 = vpop.f32.mrb[0].mxu0
    %v1511 = vadd.f32 0.0, %v1510
    %v1512 = vpop.f32.mrb[0].mxu0
    %v1513 = vpop.f32.mrb[0].mxu0
    %v1514 = vpop.f32.mrb[0].mxu0
    %1515 = vdwg.mxu0
    %v1516 = vadd.f32 %v1357, %v1511
    %1517 = vrot.lane.b32.xlu0 %v1054, 104
    %v1518 = vpop.permute.xlu0 %1517
    %1519 = vrot.lane.b32.xlu0 %v1055, 104
    %v1520 = vpop.permute.xlu0 %1519
    %v1522 = vsel %vm417, %v1518, 0
    %v1525 = vsel %vm417, %v1520, 0
    %1527 = vmatprep.subr.bf16.mxu0 0
    %1528 = vmatpush1.bf16.xpose.msra.mxu0 %v1525
    %1529 = vmatprep.subr.bf16.mxu0 0
    %1530 = vmatpush1.bf16.xpose.msra.mxu0 0
    %1531 = vmatprep.subr.bf16.mxu0 0
    %1532 = vmatpush1.bf16.xpose.msra.mxu0 0
    %1533 = vmatprep.subr.bf16.mxu0 0
    %1534 = vmatpush1.bf16.xpose.msra.mxu0 0
    %1535 = vmatprep.subr.bf16.mxu0 0
    %1536 = vmatpush1.bf16.xpose.msra.mxu0 0
    %1537 = vmatprep.subr.bf16.mxu0 0
    %1538 = vmatpush1.bf16.xpose.msra.mxu0 0
    %1539 = vmatprep.subr.bf16.mxu0 0
    %1540 = vmatpush1.bf16.xpose.msra.mxu0 0
    %1541 = vmatprep.subr.bf16.mxu0 0
    %1542 = vmatpush1.bf16.xpose.msra.mxu0 0
    %1543 = vmatprep.subr.bf16.mxu0 0
    %1544 = vmatpush1.bf16.xpose.msra.mxu0 0
    %1545 = vmatprep.subr.bf16.mxu0 0
    %1546 = vmatpush1.bf16.xpose.msra.mxu0 0
    %1547 = vmatprep.subr.bf16.mxu0 0
    %1548 = vmatpush1.bf16.xpose.msra.mxu0 0
    %1549 = vmatprep.subr.bf16.mxu0 0
    %1550 = vmatpush1.bf16.xpose.msra.mxu0 0
    %1551 = vmatprep.subr.bf16.mxu0 0
    %1552 = vmatpush1.bf16.xpose.msra.mxu0 0
    %1553 = vmatprep.subr.bf16.mxu0 0
    %1554 = vmatpush1.bf16.xpose.msra.mxu0 0
    %1555 = vmatprep.subr.bf16.mxu0 0
    %1556 = vmatpush1.bf16.xpose.msra.mxu0 0
    %1557 = vmatprep.subr.bf16.mxu0 0
    %1558 = vmatpush1.bf16.xpose.msra.mxu0 0
    %1559 = vmatprep.mubr.bf16.mxu0 0
    %1560 = vmatmul.mubr.bf16.gmra.mrb[0].mxu0 %v1522
    %v1561 = vpop.f32.mrb[0].mxu0
    %v1562 = vadd.f32 %v414, %v1561
    %v1563 = vpop.f32.mrb[0].mxu0
    %v1564 = vpop.f32.mrb[0].mxu0
    %v1565 = vpop.f32.mrb[0].mxu0
    %1566 = vdwg.mxu0
    %v1567 = vsel %vm417, %v1562, -inf
    %1568 = vmax.xlane.f32.xlu0 %v1567
    %v1569 = vpop.xlane.xlu0 %1568
    %v1570 = vsub.f32 %v1562, %v1569
    %v1571 = vmul.f32 %v1570, 1.442695
    %v1572 = vpow.pop %v1571
    %v1573 = vsel %vm417, %v1572, 0.0
    %1574 = vadd.xlane.f32.xlu0 %v1573
    %v1575 = vpop.xlane.xlu0 %1574
    %v1576 = vpack.c.bf16 %v1572, %v1572
    %1577 = vrot.lane.b32.xlu0 %v1112, 104
    %v1578 = vpop.permute.xlu0 %1577
    %v1580 = vsel %vm417, %v1576, 0
    %v1583 = vsel %vm478, %v1578, 0
    %1585 = vmatprep.subr.bf16.mxu0 0
    %1586 = vmatpush1.bf16.msra.mxu0 %v1583
    %1587 = vmatprep.subr.bf16.mxu0 0
    %1588 = vmatpush1.bf16.msra.mxu0 0
    %1589 = vmatprep.subr.bf16.mxu0 0
    %1590 = vmatpush1.bf16.msra.mxu0 0
    %1591 = vmatprep.subr.bf16.mxu0 0
    %1592 = vmatpush1.bf16.msra.mxu0 0
    %1593 = vmatprep.subr.bf16.mxu0 0
    %1594 = vmatpush1.bf16.msra.mxu0 0
    %1595 = vmatprep.subr.bf16.mxu0 0
    %1596 = vmatpush1.bf16.msra.mxu0 0
    %1597 = vmatprep.subr.bf16.mxu0 0
    %1598 = vmatpush1.bf16.msra.mxu0 0
    %1599 = vmatprep.subr.bf16.mxu0 0
    %1600 = vmatpush1.bf16.msra.mxu0 0
    %1601 = vmatprep.subr.bf16.mxu0 0
    %1602 = vmatpush1.bf16.msra.mxu0 0
    %1603 = vmatprep.subr.bf16.mxu0 0
    %1604 = vmatpush1.bf16.msra.mxu0 0
    %1605 = vmatprep.subr.bf16.mxu0 0
    %1606 = vmatpush1.bf16.msra.mxu0 0
    %1607 = vmatprep.subr.bf16.mxu0 0
    %1608 = vmatpush1.bf16.msra.mxu0 0
    %1609 = vmatprep.subr.bf16.mxu0 0
    %1610 = vmatpush1.bf16.msra.mxu0 0
    %1611 = vmatprep.subr.bf16.mxu0 0
    %1612 = vmatpush1.bf16.msra.mxu0 0
    %1613 = vmatprep.subr.bf16.mxu0 0
    %1614 = vmatpush1.bf16.msra.mxu0 0
    %1615 = vmatprep.subr.bf16.mxu0 0
    %1616 = vmatpush1.bf16.msra.mxu0 0
    %1617 = vmatprep.mubr.bf16.mxu0 0
    %1618 = vmatmul.mubr.bf16.gmra.mrb[0].mxu0 %v1580
    %v1619 = vpop.f32.mrb[0].mxu0
    %v1620 = vadd.f32 0.0, %v1619
    %v1621 = vpop.f32.mrb[0].mxu0
    %v1622 = vpop.f32.mrb[0].mxu0
    %v1623 = vpop.f32.mrb[0].mxu0
    %1624 = vdwg.mxu0
    %v1625 = vrcp.pop %v1575
    %v1626 = vmul.f32 %v1620, %v1625
    %v1627 = vpack.c.bf16 %v1626, %v1626
    %v1629 = vsel %vm417, %v1627, 0
    %1631 = vmatprep.subr.bf16.mxu0 0
    %1632 = vmatpush1.bf16.msra.mxu0 %v1011
    %1633 = vmatprep.subr.bf16.mxu0 0
    %1634 = vmatpush1.bf16.msra.mxu0 0
    %1635 = vmatprep.subr.bf16.mxu0 0
    %1636 = vmatpush1.bf16.msra.mxu0 0
    %1637 = vmatprep.subr.bf16.mxu0 0
    %1638 = vmatpush1.bf16.msra.mxu0 0
    %1639 = vmatprep.subr.bf16.mxu0 0
    %1640 = vmatpush1.bf16.msra.mxu0 0
    %1641 = vmatprep.subr.bf16.mxu0 0
    %1642 = vmatpush1.bf16.msra.mxu0 0
    %1643 = vmatprep.subr.bf16.mxu0 0
    %1644 = vmatpush1.bf16.msra.mxu0 0
    %1645 = vmatprep.subr.bf16.mxu0 0
    %1646 = vmatpush1.bf16.msra.mxu0 0
    %1647 = vmatprep.subr.bf16.mxu0 0
    %1648 = vmatpush1.bf16.msra.mxu0 0
    %1649 = vmatprep.subr.bf16.mxu0 0
    %1650 = vmatpush1.bf16.msra.mxu0 0
    %1651 = vmatprep.subr.bf16.mxu0 0
    %1652 = vmatpush1.bf16.msra.mxu0 0
    %1653 = vmatprep.subr.bf16.mxu0 0
    %1654 = vmatpush1.bf16.msra.mxu0 0
    %1655 = vmatprep.subr.bf16.mxu0 0
    %1656 = vmatpush1.bf16.msra.mxu0 0
    %1657 = vmatprep.subr.bf16.mxu0 0
    %1658 = vmatpush1.bf16.msra.mxu0 0
    %1659 = vmatprep.subr.bf16.mxu0 0
    %1660 = vmatpush1.bf16.msra.mxu0 0
    %1661 = vmatprep.subr.bf16.mxu0 0
    %1662 = vmatpush1.bf16.msra.mxu0 0
    %1663 = vmatprep.mubr.bf16.mxu0 0
    %1664 = vmatmul.mubr.bf16.gmra.mrb[0].mxu0 %v1629
    %v1665 = vpop.f32.mrb[0].mxu0
    %v1666 = vadd.f32 0.0, %v1665
    %v1667 = vpop.f32.mrb[0].mxu0
    %v1668 = vpop.f32.mrb[0].mxu0
    %v1669 = vpop.f32.mrb[0].mxu0
    %1670 = vdwg.mxu0
    %v1671 = vadd.f32 %v1516, %v1666
    %v1672 = vld [vmem:[#allocation10 + $0x3] sm:$0x1]
    %v1673 = vlaneseq
    %v1674 = vshrl.u32 %v1673, 7
    %v1675 = vsub.s32 0, %v1674
    %v1676 = vrot.slane %v1672, %v1675
    %v1677 = vadd.f32 %v1053, %v1676
    %v1678 = vadd.f32 %v1671, %v1676
    %v1679 = vadd.f32 %v149, %v1677
    %v1680 = vadd.f32 %v150, %v1678
    %v1681 = vld [vmem:[#allocation11 + $0x1] sm:$0x1]
    %v1682 = vld [vmem:[#allocation13 + $0x1] sm:$0x1]
    %v1683 = vsel %vm157, %v1679, 0.0
    %1684 = vadd.xlane.f32.xlu0 %v1683
    %v1685 = vpop.xlane.xlu0 %1684
    %v1686 = vsel %vm157, %v1680, 0.0
    %1687 = vadd.xlane.f32.xlu0 %v1686
    %v1688 = vpop.xlane.xlu0 %1687
    %v1689 = vmul.f32 %v1685, %v164
    %v1690 = vmul.f32 %v1688, %v164
    %v1691 = vsub.f32 %v1679, %v1689
    %v1692 = vsub.f32 %v1680, %v1690
    %v1693 = vmul.f32 %v1691, %v1691
    %v1694 = vmul.f32 %v1692, %v1692
    %v1695 = vsel %vm157, %v1693, 0.0
    %1696 = vadd.xlane.f32.xlu0 %v1695
    %v1697 = vpop.xlane.xlu0 %1696
    %v1698 = vsel %vm157, %v1694, 0.0
    %1699 = vadd.xlane.f32.xlu0 %v1698
    %v1700 = vpop.xlane.xlu0 %1699
    %v1701 = vmul.f32 %v1697, 0.032258064
    %v1702 = vmul.f32 %v1700, 0.032258064
    %v1703 = vrsqrt.pop %v1701
    %v1704 = vmul.f32 %v1701, %v1703
    %vm1705 = vcmp.eq.f32.partialorder %v1701, inf
    %v1706 = vsel %vm1705, %v1701, %v1704
    %vm1707 = vcmp.eq.f32.partialorder %v1701, 0.0
    %v1708 = vand.u32 %v1701, 2147483648
    %v1709 = vsel %vm1707, %v1708, %v1706
    %v1710 = vrsqrt.pop %v1702
    %v1711 = vmul.f32 %v1702, %v1710
    %vm1712 = vcmp.eq.f32.partialorder %v1702, inf
    %v1713 = vsel %vm1712, %v1702, %v1711
    %vm1714 = vcmp.eq.f32.partialorder %v1702, 0.0
    %v1715 = vand.u32 %v1702, 2147483648
    %v1716 = vsel %vm1714, %v1715, %v1713
    %v1717 = vlaneseq
    %v1718 = vshrl.u32 %v1717, 7
    %v1719 = vsub.s32 0, %v1718
    %v1720 = vrot.slane %v1681, %v1719
    %v1721 = vmul.f32 %v1720, %v1691
    %v1722 = vmul.f32 %v1720, %v1692
    %v1723 = vadd.f32 %v1709, 1e-06
    %v1724 = vadd.f32 %v1716, 1e-06
    %v1725 = vrcp.pop %v1723
    %v1726 = vmul.f32 %v1721, %v1725
    %v1727 = vrcp.pop %v1724
    %v1728 = vmul.f32 %v1722, %v1727
    %v1729 = vlaneseq
    %v1730 = vshrl.u32 %v1729, 7
    %v1731 = vsub.s32 0, %v1730
    %v1732 = vrot.slane %v1682, %v1731
    %v1733 = vadd.f32 %v1726, %v1732
    %v1734 = vadd.f32 %v1728, %v1732
    %s1735 = scalar_lea.vmem [#allocation8], 48
    %v1736 = vld [vmem:[%s1735] sm:$0xf]
    %v1737 = vld [vmem:[%s1735 + $0x4] sm:$0xf]
    %v1738 = vld [vmem:[%s1735 + $0x8] sm:$0xf]
    %v1739 = vld [vmem:[%s1735 + $0xc] sm:$0xf]
    %v1740 = vpack.c.bf16 %v1734, %v1733
    %v1741 = vld [vmem:[#allocation10 + $0x4] sm:$0x1]
    %v1742 = vlaneseq
    %v1743 = vshrl.u32 %v1742, 7
    %v1744 = vsub.s32 0, %v1743
    %v1745 = vrot.slane %v1741, %v1744
    %v1750 = vunpack.c.l.b16 %v1736
    %v1751 = vunpack.c.l.b16 %v1737
    %v1752 = vunpack.c.l.b16 %v1738
    %v1753 = vunpack.c.l.b16 %v1739
    %v1754 = vpack.c.b16 %v1751, %v1750
    %v1755 = vpack.c.b16 %v1753, %v1752
    %v1759 = vsel %vm157, %v1740, 0
    %1761 = vmatprep.subr.bf16.mxu0 0
    %1762 = vmatpush1.bf16.msra.mxu0 %v1754
    %1763 = vmatprep.subr.bf16.mxu0 0
    %1764 = vmatpush1.bf16.msra.mxu0 %v1755
    %1765 = vmatprep.subr.bf16.mxu0 0
    %1766 = vmatpush1.bf16.msra.mxu0 0
    %1767 = vmatprep.subr.bf16.mxu0 0
    %1768 = vmatpush1.bf16.msra.mxu0 0
    %1769 = vmatprep.subr.bf16.mxu0 0
    %1770 = vmatpush1.bf16.msra.mxu0 0
    %1771 = vmatprep.subr.bf16.mxu0 0
    %1772 = vmatpush1.bf16.msra.mxu0 0
    %1773 = vmatprep.subr.bf16.mxu0 0
    %1774 = vmatpush1.bf16.msra.mxu0 0
    %1775 = vmatprep.subr.bf16.mxu0 0
    %1776 = vmatpush1.bf16.msra.mxu0 0
    %1777 = vmatprep.subr.bf16.mxu0 0
    %1778 = vmatpush1.bf16.msra.mxu0 0
    %1779 = vmatprep.subr.bf16.mxu0 0
    %1780 = vmatpush1.bf16.msra.mxu0 0
    %1781 = vmatprep.subr.bf16.mxu0 0
    %1782 = vmatpush1.bf16.msra.mxu0 0
    %1783 = vmatprep.subr.bf16.mxu0 0
    %1784 = vmatpush1.bf16.msra.mxu0 0
    %1785 = vmatprep.subr.bf16.mxu0 0
    %1786 = vmatpush1.bf16.msra.mxu0 0
    %1787 = vmatprep.subr.bf16.mxu0 0
    %1788 = vmatpush1.bf16.msra.mxu0 0
    %1789 = vmatprep.subr.bf16.mxu0 0
    %1790 = vmatpush1.bf16.msra.mxu0 0
    %1791 = vmatprep.subr.bf16.mxu0 0
    %1792 = vmatpush1.bf16.msra.mxu0 0
    %1793 = vmatprep.mubr.bf16.mxu0 0
    %1794 = vmatmul.mubr.bf16.gmra.mrb[0].mxu0 %v1759
    %v1795 = vpop.f32.mrb[0].mxu0
    %v1796 = vadd.f32 %v1745, %v1795
    %v1797 = vpop.f32.mrb[0].mxu0
    %v1798 = vpop.f32.mrb[0].mxu0
    %v1799 = vadd.f32 %v1745, %v1798
    %v1800 = vpop.f32.mrb[0].mxu0
    %1801 = vdwg.mxu0
    %v1802 = vmul.f32 %v1796, 0.35355338
    %v1803 = vmul.f32 %v1799, 0.35355338
    %s1804 = scalar_lea.vmem [#allocation8], 64
    %v1805 = vld [vmem:[%s1804] sm:$0xf]
    %v1806 = vld [vmem:[%s1804 + $0x4] sm:$0xf]
    %v1807 = vld [vmem:[%s1804 + $0x8] sm:$0xf]
    %v1808 = vld [vmem:[%s1804 + $0xc] sm:$0xf]
    %v1809 = vpack.c.bf16 %v152, %v151
    %v1810 = vpack.c.bf16 %v154, %v153
    %v1811 = vld [vmem:[#allocation10 + $0x5] sm:$0x1]
    %v1812 = vlaneseq
    %v1813 = vshrl.u32 %v1812, 7
    %v1814 = vsub.s32 0, %v1813
    %v1815 = vrot.slane %v1811, %v1814
    %v1820 = vunpack.c.l.b16 %v1805
    %v1821 = vunpack.c.l.b16 %v1806
    %v1822 = vunpack.c.l.b16 %v1807
    %v1823 = vunpack.c.l.b16 %v1808
    %v1824 = vpack.c.b16 %v1821, %v1820
    %v1825 = vpack.c.b16 %v1823, %v1822
    %v1829 = vsel %vm157, %v1809, 0
    %v1832 = vsel %vm157, %v1810, 0
    %1834 = vmatprep.subr.bf16.mxu0 0
    %1835 = vmatpush1.bf16.msra.mxu0 %v1824
    %1836 = vmatprep.subr.bf16.mxu0 0
    %1837 = vmatpush1.bf16.msra.mxu0 %v1825
    %1838 = vmatprep.subr.bf16.mxu0 0
    %1839 = vmatpush1.bf16.msra.mxu0 0
    %1840 = vmatprep.subr.bf16.mxu0 0
    %1841 = vmatpush1.bf16.msra.mxu0 0
    %1842 = vmatprep.subr.bf16.mxu0 0
    %1843 = vmatpush1.bf16.msra.mxu0 0
    %1844 = vmatprep.subr.bf16.mxu0 0
    %1845 = vmatpush1.bf16.msra.mxu0 0
    %1846 = vmatprep.subr.bf16.mxu0 0
    %1847 = vmatpush1.bf16.msra.mxu0 0
    %1848 = vmatprep.subr.bf16.mxu0 0
    %1849 = vmatpush1.bf16.msra.mxu0 0
    %1850 = vmatprep.subr.bf16.mxu0 0
    %1851 = vmatpush1.bf16.msra.mxu0 0
    %1852 = vmatprep.subr.bf16.mxu0 0
    %1853 = vmatpush1.bf16.msra.mxu0 0
    %1854 = vmatprep.subr.bf16.mxu0 0
    %1855 = vmatpush1.bf16.msra.mxu0 0
    %1856 = vmatprep.subr.bf16.mxu0 0
    %1857 = vmatpush1.bf16.msra.mxu0 0
    %1858 = vmatprep.subr.bf16.mxu0 0
    %1859 = vmatpush1.bf16.msra.mxu0 0
    %1860 = vmatprep.subr.bf16.mxu0 0
    %1861 = vmatpush1.bf16.msra.mxu0 0
    %1862 = vmatprep.subr.bf16.mxu0 0
    %1863 = vmatpush1.bf16.msra.mxu0 0
    %1864 = vmatprep.subr.bf16.mxu0 0
    %1865 = vmatpush1.bf16.msra.mxu0 0
    %1866 = vmatprep.mubr.bf16.mxu0 0
    %1867 = vmatmul.mubr.bf16.gmra.mrb[0].mxu0 %v1829
    %v1868 = vpop.f32.mrb[0].mxu0
    %v1869 = vadd.f32 %v1815, %v1868
    %v1870 = vpop.f32.mrb[0].mxu0
    %v1871 = vpop.f32.mrb[0].mxu0
    %v1872 = vadd.f32 %v1815, %v1871
    %v1873 = vpop.f32.mrb[0].mxu0
    %1874 = vmatprep.mubr.bf16.mxu0 0
    %1875 = vmatmul.mubr.bf16.gmra.mrb[0].mxu0 %v1832
    %v1876 = vpop.f32.mrb[0].mxu0
    %v1877 = vadd.f32 %v1815, %v1876
    %v1878 = vpop.f32.mrb[0].mxu0
    %v1879 = vpop.f32.mrb[0].mxu0
    %v1880 = vadd.f32 %v1815, %v1879
    %v1881 = vpop.f32.mrb[0].mxu0
    %1882 = vdwg.mxu0
    %s1883 = scalar_lea.vmem [#allocation8], 80
    %v1884 = vld [vmem:[%s1883] sm:$0xf]
    %v1885 = vld [vmem:[%s1883 + $0x4] sm:$0xf]
    %v1886 = vld [vmem:[%s1883 + $0x8] sm:$0xf]
    %v1887 = vld [vmem:[%s1883 + $0xc] sm:$0xf]
    %v1888 = vld [vmem:[#allocation10 + $0x6] sm:$0x1]
    %v1889 = vlaneseq
    %v1890 = vshrl.u32 %v1889, 7
    %v1891 = vsub.s32 0, %v1890
    %v1892 = vrot.slane %v1888, %v1891
    %v1897 = vunpack.c.l.b16 %v1884
    %v1898 = vunpack.c.l.b16 %v1885
    %v1899 = vunpack.c.l.b16 %v1886
    %v1900 = vunpack.c.l.b16 %v1887
    %v1901 = vpack.c.b16 %v1898, %v1897
    %v1902 = vpack.c.b16 %v1900, %v1899
    %1905 = vmatprep.subr.bf16.mxu0 0
    %1906 = vmatpush1.bf16.msra.mxu0 %v1901
    %1907 = vmatprep.subr.bf16.mxu0 0
    %1908 = vmatpush1.bf16.msra.mxu0 %v1902
    %1909 = vmatprep.subr.bf16.mxu0 0
    %1910 = vmatpush1.bf16.msra.mxu0 0
    %1911 = vmatprep.subr.bf16.mxu0 0
    %1912 = vmatpush1.bf16.msra.mxu0 0
    %1913 = vmatprep.subr.bf16.mxu0 0
    %1914 = vmatpush1.bf16.msra.mxu0 0
    %1915 = vmatprep.subr.bf16.mxu0 0
    %1916 = vmatpush1.bf16.msra.mxu0 0
    %1917 = vmatprep.subr.bf16.mxu0 0
    %1918 = vmatpush1.bf16.msra.mxu0 0
    %1919 = vmatprep.subr.bf16.mxu0 0
    %1920 = vmatpush1.bf16.msra.mxu0 0
    %1921 = vmatprep.subr.bf16.mxu0 0
    %1922 = vmatpush1.bf16.msra.mxu0 0
    %1923 = vmatprep.subr.bf16.mxu0 0
    %1924 = vmatpush1.bf16.msra.mxu0 0
    %1925 = vmatprep.subr.bf16.mxu0 0
    %1926 = vmatpush1.bf16.msra.mxu0 0
    %1927 = vmatprep.subr.bf16.mxu0 0
    %1928 = vmatpush1.bf16.msra.mxu0 0
    %1929 = vmatprep.subr.bf16.mxu0 0
    %1930 = vmatpush1.bf16.msra.mxu0 0
    %1931 = vmatprep.subr.bf16.mxu0 0
    %1932 = vmatpush1.bf16.msra.mxu0 0
    %1933 = vmatprep.subr.bf16.mxu0 0
    %1934 = vmatpush1.bf16.msra.mxu0 0
    %1935 = vmatprep.subr.bf16.mxu0 0
    %1936 = vmatpush1.bf16.msra.mxu0 0
    %1937 = vmatprep.mubr.bf16.mxu0 0
    %1938 = vmatmul.mubr.bf16.gmra.mrb[0].mxu0 %v1829
    %v1939 = vpop.f32.mrb[0].mxu0
    %v1940 = vadd.f32 %v1892, %v1939
    %v1941 = vpop.f32.mrb[0].mxu0
    %v1942 = vpop.f32.mrb[0].mxu0
    %v1943 = vadd.f32 %v1892, %v1942
    %v1944 = vpop.f32.mrb[0].mxu0
    %1945 = vmatprep.mubr.bf16.mxu0 0
    %1946 = vmatmul.mubr.bf16.gmra.mrb[0].mxu0 %v1832
    %v1947 = vpop.f32.mrb[0].mxu0
    %v1948 = vadd.f32 %v1892, %v1947
    %v1949 = vpop.f32.mrb[0].mxu0
    %v1950 = vpop.f32.mrb[0].mxu0
    %v1951 = vadd.f32 %v1892, %v1950
    %v1952 = vpop.f32.mrb[0].mxu0
    %1953 = vdwg.mxu0
    %v1954 = vld [vmem:[#allocation7] sm:$0x3]
    %v1955 = vld [vmem:[#allocation7 + $0x2] sm:$0x3]
    %v1956 = vunpack.c.0.s8 %v1954
    %v1957 = vunpack.c.0.s8 %v1955
    %v1958 = vcvt.s32.f32 %v1956
    %v1959 = vcvt.s32.f32 %v1957
    %v1960 = vsub.f32 %v1958, 1.0
    %v1961 = vsub.f32 %v1959, 1.0
    %v1962 = vmul.f32 %v1960, 1e+09
    %v1963 = vmul.f32 %v1961, 1e+09
    %v1964 = vpack.c.bf16 %v1802, %v1802
    %v1965 = vpack.c.bf16 %v1872, %v1869
    %v1967 = vsel %vm417, %v1964, 0
    %v1970 = vsel %vm417, %v1965, 0
    %1972 = vmatprep.subr.bf16.mxu0 0
    %1973 = vmatpush1.bf16.xpose.msra.mxu0 %v1970
    %1974 = vmatprep.subr.bf16.mxu0 0
    %1975 = vmatpush1.bf16.xpose.msra.mxu0 0
    %1976 = vmatprep.subr.bf16.mxu0 0
    %1977 = vmatpush1.bf16.xpose.msra.mxu0 0
    %1978 = vmatprep.subr.bf16.mxu0 0
    %1979 = vmatpush1.bf16.xpose.msra.mxu0 0
    %1980 = vmatprep.subr.bf16.mxu0 0
    %1981 = vmatpush1.bf16.xpose.msra.mxu0 0
    %1982 = vmatprep.subr.bf16.mxu0 0
    %1983 = vmatpush1.bf16.xpose.msra.mxu0 0
    %1984 = vmatprep.subr.bf16.mxu0 0
    %1985 = vmatpush1.bf16.xpose.msra.mxu0 0
    %1986 = vmatprep.subr.bf16.mxu0 0
    %1987 = vmatpush1.bf16.xpose.msra.mxu0 0
    %1988 = vmatprep.subr.bf16.mxu0 0
    %1989 = vmatpush1.bf16.xpose.msra.mxu0 0
    %1990 = vmatprep.subr.bf16.mxu0 0
    %1991 = vmatpush1.bf16.xpose.msra.mxu0 0
    %1992 = vmatprep.subr.bf16.mxu0 0
    %1993 = vmatpush1.bf16.xpose.msra.mxu0 0
    %1994 = vmatprep.subr.bf16.mxu0 0
    %1995 = vmatpush1.bf16.xpose.msra.mxu0 0
    %1996 = vmatprep.subr.bf16.mxu0 0
    %1997 = vmatpush1.bf16.xpose.msra.mxu0 0
    %1998 = vmatprep.subr.bf16.mxu0 0
    %1999 = vmatpush1.bf16.xpose.msra.mxu0 0
    %2000 = vmatprep.subr.bf16.mxu0 0
    %2001 = vmatpush1.bf16.xpose.msra.mxu0 0
    %2002 = vmatprep.subr.bf16.mxu0 0
    %2003 = vmatpush1.bf16.xpose.msra.mxu0 0
    %2004 = vmatprep.mubr.bf16.mxu0 0
    %2005 = vmatmul.mubr.bf16.gmra.mrb[0].mxu0 %v1967
    %v2006 = vpop.f32.mrb[0].mxu0
    %v2007 = vadd.f32 %v1962, %v2006
    %v2008 = vpop.f32.mrb[0].mxu0
    %v2009 = vpop.f32.mrb[0].mxu0
    %v2010 = vpop.f32.mrb[0].mxu0
    %2011 = vdwg.mxu0
    %vm2012 = vcmask 130048
    %v2013 = vsel %vm2012, %v2007, -inf
    %2014 = vmax.xlane.f32.xlu0 %v2013
    %v2015 = vpop.xlane.xlu0 %2014
    %v2016 = vsub.f32 %v2007, %v2015
    %v2017 = vmul.f32 %v2016, 1.442695
    %v2018 = vpow.pop %v2017
    %v2019 = vsel %vm2012, %v2018, 0.0
    %2020 = vadd.xlane.f32.xlu0 %v2019
    %v2021 = vpop.xlane.xlu0 %2020
    %v2022 = vpack.c.bf16 %v2018, %v2018
    %v2023 = vpack.c.bf16 %v1943, %v1940
    %v2025 = vsel %vm2012, %v2022, 0
    %2027 = vmatprep.subr.bf16.mxu0 0
    %2028 = vmatpush1.bf16.msra.mxu0 %v2023
    %2029 = vmatprep.subr.bf16.mxu0 0
    %2030 = vmatpush1.bf16.msra.mxu0 0
    %2031 = vmatprep.subr.bf16.mxu0 0
    %2032 = vmatpush1.bf16.msra.mxu0 0
    %2033 = vmatprep.subr.bf16.mxu0 0
    %2034 = vmatpush1.bf16.msra.mxu0 0
    %2035 = vmatprep.subr.bf16.mxu0 0
    %2036 = vmatpush1.bf16.msra.mxu0 0
    %2037 = vmatprep.subr.bf16.mxu0 0
    %2038 = vmatpush1.bf16.msra.mxu0 0
    %2039 = vmatprep.subr.bf16.mxu0 0
    %2040 = vmatpush1.bf16.msra.mxu0 0
    %2041 = vmatprep.subr.bf16.mxu0 0
    %2042 = vmatpush1.bf16.msra.mxu0 0
    %2043 = vmatprep.subr.bf16.mxu0 0
    %2044 = vmatpush1.bf16.msra.mxu0 0
    %2045 = vmatprep.subr.bf16.mxu0 0
    %2046 = vmatpush1.bf16.msra.mxu0 0
    %2047 = vmatprep.subr.bf16.mxu0 0
    %2048 = vmatpush1.bf16.msra.mxu0 0
    %2049 = vmatprep.subr.bf16.mxu0 0
    %2050 = vmatpush1.bf16.msra.mxu0 0
    %2051 = vmatprep.subr.bf16.mxu0 0
    %2052 = vmatpush1.bf16.msra.mxu0 0
    %2053 = vmatprep.subr.bf16.mxu0 0
    %2054 = vmatpush1.bf16.msra.mxu0 0
    %2055 = vmatprep.subr.bf16.mxu0 0
    %2056 = vmatpush1.bf16.msra.mxu0 0
    %2057 = vmatprep.subr.bf16.mxu0 0
    %2058 = vmatpush1.bf16.msra.mxu0 0
    %2059 = vmatprep.mubr.bf16.mxu0 0
    %2060 = vmatmul.mubr.bf16.gmra.mrb[0].mxu0 %v2025
    %v2061 = vpop.f32.mrb[0].mxu0
    %v2062 = vadd.f32 0.0, %v2061
    %v2063 = vpop.f32.mrb[0].mxu0
    %v2064 = vpop.f32.mrb[0].mxu0
    %v2065 = vpop.f32.mrb[0].mxu0
    %2066 = vdwg.mxu0
    %v2067 = vrcp.pop %v2021
    %v2068 = vmul.f32 %v2062, %v2067
    %s2069 = scalar_lea.vmem %s6, 16
    %v2070 = vld [vmem:[%s2069] sm:$0xf]
    %v2071 = vpack.c.bf16 %v2068, %v2068
    %2073 = vrot.lane.b32.xlu0 %v1964, 120
    %v2074 = vpop.permute.xlu0 %2073
    %2076 = vrot.lane.b32.xlu0 %v1965, 120
    %v2077 = vpop.permute.xlu0 %2076
    %v2079 = vsel %vm417, %v2074, 0
    %v2082 = vsel %vm417, %v2077, 0
    %2084 = vmatprep.subr.bf16.mxu0 0
    %2085 = vmatpush1.bf16.xpose.msra.mxu0 %v2082
    %2086 = vmatprep.subr.bf16.mxu0 0
    %2087 = vmatpush1.bf16.xpose.msra.mxu0 0
    %2088 = vmatprep.subr.bf16.mxu0 0
    %2089 = vmatpush1.bf16.xpose.msra.mxu0 0
    %2090 = vmatprep.subr.bf16.mxu0 0
    %2091 = vmatpush1.bf16.xpose.msra.mxu0 0
    %2092 = vmatprep.subr.bf16.mxu0 0
    %2093 = vmatpush1.bf16.xpose.msra.mxu0 0
    %2094 = vmatprep.subr.bf16.mxu0 0
    %2095 = vmatpush1.bf16.xpose.msra.mxu0 0
    %2096 = vmatprep.subr.bf16.mxu0 0
    %2097 = vmatpush1.bf16.xpose.msra.mxu0 0
    %2098 = vmatprep.subr.bf16.mxu0 0
    %2099 = vmatpush1.bf16.xpose.msra.mxu0 0
    %2100 = vmatprep.subr.bf16.mxu0 0
    %2101 = vmatpush1.bf16.xpose.msra.mxu0 0
    %2102 = vmatprep.subr.bf16.mxu0 0
    %2103 = vmatpush1.bf16.xpose.msra.mxu0 0
    %2104 = vmatprep.subr.bf16.mxu0 0
    %2105 = vmatpush1.bf16.xpose.msra.mxu0 0
    %2106 = vmatprep.subr.bf16.mxu0 0
    %2107 = vmatpush1.bf16.xpose.msra.mxu0 0
    %2108 = vmatprep.subr.bf16.mxu0 0
    %2109 = vmatpush1.bf16.xpose.msra.mxu0 0
    %2110 = vmatprep.subr.bf16.mxu0 0
    %2111 = vmatpush1.bf16.xpose.msra.mxu0 0
    %2112 = vmatprep.subr.bf16.mxu0 0
    %2113 = vmatpush1.bf16.xpose.msra.mxu0 0
    %2114 = vmatprep.subr.bf16.mxu0 0
    %2115 = vmatpush1.bf16.xpose.msra.mxu0 0
    %2116 = vmatprep.mubr.bf16.mxu0 0
    %2117 = vmatmul.mubr.bf16.gmra.mrb[0].mxu0 %v2079
    %v2118 = vpop.f32.mrb[0].mxu0
    %v2119 = vadd.f32 %v1962, %v2118
    %v2120 = vpop.f32.mrb[0].mxu0
    %v2121 = vpop.f32.mrb[0].mxu0
    %v2122 = vpop.f32.mrb[0].mxu0
    %2123 = vdwg.mxu0
    %v2124 = vsel %vm2012, %v2119, -inf
    %2125 = vmax.xlane.f32.xlu0 %v2124
    %v2126 = vpop.xlane.xlu0 %2125
    %v2127 = vsub.f32 %v2119, %v2126
    %v2128 = vmul.f32 %v2127, 1.442695
    %v2129 = vpow.pop %v2128
    %v2130 = vsel %vm2012, %v2129, 0.0
    %2131 = vadd.xlane.f32.xlu0 %v2130
    %v2132 = vpop.xlane.xlu0 %2131
    %v2133 = vpack.c.bf16 %v2129, %v2129
    %2135 = vrot.lane.b32.xlu0 %v2023, 120
    %v2136 = vpop.permute.xlu0 %2135
    %v2139 = vsel %vm2012, %v2133, 0
    %2141 = vmatprep.subr.bf16.mxu0 0
    %2142 = vmatpush1.bf16.msra.mxu0 %v2136
    %2143 = vmatprep.subr.bf16.mxu0 0
    %2144 = vmatpush1.bf16.msra.mxu0 0
    %2145 = vmatprep.subr.bf16.mxu0 0
    %2146 = vmatpush1.bf16.msra.mxu0 0
    %2147 = vmatprep.subr.bf16.mxu0 0
    %2148 = vmatpush1.bf16.msra.mxu0 0
    %2149 = vmatprep.subr.bf16.mxu0 0
    %2150 = vmatpush1.bf16.msra.mxu0 0
    %2151 = vmatprep.subr.bf16.mxu0 0
    %2152 = vmatpush1.bf16.msra.mxu0 0
    %2153 = vmatprep.subr.bf16.mxu0 0
    %2154 = vmatpush1.bf16.msra.mxu0 0
    %2155 = vmatprep.subr.bf16.mxu0 0
    %2156 = vmatpush1.bf16.msra.mxu0 0
    %2157 = vmatprep.subr.bf16.mxu0 0
    %2158 = vmatpush1.bf16.msra.mxu0 0
    %2159 = vmatprep.subr.bf16.mxu0 0
    %2160 = vmatpush1.bf16.msra.mxu0 0
    %2161 = vmatprep.subr.bf16.mxu0 0
    %2162 = vmatpush1.bf16.msra.mxu0 0
    %2163 = vmatprep.subr.bf16.mxu0 0
    %2164 = vmatpush1.bf16.msra.mxu0 0
    %2165 = vmatprep.subr.bf16.mxu0 0
    %2166 = vmatpush1.bf16.msra.mxu0 0
    %2167 = vmatprep.subr.bf16.mxu0 0
    %2168 = vmatpush1.bf16.msra.mxu0 0
    %2169 = vmatprep.subr.bf16.mxu0 0
    %2170 = vmatpush1.bf16.msra.mxu0 0
    %2171 = vmatprep.subr.bf16.mxu0 0
    %2172 = vmatpush1.bf16.msra.mxu0 0
    %2173 = vmatprep.mubr.bf16.mxu0 0
    %2174 = vmatmul.mubr.bf16.gmra.mrb[0].mxu0 %v2139
    %v2175 = vpop.f32.mrb[0].mxu0
    %v2176 = vadd.f32 0.0, %v2175
    %v2177 = vpop.f32.mrb[0].mxu0
    %v2178 = vpop.f32.mrb[0].mxu0
    %v2179 = vpop.f32.mrb[0].mxu0
    %2180 = vdwg.mxu0
    %v2181 = vrcp.pop %v2132
    %v2182 = vmul.f32 %v2176, %v2181
    %s2183 = scalar_lea.vmem %s6, 20
    %v2184 = vld [vmem:[%s2183] sm:$0xf]
    %v2185 = vpack.c.bf16 %v2182, %v2182
    %v2187 = vsel %vm417, %v2185, 0
    %v2190 = vsel %vm478, %v2184, 0
    %2192 = vmatprep.subr.bf16.mxu0 0
    %2193 = vmatpush1.bf16.msra.mxu0 %v2190
    %2194 = vmatprep.subr.bf16.mxu0 0
    %2195 = vmatpush1.bf16.msra.mxu0 0
    %2196 = vmatprep.subr.bf16.mxu0 0
    %2197 = vmatpush1.bf16.msra.mxu0 0
    %2198 = vmatprep.subr.bf16.mxu0 0
    %2199 = vmatpush1.bf16.msra.mxu0 0
    %2200 = vmatprep.subr.bf16.mxu0 0
    %2201 = vmatpush1.bf16.msra.mxu0 0
    %2202 = vmatprep.subr.bf16.mxu0 0
    %2203 = vmatpush1.bf16.msra.mxu0 0
    %2204 = vmatprep.subr.bf16.mxu0 0
    %2205 = vmatpush1.bf16.msra.mxu0 0
    %2206 = vmatprep.subr.bf16.mxu0 0
    %2207 = vmatpush1.bf16.msra.mxu0 0
    %2208 = vmatprep.subr.bf16.mxu0 0
    %2209 = vmatpush1.bf16.msra.mxu0 0
    %2210 = vmatprep.subr.bf16.mxu0 0
    %2211 = vmatpush1.bf16.msra.mxu0 0
    %2212 = vmatprep.subr.bf16.mxu0 0
    %2213 = vmatpush1.bf16.msra.mxu0 0
    %2214 = vmatprep.subr.bf16.mxu0 0
    %2215 = vmatpush1.bf16.msra.mxu0 0
    %2216 = vmatprep.subr.bf16.mxu0 0
    %2217 = vmatpush1.bf16.msra.mxu0 0
    %2218 = vmatprep.subr.bf16.mxu0 0
    %2219 = vmatpush1.bf16.msra.mxu0 0
    %2220 = vmatprep.subr.bf16.mxu0 0
    %2221 = vmatpush1.bf16.msra.mxu0 0
    %2222 = vmatprep.subr.bf16.mxu0 0
    %2223 = vmatpush1.bf16.msra.mxu0 0
    %2224 = vmatprep.mubr.bf16.mxu0 0
    %2225 = vmatmul.mubr.bf16.gmra.mrb[0].mxu0 %v2187
    %v2226 = vpop.f32.mrb[0].mxu0
    %v2227 = vadd.f32 0.0, %v2226
    %v2228 = vpop.f32.mrb[0].mxu0
    %v2229 = vpop.f32.mrb[0].mxu0
    %v2230 = vpop.f32.mrb[0].mxu0
    %2231 = vdwg.mxu0
    %v2233 = vsel %vm417, %v2071, 0
    %v2236 = vsel %vm478, %v2070, 0
    %2238 = vmatprep.subr.bf16.mxu0 0
    %2239 = vmatpush1.bf16.msra.mxu0 %v2236
    %2240 = vmatprep.subr.bf16.mxu0 0
    %2241 = vmatpush1.bf16.msra.mxu0 0
    %2242 = vmatprep.subr.bf16.mxu0 0
    %2243 = vmatpush1.bf16.msra.mxu0 0
    %2244 = vmatprep.subr.bf16.mxu0 0
    %2245 = vmatpush1.bf16.msra.mxu0 0
    %2246 = vmatprep.subr.bf16.mxu0 0
    %2247 = vmatpush1.bf16.msra.mxu0 0
    %2248 = vmatprep.subr.bf16.mxu0 0
    %2249 = vmatpush1.bf16.msra.mxu0 0
    %2250 = vmatprep.subr.bf16.mxu0 0
    %2251 = vmatpush1.bf16.msra.mxu0 0
    %2252 = vmatprep.subr.bf16.mxu0 0
    %2253 = vmatpush1.bf16.msra.mxu0 0
    %2254 = vmatprep.subr.bf16.mxu0 0
    %2255 = vmatpush1.bf16.msra.mxu0 0
    %2256 = vmatprep.subr.bf16.mxu0 0
    %2257 = vmatpush1.bf16.msra.mxu0 0
    %2258 = vmatprep.subr.bf16.mxu0 0
    %2259 = vmatpush1.bf16.msra.mxu0 0
    %2260 = vmatprep.subr.bf16.mxu0 0
    %2261 = vmatpush1.bf16.msra.mxu0 0
    %2262 = vmatprep.subr.bf16.mxu0 0
    %2263 = vmatpush1.bf16.msra.mxu0 0
    %2264 = vmatprep.subr.bf16.mxu0 0
    %2265 = vmatpush1.bf16.msra.mxu0 0
    %2266 = vmatprep.subr.bf16.mxu0 0
    %2267 = vmatpush1.bf16.msra.mxu0 0
    %2268 = vmatprep.subr.bf16.mxu0 0
    %2269 = vmatpush1.bf16.msra.mxu0 0
    %2270 = vmatprep.mubr.bf16.mxu0 0
    %2271 = vmatmul.mubr.bf16.gmra.mrb[0].mxu0 %v2233
    %v2272 = vpop.f32.mrb[0].mxu0
    %v2273 = vadd.f32 %v2227, %v2272
    %v2274 = vpop.f32.mrb[0].mxu0
    %v2275 = vpop.f32.mrb[0].mxu0
    %v2276 = vpop.f32.mrb[0].mxu0
    %2277 = vdwg.mxu0
    %2278 = vrot.lane.b32.xlu0 %v1964, 112
    %v2279 = vpop.permute.xlu0 %2278
    %2280 = vrot.lane.b32.xlu0 %v1965, 112
    %v2281 = vpop.permute.xlu0 %2280
    %v2283 = vsel %vm417, %v2279, 0
    %v2286 = vsel %vm417, %v2281, 0
    %2288 = vmatprep.subr.bf16.mxu0 0
    %2289 = vmatpush1.bf16.xpose.msra.mxu0 %v2286
    %2290 = vmatprep.subr.bf16.mxu0 0
    %2291 = vmatpush1.bf16.xpose.msra.mxu0 0
    %2292 = vmatprep.subr.bf16.mxu0 0
    %2293 = vmatpush1.bf16.xpose.msra.mxu0 0
    %2294 = vmatprep.subr.bf16.mxu0 0
    %2295 = vmatpush1.bf16.xpose.msra.mxu0 0
    %2296 = vmatprep.subr.bf16.mxu0 0
    %2297 = vmatpush1.bf16.xpose.msra.mxu0 0
    %2298 = vmatprep.subr.bf16.mxu0 0
    %2299 = vmatpush1.bf16.xpose.msra.mxu0 0
    %2300 = vmatprep.subr.bf16.mxu0 0
    %2301 = vmatpush1.bf16.xpose.msra.mxu0 0
    %2302 = vmatprep.subr.bf16.mxu0 0
    %2303 = vmatpush1.bf16.xpose.msra.mxu0 0
    %2304 = vmatprep.subr.bf16.mxu0 0
    %2305 = vmatpush1.bf16.xpose.msra.mxu0 0
    %2306 = vmatprep.subr.bf16.mxu0 0
    %2307 = vmatpush1.bf16.xpose.msra.mxu0 0
    %2308 = vmatprep.subr.bf16.mxu0 0
    %2309 = vmatpush1.bf16.xpose.msra.mxu0 0
    %2310 = vmatprep.subr.bf16.mxu0 0
    %2311 = vmatpush1.bf16.xpose.msra.mxu0 0
    %2312 = vmatprep.subr.bf16.mxu0 0
    %2313 = vmatpush1.bf16.xpose.msra.mxu0 0
    %2314 = vmatprep.subr.bf16.mxu0 0
    %2315 = vmatpush1.bf16.xpose.msra.mxu0 0
    %2316 = vmatprep.subr.bf16.mxu0 0
    %2317 = vmatpush1.bf16.xpose.msra.mxu0 0
    %2318 = vmatprep.subr.bf16.mxu0 0
    %2319 = vmatpush1.bf16.xpose.msra.mxu0 0
    %2320 = vmatprep.mubr.bf16.mxu0 0
    %2321 = vmatmul.mubr.bf16.gmra.mrb[0].mxu0 %v2283
    %v2322 = vpop.f32.mrb[0].mxu0
    %v2323 = vadd.f32 %v1962, %v2322
    %v2324 = vpop.f32.mrb[0].mxu0
    %v2325 = vpop.f32.mrb[0].mxu0
    %v2326 = vpop.f32.mrb[0].mxu0
    %2327 = vdwg.mxu0
    %v2328 = vsel %vm2012, %v2323, -inf
    %2329 = vmax.xlane.f32.xlu0 %v2328
    %v2330 = vpop.xlane.xlu0 %2329
    %v2331 = vsub.f32 %v2323, %v2330
    %v2332 = vmul.f32 %v2331, 1.442695
    %v2333 = vpow.pop %v2332
    %v2334 = vsel %vm2012, %v2333, 0.0
    %2335 = vadd.xlane.f32.xlu0 %v2334
    %v2336 = vpop.xlane.xlu0 %2335
    %v2337 = vpack.c.bf16 %v2333, %v2333
    %2338 = vrot.lane.b32.xlu0 %v2023, 112
    %v2339 = vpop.permute.xlu0 %2338
    %v2342 = vsel %vm2012, %v2337, 0
    %2344 = vmatprep.subr.bf16.mxu0 0
    %2345 = vmatpush1.bf16.msra.mxu0 %v2339
    %2346 = vmatprep.subr.bf16.mxu0 0
    %2347 = vmatpush1.bf16.msra.mxu0 0
    %2348 = vmatprep.subr.bf16.mxu0 0
    %2349 = vmatpush1.bf16.msra.mxu0 0
    %2350 = vmatprep.subr.bf16.mxu0 0
    %2351 = vmatpush1.bf16.msra.mxu0 0
    %2352 = vmatprep.subr.bf16.mxu0 0
    %2353 = vmatpush1.bf16.msra.mxu0 0
    %2354 = vmatprep.subr.bf16.mxu0 0
    %2355 = vmatpush1.bf16.msra.mxu0 0
    %2356 = vmatprep.subr.bf16.mxu0 0
    %2357 = vmatpush1.bf16.msra.mxu0 0
    %2358 = vmatprep.subr.bf16.mxu0 0
    %2359 = vmatpush1.bf16.msra.mxu0 0
    %2360 = vmatprep.subr.bf16.mxu0 0
    %2361 = vmatpush1.bf16.msra.mxu0 0
    %2362 = vmatprep.subr.bf16.mxu0 0
    %2363 = vmatpush1.bf16.msra.mxu0 0
    %2364 = vmatprep.subr.bf16.mxu0 0
    %2365 = vmatpush1.bf16.msra.mxu0 0
    %2366 = vmatprep.subr.bf16.mxu0 0
    %2367 = vmatpush1.bf16.msra.mxu0 0
    %2368 = vmatprep.subr.bf16.mxu0 0
    %2369 = vmatpush1.bf16.msra.mxu0 0
    %2370 = vmatprep.subr.bf16.mxu0 0
    %2371 = vmatpush1.bf16.msra.mxu0 0
    %2372 = vmatprep.subr.bf16.mxu0 0
    %2373 = vmatpush1.bf16.msra.mxu0 0
    %2374 = vmatprep.subr.bf16.mxu0 0
    %2375 = vmatpush1.bf16.msra.mxu0 0
    %2376 = vmatprep.mubr.bf16.mxu0 0
    %2377 = vmatmul.mubr.bf16.gmra.mrb[0].mxu0 %v2342
    %v2378 = vpop.f32.mrb[0].mxu0
    %v2379 = vadd.f32 0.0, %v2378
    %v2380 = vpop.f32.mrb[0].mxu0
    %v2381 = vpop.f32.mrb[0].mxu0
    %v2382 = vpop.f32.mrb[0].mxu0
    %2383 = vdwg.mxu0
    %v2384 = vrcp.pop %v2336
    %v2385 = vmul.f32 %v2379, %v2384
    %s2386 = scalar_lea.vmem %s6, 24
    %v2387 = vld [vmem:[%s2386] sm:$0xf]
    %v2388 = vpack.c.bf16 %v2385, %v2385
    %v2390 = vsel %vm417, %v2388, 0
    %v2393 = vsel %vm478, %v2387, 0
    %2395 = vmatprep.subr.bf16.mxu0 0
    %2396 = vmatpush1.bf16.msra.mxu0 %v2393
    %2397 = vmatprep.subr.bf16.mxu0 0
    %2398 = vmatpush1.bf16.msra.mxu0 0
    %2399 = vmatprep.subr.bf16.mxu0 0
    %2400 = vmatpush1.bf16.msra.mxu0 0
    %2401 = vmatprep.subr.bf16.mxu0 0
    %2402 = vmatpush1.bf16.msra.mxu0 0
    %2403 = vmatprep.subr.bf16.mxu0 0
    %2404 = vmatpush1.bf16.msra.mxu0 0
    %2405 = vmatprep.subr.bf16.mxu0 0
    %2406 = vmatpush1.bf16.msra.mxu0 0
    %2407 = vmatprep.subr.bf16.mxu0 0
    %2408 = vmatpush1.bf16.msra.mxu0 0
    %2409 = vmatprep.subr.bf16.mxu0 0
    %2410 = vmatpush1.bf16.msra.mxu0 0
    %2411 = vmatprep.subr.bf16.mxu0 0
    %2412 = vmatpush1.bf16.msra.mxu0 0
    %2413 = vmatprep.subr.bf16.mxu0 0
    %2414 = vmatpush1.bf16.msra.mxu0 0
    %2415 = vmatprep.subr.bf16.mxu0 0
    %2416 = vmatpush1.bf16.msra.mxu0 0
    %2417 = vmatprep.subr.bf16.mxu0 0
    %2418 = vmatpush1.bf16.msra.mxu0 0
    %2419 = vmatprep.subr.bf16.mxu0 0
    %2420 = vmatpush1.bf16.msra.mxu0 0
    %2421 = vmatprep.subr.bf16.mxu0 0
    %2422 = vmatpush1.bf16.msra.mxu0 0
    %2423 = vmatprep.subr.bf16.mxu0 0
    %2424 = vmatpush1.bf16.msra.mxu0 0
    %2425 = vmatprep.subr.bf16.mxu0 0
    %2426 = vmatpush1.bf16.msra.mxu0 0
    %2427 = vmatprep.mubr.bf16.mxu0 0
    %2428 = vmatmul.mubr.bf16.gmra.mrb[0].mxu0 %v2390
    %v2429 = vpop.f32.mrb[0].mxu0
    %v2430 = vadd.f32 0.0, %v2429
    %v2431 = vpop.f32.mrb[0].mxu0
    %v2432 = vpop.f32.mrb[0].mxu0
    %v2433 = vpop.f32.mrb[0].mxu0
    %2434 = vdwg.mxu0
    %v2435 = vadd.f32 %v2273, %v2430
    %2436 = vrot.lane.b32.xlu0 %v1964, 104
    %v2437 = vpop.permute.xlu0 %2436
    %2438 = vrot.lane.b32.xlu0 %v1965, 104
    %v2439 = vpop.permute.xlu0 %2438
    %v2441 = vsel %vm417, %v2437, 0
    %v2444 = vsel %vm417, %v2439, 0
    %2446 = vmatprep.subr.bf16.mxu0 0
    %2447 = vmatpush1.bf16.xpose.msra.mxu0 %v2444
    %2448 = vmatprep.subr.bf16.mxu0 0
    %2449 = vmatpush1.bf16.xpose.msra.mxu0 0
    %2450 = vmatprep.subr.bf16.mxu0 0
    %2451 = vmatpush1.bf16.xpose.msra.mxu0 0
    %2452 = vmatprep.subr.bf16.mxu0 0
    %2453 = vmatpush1.bf16.xpose.msra.mxu0 0
    %2454 = vmatprep.subr.bf16.mxu0 0
    %2455 = vmatpush1.bf16.xpose.msra.mxu0 0
    %2456 = vmatprep.subr.bf16.mxu0 0
    %2457 = vmatpush1.bf16.xpose.msra.mxu0 0
    %2458 = vmatprep.subr.bf16.mxu0 0
    %2459 = vmatpush1.bf16.xpose.msra.mxu0 0
    %2460 = vmatprep.subr.bf16.mxu0 0
    %2461 = vmatpush1.bf16.xpose.msra.mxu0 0
    %2462 = vmatprep.subr.bf16.mxu0 0
    %2463 = vmatpush1.bf16.xpose.msra.mxu0 0
    %2464 = vmatprep.subr.bf16.mxu0 0
    %2465 = vmatpush1.bf16.xpose.msra.mxu0 0
    %2466 = vmatprep.subr.bf16.mxu0 0
    %2467 = vmatpush1.bf16.xpose.msra.mxu0 0
    %2468 = vmatprep.subr.bf16.mxu0 0
    %2469 = vmatpush1.bf16.xpose.msra.mxu0 0
    %2470 = vmatprep.subr.bf16.mxu0 0
    %2471 = vmatpush1.bf16.xpose.msra.mxu0 0
    %2472 = vmatprep.subr.bf16.mxu0 0
    %2473 = vmatpush1.bf16.xpose.msra.mxu0 0
    %2474 = vmatprep.subr.bf16.mxu0 0
    %2475 = vmatpush1.bf16.xpose.msra.mxu0 0
    %2476 = vmatprep.subr.bf16.mxu0 0
    %2477 = vmatpush1.bf16.xpose.msra.mxu0 0
    %2478 = vmatprep.mubr.bf16.mxu0 0
    %2479 = vmatmul.mubr.bf16.gmra.mrb[0].mxu0 %v2441
    %v2480 = vpop.f32.mrb[0].mxu0
    %v2481 = vadd.f32 %v1962, %v2480
    %v2482 = vpop.f32.mrb[0].mxu0
    %v2483 = vpop.f32.mrb[0].mxu0
    %v2484 = vpop.f32.mrb[0].mxu0
    %2485 = vdwg.mxu0
    %v2486 = vsel %vm2012, %v2481, -inf
    %2487 = vmax.xlane.f32.xlu0 %v2486
    %v2488 = vpop.xlane.xlu0 %2487
    %v2489 = vsub.f32 %v2481, %v2488
    %v2490 = vmul.f32 %v2489, 1.442695
    %v2491 = vpow.pop %v2490
    %v2492 = vsel %vm2012, %v2491, 0.0
    %2493 = vadd.xlane.f32.xlu0 %v2492
    %v2494 = vpop.xlane.xlu0 %2493
    %v2495 = vpack.c.bf16 %v2491, %v2491
    %2496 = vrot.lane.b32.xlu0 %v2023, 104
    %v2497 = vpop.permute.xlu0 %2496
    %v2500 = vsel %vm2012, %v2495, 0
    %2502 = vmatprep.subr.bf16.mxu0 0
    %2503 = vmatpush1.bf16.msra.mxu0 %v2497
    %2504 = vmatprep.subr.bf16.mxu0 0
    %2505 = vmatpush1.bf16.msra.mxu0 0
    %2506 = vmatprep.subr.bf16.mxu0 0
    %2507 = vmatpush1.bf16.msra.mxu0 0
    %2508 = vmatprep.subr.bf16.mxu0 0
    %2509 = vmatpush1.bf16.msra.mxu0 0
    %2510 = vmatprep.subr.bf16.mxu0 0
    %2511 = vmatpush1.bf16.msra.mxu0 0
    %2512 = vmatprep.subr.bf16.mxu0 0
    %2513 = vmatpush1.bf16.msra.mxu0 0
    %2514 = vmatprep.subr.bf16.mxu0 0
    %2515 = vmatpush1.bf16.msra.mxu0 0
    %2516 = vmatprep.subr.bf16.mxu0 0
    %2517 = vmatpush1.bf16.msra.mxu0 0
    %2518 = vmatprep.subr.bf16.mxu0 0
    %2519 = vmatpush1.bf16.msra.mxu0 0
    %2520 = vmatprep.subr.bf16.mxu0 0
    %2521 = vmatpush1.bf16.msra.mxu0 0
    %2522 = vmatprep.subr.bf16.mxu0 0
    %2523 = vmatpush1.bf16.msra.mxu0 0
    %2524 = vmatprep.subr.bf16.mxu0 0
    %2525 = vmatpush1.bf16.msra.mxu0 0
    %2526 = vmatprep.subr.bf16.mxu0 0
    %2527 = vmatpush1.bf16.msra.mxu0 0
    %2528 = vmatprep.subr.bf16.mxu0 0
    %2529 = vmatpush1.bf16.msra.mxu0 0
    %2530 = vmatprep.subr.bf16.mxu0 0
    %2531 = vmatpush1.bf16.msra.mxu0 0
    %2532 = vmatprep.subr.bf16.mxu0 0
    %2533 = vmatpush1.bf16.msra.mxu0 0
    %2534 = vmatprep.mubr.bf16.mxu0 0
    %2535 = vmatmul.mubr.bf16.gmra.mrb[0].mxu0 %v2500
    %v2536 = vpop.f32.mrb[0].mxu0
    %v2537 = vadd.f32 0.0, %v2536
    %v2538 = vpop.f32.mrb[0].mxu0
    %v2539 = vpop.f32.mrb[0].mxu0
    %v2540 = vpop.f32.mrb[0].mxu0
    %2541 = vdwg.mxu0
    %v2542 = vrcp.pop %v2494
    %v2543 = vmul.f32 %v2537, %v2542
    %s2544 = scalar_lea.vmem %s6, 28
    %v2545 = vld [vmem:[%s2544] sm:$0xf]
    %v2546 = vpack.c.bf16 %v2543, %v2543
    %v2548 = vsel %vm417, %v2546, 0
    %v2551 = vsel %vm478, %v2545, 0
    %2553 = vmatprep.subr.bf16.mxu0 0
    %2554 = vmatpush1.bf16.msra.mxu0 %v2551
    %2555 = vmatprep.subr.bf16.mxu0 0
    %2556 = vmatpush1.bf16.msra.mxu0 0
    %2557 = vmatprep.subr.bf16.mxu0 0
    %2558 = vmatpush1.bf16.msra.mxu0 0
    %2559 = vmatprep.subr.bf16.mxu0 0
    %2560 = vmatpush1.bf16.msra.mxu0 0
    %2561 = vmatprep.subr.bf16.mxu0 0
    %2562 = vmatpush1.bf16.msra.mxu0 0
    %2563 = vmatprep.subr.bf16.mxu0 0
    %2564 = vmatpush1.bf16.msra.mxu0 0
    %2565 = vmatprep.subr.bf16.mxu0 0
    %2566 = vmatpush1.bf16.msra.mxu0 0
    %2567 = vmatprep.subr.bf16.mxu0 0
    %2568 = vmatpush1.bf16.msra.mxu0 0
    %2569 = vmatprep.subr.bf16.mxu0 0
    %2570 = vmatpush1.bf16.msra.mxu0 0
    %2571 = vmatprep.subr.bf16.mxu0 0
    %2572 = vmatpush1.bf16.msra.mxu0 0
    %2573 = vmatprep.subr.bf16.mxu0 0
    %2574 = vmatpush1.bf16.msra.mxu0 0
    %2575 = vmatprep.subr.bf16.mxu0 0
    %2576 = vmatpush1.bf16.msra.mxu0 0
    %2577 = vmatprep.subr.bf16.mxu0 0
    %2578 = vmatpush1.bf16.msra.mxu0 0
    %2579 = vmatprep.subr.bf16.mxu0 0
    %2580 = vmatpush1.bf16.msra.mxu0 0
    %2581 = vmatprep.subr.bf16.mxu0 0
    %2582 = vmatpush1.bf16.msra.mxu0 0
    %2583 = vmatprep.subr.bf16.mxu0 0
    %2584 = vmatpush1.bf16.msra.mxu0 0
    %2585 = vmatprep.mubr.bf16.mxu0 0
    %2586 = vmatmul.mubr.bf16.gmra.mrb[0].mxu0 %v2548
    %v2587 = vpop.f32.mrb[0].mxu0
    %v2588 = vadd.f32 0.0, %v2587
    %v2589 = vpop.f32.mrb[0].mxu0
    %v2590 = vpop.f32.mrb[0].mxu0
    %v2591 = vpop.f32.mrb[0].mxu0
    %2592 = vdwg.mxu0
    %v2593 = vadd.f32 %v2435, %v2588
    %v2594 = vpack.c.bf16 %v1803, %v1803
    %v2595 = vpack.c.bf16 %v1880, %v1877
    %v2597 = vsel %vm417, %v2594, 0
    %v2600 = vsel %vm417, %v2595, 0
    %2602 = vmatprep.subr.bf16.mxu0 0
    %2603 = vmatpush1.bf16.xpose.msra.mxu0 %v2600
    %2604 = vmatprep.subr.bf16.mxu0 0
    %2605 = vmatpush1.bf16.xpose.msra.mxu0 0
    %2606 = vmatprep.subr.bf16.mxu0 0
    %2607 = vmatpush1.bf16.xpose.msra.mxu0 0
    %2608 = vmatprep.subr.bf16.mxu0 0
    %2609 = vmatpush1.bf16.xpose.msra.mxu0 0
    %2610 = vmatprep.subr.bf16.mxu0 0
    %2611 = vmatpush1.bf16.xpose.msra.mxu0 0
    %2612 = vmatprep.subr.bf16.mxu0 0
    %2613 = vmatpush1.bf16.xpose.msra.mxu0 0
    %2614 = vmatprep.subr.bf16.mxu0 0
    %2615 = vmatpush1.bf16.xpose.msra.mxu0 0
    %2616 = vmatprep.subr.bf16.mxu0 0
    %2617 = vmatpush1.bf16.xpose.msra.mxu0 0
    %2618 = vmatprep.subr.bf16.mxu0 0
    %2619 = vmatpush1.bf16.xpose.msra.mxu0 0
    %2620 = vmatprep.subr.bf16.mxu0 0
    %2621 = vmatpush1.bf16.xpose.msra.mxu0 0
    %2622 = vmatprep.subr.bf16.mxu0 0
    %2623 = vmatpush1.bf16.xpose.msra.mxu0 0
    %2624 = vmatprep.subr.bf16.mxu0 0
    %2625 = vmatpush1.bf16.xpose.msra.mxu0 0
    %2626 = vmatprep.subr.bf16.mxu0 0
    %2627 = vmatpush1.bf16.xpose.msra.mxu0 0
    %2628 = vmatprep.subr.bf16.mxu0 0
    %2629 = vmatpush1.bf16.xpose.msra.mxu0 0
    %2630 = vmatprep.subr.bf16.mxu0 0
    %2631 = vmatpush1.bf16.xpose.msra.mxu0 0
    %2632 = vmatprep.subr.bf16.mxu0 0
    %2633 = vmatpush1.bf16.xpose.msra.mxu0 0
    %2634 = vmatprep.mubr.bf16.mxu0 0
    %2635 = vmatmul.mubr.bf16.gmra.mrb[0].mxu0 %v2597
    %v2636 = vpop.f32.mrb[0].mxu0
    %v2637 = vadd.f32 %v1963, %v2636
    %v2638 = vpop.f32.mrb[0].mxu0
    %v2639 = vpop.f32.mrb[0].mxu0
    %v2640 = vpop.f32.mrb[0].mxu0
    %2641 = vdwg.mxu0
    %v2642 = vsel %vm2012, %v2637, -inf
    %2643 = vmax.xlane.f32.xlu0 %v2642
    %v2644 = vpop.xlane.xlu0 %2643
    %v2645 = vsub.f32 %v2637, %v2644
    %v2646 = vmul.f32 %v2645, 1.442695
    %v2647 = vpow.pop %v2646
    %v2648 = vsel %vm2012, %v2647, 0.0
    %2649 = vadd.xlane.f32.xlu0 %v2648
    %v2650 = vpop.xlane.xlu0 %2649
    %v2651 = vpack.c.bf16 %v2647, %v2647
    %v2652 = vpack.c.bf16 %v1951, %v1948
    %v2654 = vsel %vm2012, %v2651, 0
    %2656 = vmatprep.subr.bf16.mxu0 0
    %2657 = vmatpush1.bf16.msra.mxu0 %v2652
    %2658 = vmatprep.subr.bf16.mxu0 0
    %2659 = vmatpush1.bf16.msra.mxu0 0
    %2660 = vmatprep.subr.bf16.mxu0 0
    %2661 = vmatpush1.bf16.msra.mxu0 0
    %2662 = vmatprep.subr.bf16.mxu0 0
    %2663 = vmatpush1.bf16.msra.mxu0 0
    %2664 = vmatprep.subr.bf16.mxu0 0
    %2665 = vmatpush1.bf16.msra.mxu0 0
    %2666 = vmatprep.subr.bf16.mxu0 0
    %2667 = vmatpush1.bf16.msra.mxu0 0
    %2668 = vmatprep.subr.bf16.mxu0 0
    %2669 = vmatpush1.bf16.msra.mxu0 0
    %2670 = vmatprep.subr.bf16.mxu0 0
    %2671 = vmatpush1.bf16.msra.mxu0 0
    %2672 = vmatprep.subr.bf16.mxu0 0
    %2673 = vmatpush1.bf16.msra.mxu0 0
    %2674 = vmatprep.subr.bf16.mxu0 0
    %2675 = vmatpush1.bf16.msra.mxu0 0
    %2676 = vmatprep.subr.bf16.mxu0 0
    %2677 = vmatpush1.bf16.msra.mxu0 0
    %2678 = vmatprep.subr.bf16.mxu0 0
    %2679 = vmatpush1.bf16.msra.mxu0 0
    %2680 = vmatprep.subr.bf16.mxu0 0
    %2681 = vmatpush1.bf16.msra.mxu0 0
    %2682 = vmatprep.subr.bf16.mxu0 0
    %2683 = vmatpush1.bf16.msra.mxu0 0
    %2684 = vmatprep.subr.bf16.mxu0 0
    %2685 = vmatpush1.bf16.msra.mxu0 0
    %2686 = vmatprep.subr.bf16.mxu0 0
    %2687 = vmatpush1.bf16.msra.mxu0 0
    %2688 = vmatprep.mubr.bf16.mxu0 0
    %2689 = vmatmul.mubr.bf16.gmra.mrb[0].mxu0 %v2654
    %v2690 = vpop.f32.mrb[0].mxu0
    %v2691 = vadd.f32 0.0, %v2690
    %v2692 = vpop.f32.mrb[0].mxu0
    %v2693 = vpop.f32.mrb[0].mxu0
    %v2694 = vpop.f32.mrb[0].mxu0
    %2695 = vdwg.mxu0
    %v2696 = vrcp.pop %v2650
    %v2697 = vmul.f32 %v2691, %v2696
    %v2698 = vpack.c.bf16 %v2697, %v2697
    %2700 = vrot.lane.b32.xlu0 %v2594, 120
    %v2701 = vpop.permute.xlu0 %2700
    %2703 = vrot.lane.b32.xlu0 %v2595, 120
    %v2704 = vpop.permute.xlu0 %2703
    %v2706 = vsel %vm417, %v2701, 0
    %v2709 = vsel %vm417, %v2704, 0
    %2711 = vmatprep.subr.bf16.mxu0 0
    %2712 = vmatpush1.bf16.xpose.msra.mxu0 %v2709
    %2713 = vmatprep.subr.bf16.mxu0 0
    %2714 = vmatpush1.bf16.xpose.msra.mxu0 0
    %2715 = vmatprep.subr.bf16.mxu0 0
    %2716 = vmatpush1.bf16.xpose.msra.mxu0 0
    %2717 = vmatprep.subr.bf16.mxu0 0
    %2718 = vmatpush1.bf16.xpose.msra.mxu0 0
    %2719 = vmatprep.subr.bf16.mxu0 0
    %2720 = vmatpush1.bf16.xpose.msra.mxu0 0
    %2721 = vmatprep.subr.bf16.mxu0 0
    %2722 = vmatpush1.bf16.xpose.msra.mxu0 0
    %2723 = vmatprep.subr.bf16.mxu0 0
    %2724 = vmatpush1.bf16.xpose.msra.mxu0 0
    %2725 = vmatprep.subr.bf16.mxu0 0
    %2726 = vmatpush1.bf16.xpose.msra.mxu0 0
    %2727 = vmatprep.subr.bf16.mxu0 0
    %2728 = vmatpush1.bf16.xpose.msra.mxu0 0
    %2729 = vmatprep.subr.bf16.mxu0 0
    %2730 = vmatpush1.bf16.xpose.msra.mxu0 0
    %2731 = vmatprep.subr.bf16.mxu0 0
    %2732 = vmatpush1.bf16.xpose.msra.mxu0 0
    %2733 = vmatprep.subr.bf16.mxu0 0
    %2734 = vmatpush1.bf16.xpose.msra.mxu0 0
    %2735 = vmatprep.subr.bf16.mxu0 0
    %2736 = vmatpush1.bf16.xpose.msra.mxu0 0
    %2737 = vmatprep.subr.bf16.mxu0 0
    %2738 = vmatpush1.bf16.xpose.msra.mxu0 0
    %2739 = vmatprep.subr.bf16.mxu0 0
    %2740 = vmatpush1.bf16.xpose.msra.mxu0 0
    %2741 = vmatprep.subr.bf16.mxu0 0
    %2742 = vmatpush1.bf16.xpose.msra.mxu0 0
    %2743 = vmatprep.mubr.bf16.mxu0 0
    %2744 = vmatmul.mubr.bf16.gmra.mrb[0].mxu0 %v2706
    %v2745 = vpop.f32.mrb[0].mxu0
    %v2746 = vadd.f32 %v1963, %v2745
    %v2747 = vpop.f32.mrb[0].mxu0
    %v2748 = vpop.f32.mrb[0].mxu0
    %v2749 = vpop.f32.mrb[0].mxu0
    %2750 = vdwg.mxu0
    %v2751 = vsel %vm2012, %v2746, -inf
    %2752 = vmax.xlane.f32.xlu0 %v2751
    %v2753 = vpop.xlane.xlu0 %2752
    %v2754 = vsub.f32 %v2746, %v2753
    %v2755 = vmul.f32 %v2754, 1.442695
    %v2756 = vpow.pop %v2755
    %v2757 = vsel %vm2012, %v2756, 0.0
    %2758 = vadd.xlane.f32.xlu0 %v2757
    %v2759 = vpop.xlane.xlu0 %2758
    %v2760 = vpack.c.bf16 %v2756, %v2756
    %2762 = vrot.lane.b32.xlu0 %v2652, 120
    %v2763 = vpop.permute.xlu0 %2762
    %v2766 = vsel %vm2012, %v2760, 0
    %2768 = vmatprep.subr.bf16.mxu0 0
    %2769 = vmatpush1.bf16.msra.mxu0 %v2763
    %2770 = vmatprep.subr.bf16.mxu0 0
    %2771 = vmatpush1.bf16.msra.mxu0 0
    %2772 = vmatprep.subr.bf16.mxu0 0
    %2773 = vmatpush1.bf16.msra.mxu0 0
    %2774 = vmatprep.subr.bf16.mxu0 0
    %2775 = vmatpush1.bf16.msra.mxu0 0
    %2776 = vmatprep.subr.bf16.mxu0 0
    %2777 = vmatpush1.bf16.msra.mxu0 0
    %2778 = vmatprep.subr.bf16.mxu0 0
    %2779 = vmatpush1.bf16.msra.mxu0 0
    %2780 = vmatprep.subr.bf16.mxu0 0
    %2781 = vmatpush1.bf16.msra.mxu0 0
    %2782 = vmatprep.subr.bf16.mxu0 0
    %2783 = vmatpush1.bf16.msra.mxu0 0
    %2784 = vmatprep.subr.bf16.mxu0 0
    %2785 = vmatpush1.bf16.msra.mxu0 0
    %2786 = vmatprep.subr.bf16.mxu0 0
    %2787 = vmatpush1.bf16.msra.mxu0 0
    %2788 = vmatprep.subr.bf16.mxu0 0
    %2789 = vmatpush1.bf16.msra.mxu0 0
    %2790 = vmatprep.subr.bf16.mxu0 0
    %2791 = vmatpush1.bf16.msra.mxu0 0
    %2792 = vmatprep.subr.bf16.mxu0 0
    %2793 = vmatpush1.bf16.msra.mxu0 0
    %2794 = vmatprep.subr.bf16.mxu0 0
    %2795 = vmatpush1.bf16.msra.mxu0 0
    %2796 = vmatprep.subr.bf16.mxu0 0
    %2797 = vmatpush1.bf16.msra.mxu0 0
    %2798 = vmatprep.subr.bf16.mxu0 0
    %2799 = vmatpush1.bf16.msra.mxu0 0
    %2800 = vmatprep.mubr.bf16.mxu0 0
    %2801 = vmatmul.mubr.bf16.gmra.mrb[0].mxu0 %v2766
    %v2802 = vpop.f32.mrb[0].mxu0
    %v2803 = vadd.f32 0.0, %v2802
    %v2804 = vpop.f32.mrb[0].mxu0
    %v2805 = vpop.f32.mrb[0].mxu0
    %v2806 = vpop.f32.mrb[0].mxu0
    %2807 = vdwg.mxu0
    %v2808 = vrcp.pop %v2759
    %v2809 = vmul.f32 %v2803, %v2808
    %v2810 = vpack.c.bf16 %v2809, %v2809
    %v2812 = vsel %vm417, %v2810, 0
    %2814 = vmatprep.subr.bf16.mxu0 0
    %2815 = vmatpush1.bf16.msra.mxu0 %v2190
    %2816 = vmatprep.subr.bf16.mxu0 0
    %2817 = vmatpush1.bf16.msra.mxu0 0
    %2818 = vmatprep.subr.bf16.mxu0 0
    %2819 = vmatpush1.bf16.msra.mxu0 0
    %2820 = vmatprep.subr.bf16.mxu0 0
    %2821 = vmatpush1.bf16.msra.mxu0 0
    %2822 = vmatprep.subr.bf16.mxu0 0
    %2823 = vmatpush1.bf16.msra.mxu0 0
    %2824 = vmatprep.subr.bf16.mxu0 0
    %2825 = vmatpush1.bf16.msra.mxu0 0
    %2826 = vmatprep.subr.bf16.mxu0 0
    %2827 = vmatpush1.bf16.msra.mxu0 0
    %2828 = vmatprep.subr.bf16.mxu0 0
    %2829 = vmatpush1.bf16.msra.mxu0 0
    %2830 = vmatprep.subr.bf16.mxu0 0
    %2831 = vmatpush1.bf16.msra.mxu0 0
    %2832 = vmatprep.subr.bf16.mxu0 0
    %2833 = vmatpush1.bf16.msra.mxu0 0
    %2834 = vmatprep.subr.bf16.mxu0 0
    %2835 = vmatpush1.bf16.msra.mxu0 0
    %2836 = vmatprep.subr.bf16.mxu0 0
    %2837 = vmatpush1.bf16.msra.mxu0 0
    %2838 = vmatprep.subr.bf16.mxu0 0
    %2839 = vmatpush1.bf16.msra.mxu0 0
    %2840 = vmatprep.subr.bf16.mxu0 0
    %2841 = vmatpush1.bf16.msra.mxu0 0
    %2842 = vmatprep.subr.bf16.mxu0 0
    %2843 = vmatpush1.bf16.msra.mxu0 0
    %2844 = vmatprep.subr.bf16.mxu0 0
    %2845 = vmatpush1.bf16.msra.mxu0 0
    %2846 = vmatprep.mubr.bf16.mxu0 0
    %2847 = vmatmul.mubr.bf16.gmra.mrb[0].mxu0 %v2812
    %v2848 = vpop.f32.mrb[0].mxu0
    %v2849 = vadd.f32 0.0, %v2848
    %v2850 = vpop.f32.mrb[0].mxu0
    %v2851 = vpop.f32.mrb[0].mxu0
    %v2852 = vpop.f32.mrb[0].mxu0
    %2853 = vdwg.mxu0
    %v2855 = vsel %vm417, %v2698, 0
    %2857 = vmatprep.subr.bf16.mxu0 0
    %2858 = vmatpush1.bf16.msra.mxu0 %v2236
    %2859 = vmatprep.subr.bf16.mxu0 0
    %2860 = vmatpush1.bf16.msra.mxu0 0
    %2861 = vmatprep.subr.bf16.mxu0 0
    %2862 = vmatpush1.bf16.msra.mxu0 0
    %2863 = vmatprep.subr.bf16.mxu0 0
    %2864 = vmatpush1.bf16.msra.mxu0 0
    %2865 = vmatprep.subr.bf16.mxu0 0
    %2866 = vmatpush1.bf16.msra.mxu0 0
    %2867 = vmatprep.subr.bf16.mxu0 0
    %2868 = vmatpush1.bf16.msra.mxu0 0
    %2869 = vmatprep.subr.bf16.mxu0 0
    %2870 = vmatpush1.bf16.msra.mxu0 0
    %2871 = vmatprep.subr.bf16.mxu0 0
    %2872 = vmatpush1.bf16.msra.mxu0 0
    %2873 = vmatprep.subr.bf16.mxu0 0
    %2874 = vmatpush1.bf16.msra.mxu0 0
    %2875 = vmatprep.subr.bf16.mxu0 0
    %2876 = vmatpush1.bf16.msra.mxu0 0
    %2877 = vmatprep.subr.bf16.mxu0 0
    %2878 = vmatpush1.bf16.msra.mxu0 0
    %2879 = vmatprep.subr.bf16.mxu0 0
    %2880 = vmatpush1.bf16.msra.mxu0 0
    %2881 = vmatprep.subr.bf16.mxu0 0
    %2882 = vmatpush1.bf16.msra.mxu0 0
    %2883 = vmatprep.subr.bf16.mxu0 0
    %2884 = vmatpush1.bf16.msra.mxu0 0
    %2885 = vmatprep.subr.bf16.mxu0 0
    %2886 = vmatpush1.bf16.msra.mxu0 0
    %2887 = vmatprep.subr.bf16.mxu0 0
    %2888 = vmatpush1.bf16.msra.mxu0 0
    %2889 = vmatprep.mubr.bf16.mxu0 0
    %2890 = vmatmul.mubr.bf16.gmra.mrb[0].mxu0 %v2855
    %v2891 = vpop.f32.mrb[0].mxu0
    %v2892 = vadd.f32 %v2849, %v2891
    %v2893 = vpop.f32.mrb[0].mxu0
    %v2894 = vpop.f32.mrb[0].mxu0
    %v2895 = vpop.f32.mrb[0].mxu0
    %2896 = vdwg.mxu0
    %2897 = vrot.lane.b32.xlu0 %v2594, 112
    %v2898 = vpop.permute.xlu0 %2897
    %2899 = vrot.lane.b32.xlu0 %v2595, 112
    %v2900 = vpop.permute.xlu0 %2899
    %v2902 = vsel %vm417, %v2898, 0
    %v2905 = vsel %vm417, %v2900, 0
    %2907 = vmatprep.subr.bf16.mxu0 0
    %2908 = vmatpush1.bf16.xpose.msra.mxu0 %v2905
    %2909 = vmatprep.subr.bf16.mxu0 0
    %2910 = vmatpush1.bf16.xpose.msra.mxu0 0
    %2911 = vmatprep.subr.bf16.mxu0 0
    %2912 = vmatpush1.bf16.xpose.msra.mxu0 0
    %2913 = vmatprep.subr.bf16.mxu0 0
    %2914 = vmatpush1.bf16.xpose.msra.mxu0 0
    %2915 = vmatprep.subr.bf16.mxu0 0
    %2916 = vmatpush1.bf16.xpose.msra.mxu0 0
    %2917 = vmatprep.subr.bf16.mxu0 0
    %2918 = vmatpush1.bf16.xpose.msra.mxu0 0
    %2919 = vmatprep.subr.bf16.mxu0 0
    %2920 = vmatpush1.bf16.xpose.msra.mxu0 0
    %2921 = vmatprep.subr.bf16.mxu0 0
    %2922 = vmatpush1.bf16.xpose.msra.mxu0 0
    %2923 = vmatprep.subr.bf16.mxu0 0
    %2924 = vmatpush1.bf16.xpose.msra.mxu0 0
    %2925 = vmatprep.subr.bf16.mxu0 0
    %2926 = vmatpush1.bf16.xpose.msra.mxu0 0
    %2927 = vmatprep.subr.bf16.mxu0 0
    %2928 = vmatpush1.bf16.xpose.msra.mxu0 0
    %2929 = vmatprep.subr.bf16.mxu0 0
    %2930 = vmatpush1.bf16.xpose.msra.mxu0 0
    %2931 = vmatprep.subr.bf16.mxu0 0
    %2932 = vmatpush1.bf16.xpose.msra.mxu0 0
    %2933 = vmatprep.subr.bf16.mxu0 0
    %2934 = vmatpush1.bf16.xpose.msra.mxu0 0
    %2935 = vmatprep.subr.bf16.mxu0 0
    %2936 = vmatpush1.bf16.xpose.msra.mxu0 0
    %2937 = vmatprep.subr.bf16.mxu0 0
    %2938 = vmatpush1.bf16.xpose.msra.mxu0 0
    %2939 = vmatprep.mubr.bf16.mxu0 0
    %2940 = vmatmul.mubr.bf16.gmra.mrb[0].mxu0 %v2902
    %v2941 = vpop.f32.mrb[0].mxu0
    %v2942 = vadd.f32 %v1963, %v2941
    %v2943 = vpop.f32.mrb[0].mxu0
    %v2944 = vpop.f32.mrb[0].mxu0
    %v2945 = vpop.f32.mrb[0].mxu0
    %2946 = vdwg.mxu0
    %v2947 = vsel %vm2012, %v2942, -inf
    %2948 = vmax.xlane.f32.xlu0 %v2947
    %v2949 = vpop.xlane.xlu0 %2948
    %v2950 = vsub.f32 %v2942, %v2949
    %v2951 = vmul.f32 %v2950, 1.442695
    %v2952 = vpow.pop %v2951
    %v2953 = vsel %vm2012, %v2952, 0.0
    %2954 = vadd.xlane.f32.xlu0 %v2953
    %v2955 = vpop.xlane.xlu0 %2954
    %v2956 = vpack.c.bf16 %v2952, %v2952
    %2957 = vrot.lane.b32.xlu0 %v2652, 112
    %v2958 = vpop.permute.xlu0 %2957
    %v2961 = vsel %vm2012, %v2956, 0
    %2963 = vmatprep.subr.bf16.mxu0 0
    %2964 = vmatpush1.bf16.msra.mxu0 %v2958
    %2965 = vmatprep.subr.bf16.mxu0 0
    %2966 = vmatpush1.bf16.msra.mxu0 0
    %2967 = vmatprep.subr.bf16.mxu0 0
    %2968 = vmatpush1.bf16.msra.mxu0 0
    %2969 = vmatprep.subr.bf16.mxu0 0
    %2970 = vmatpush1.bf16.msra.mxu0 0
    %2971 = vmatprep.subr.bf16.mxu0 0
    %2972 = vmatpush1.bf16.msra.mxu0 0
    %2973 = vmatprep.subr.bf16.mxu0 0
    %2974 = vmatpush1.bf16.msra.mxu0 0
    %2975 = vmatprep.subr.bf16.mxu0 0
    %2976 = vmatpush1.bf16.msra.mxu0 0
    %2977 = vmatprep.subr.bf16.mxu0 0
    %2978 = vmatpush1.bf16.msra.mxu0 0
    %2979 = vmatprep.subr.bf16.mxu0 0
    %2980 = vmatpush1.bf16.msra.mxu0 0
    %2981 = vmatprep.subr.bf16.mxu0 0
    %2982 = vmatpush1.bf16.msra.mxu0 0
    %2983 = vmatprep.subr.bf16.mxu0 0
    %2984 = vmatpush1.bf16.msra.mxu0 0
    %2985 = vmatprep.subr.bf16.mxu0 0
    %2986 = vmatpush1.bf16.msra.mxu0 0
    %2987 = vmatprep.subr.bf16.mxu0 0
    %2988 = vmatpush1.bf16.msra.mxu0 0
    %2989 = vmatprep.subr.bf16.mxu0 0
    %2990 = vmatpush1.bf16.msra.mxu0 0
    %2991 = vmatprep.subr.bf16.mxu0 0
    %2992 = vmatpush1.bf16.msra.mxu0 0
    %2993 = vmatprep.subr.bf16.mxu0 0
    %2994 = vmatpush1.bf16.msra.mxu0 0
    %2995 = vmatprep.mubr.bf16.mxu0 0
    %2996 = vmatmul.mubr.bf16.gmra.mrb[0].mxu0 %v2961
    %v2997 = vpop.f32.mrb[0].mxu0
    %v2998 = vadd.f32 0.0, %v2997
    %v2999 = vpop.f32.mrb[0].mxu0
    %v3000 = vpop.f32.mrb[0].mxu0
    %v3001 = vpop.f32.mrb[0].mxu0
    %3002 = vdwg.mxu0
    %v3003 = vrcp.pop %v2955
    %v3004 = vmul.f32 %v2998, %v3003
    %v3005 = vpack.c.bf16 %v3004, %v3004
    %v3007 = vsel %vm417, %v3005, 0
    %3009 = vmatprep.subr.bf16.mxu0 0
    %3010 = vmatpush1.bf16.msra.mxu0 %v2393
    %3011 = vmatprep.subr.bf16.mxu0 0
    %3012 = vmatpush1.bf16.msra.mxu0 0
    %3013 = vmatprep.subr.bf16.mxu0 0
    %3014 = vmatpush1.bf16.msra.mxu0 0
    %3015 = vmatprep.subr.bf16.mxu0 0
    %3016 = vmatpush1.bf16.msra.mxu0 0
    %3017 = vmatprep.subr.bf16.mxu0 0
    %3018 = vmatpush1.bf16.msra.mxu0 0
    %3019 = vmatprep.subr.bf16.mxu0 0
    %3020 = vmatpush1.bf16.msra.mxu0 0
    %3021 = vmatprep.subr.bf16.mxu0 0
    %3022 = vmatpush1.bf16.msra.mxu0 0
    %3023 = vmatprep.subr.bf16.mxu0 0
    %3024 = vmatpush1.bf16.msra.mxu0 0
    %3025 = vmatprep.subr.bf16.mxu0 0
    %3026 = vmatpush1.bf16.msra.mxu0 0
    %3027 = vmatprep.subr.bf16.mxu0 0
    %3028 = vmatpush1.bf16.msra.mxu0 0
    %3029 = vmatprep.subr.bf16.mxu0 0
    %3030 = vmatpush1.bf16.msra.mxu0 0
    %3031 = vmatprep.subr.bf16.mxu0 0
    %3032 = vmatpush1.bf16.msra.mxu0 0
    %3033 = vmatprep.subr.bf16.mxu0 0
    %3034 = vmatpush1.bf16.msra.mxu0 0
    %3035 = vmatprep.subr.bf16.mxu0 0
    %3036 = vmatpush1.bf16.msra.mxu0 0
    %3037 = vmatprep.subr.bf16.mxu0 0
    %3038 = vmatpush1.bf16.msra.mxu0 0
    %3039 = vmatprep.subr.bf16.mxu0 0
    %3040 = vmatpush1.bf16.msra.mxu0 0
    %3041 = vmatprep.mubr.bf16.mxu0 0
    %3042 = vmatmul.mubr.bf16.gmra.mrb[0].mxu0 %v3007
    %v3043 = vpop.f32.mrb[0].mxu0
    %v3044 = vadd.f32 0.0, %v3043
    %v3045 = vpop.f32.mrb[0].mxu0
    %v3046 = vpop.f32.mrb[0].mxu0
    %v3047 = vpop.f32.mrb[0].mxu0
    %3048 = vdwg.mxu0
    %v3049 = vadd.f32 %v2892, %v3044
    %3050 = vrot.lane.b32.xlu0 %v2594, 104
    %v3051 = vpop.permute.xlu0 %3050
    %3052 = vrot.lane.b32.xlu0 %v2595, 104
    %v3053 = vpop.permute.xlu0 %3052
    %v3055 = vsel %vm417, %v3051, 0
    %v3058 = vsel %vm417, %v3053, 0
    %3060 = vmatprep.subr.bf16.mxu0 0
    %3061 = vmatpush1.bf16.xpose.msra.mxu0 %v3058
    %3062 = vmatprep.subr.bf16.mxu0 0
    %3063 = vmatpush1.bf16.xpose.msra.mxu0 0
    %3064 = vmatprep.subr.bf16.mxu0 0
    %3065 = vmatpush1.bf16.xpose.msra.mxu0 0
    %3066 = vmatprep.subr.bf16.mxu0 0
    %3067 = vmatpush1.bf16.xpose.msra.mxu0 0
    %3068 = vmatprep.subr.bf16.mxu0 0
    %3069 = vmatpush1.bf16.xpose.msra.mxu0 0
    %3070 = vmatprep.subr.bf16.mxu0 0
    %3071 = vmatpush1.bf16.xpose.msra.mxu0 0
    %3072 = vmatprep.subr.bf16.mxu0 0
    %3073 = vmatpush1.bf16.xpose.msra.mxu0 0
    %3074 = vmatprep.subr.bf16.mxu0 0
    %3075 = vmatpush1.bf16.xpose.msra.mxu0 0
    %3076 = vmatprep.subr.bf16.mxu0 0
    %3077 = vmatpush1.bf16.xpose.msra.mxu0 0
    %3078 = vmatprep.subr.bf16.mxu0 0
    %3079 = vmatpush1.bf16.xpose.msra.mxu0 0
    %3080 = vmatprep.subr.bf16.mxu0 0
    %3081 = vmatpush1.bf16.xpose.msra.mxu0 0
    %3082 = vmatprep.subr.bf16.mxu0 0
    %3083 = vmatpush1.bf16.xpose.msra.mxu0 0
    %3084 = vmatprep.subr.bf16.mxu0 0
    %3085 = vmatpush1.bf16.xpose.msra.mxu0 0
    %3086 = vmatprep.subr.bf16.mxu0 0
    %3087 = vmatpush1.bf16.xpose.msra.mxu0 0
    %3088 = vmatprep.subr.bf16.mxu0 0
    %3089 = vmatpush1.bf16.xpose.msra.mxu0 0
    %3090 = vmatprep.subr.bf16.mxu0 0
    %3091 = vmatpush1.bf16.xpose.msra.mxu0 0
    %3092 = vmatprep.mubr.bf16.mxu0 0
    %3093 = vmatmul.mubr.bf16.gmra.mrb[0].mxu0 %v3055
    %v3094 = vpop.f32.mrb[0].mxu0
    %v3095 = vadd.f32 %v1963, %v3094
    %v3096 = vpop.f32.mrb[0].mxu0
    %v3097 = vpop.f32.mrb[0].mxu0
    %v3098 = vpop.f32.mrb[0].mxu0
    %3099 = vdwg.mxu0
    %v3100 = vsel %vm2012, %v3095, -inf
    %3101 = vmax.xlane.f32.xlu0 %v3100
    %v3102 = vpop.xlane.xlu0 %3101
    %v3103 = vsub.f32 %v3095, %v3102
    %v3104 = vmul.f32 %v3103, 1.442695
    %v3105 = vpow.pop %v3104
    %v3106 = vsel %vm2012, %v3105, 0.0
    %3107 = vadd.xlane.f32.xlu0 %v3106
    %v3108 = vpop.xlane.xlu0 %3107
    %v3109 = vpack.c.bf16 %v3105, %v3105
    %3110 = vrot.lane.b32.xlu0 %v2652, 104
    %v3111 = vpop.permute.xlu0 %3110
    %v3114 = vsel %vm2012, %v3109, 0
    %3116 = vmatprep.subr.bf16.mxu0 0
    %3117 = vmatpush1.bf16.msra.mxu0 %v3111
    %3118 = vmatprep.subr.bf16.mxu0 0
    %3119 = vmatpush1.bf16.msra.mxu0 0
    %3120 = vmatprep.subr.bf16.mxu0 0
    %3121 = vmatpush1.bf16.msra.mxu0 0
    %3122 = vmatprep.subr.bf16.mxu0 0
    %3123 = vmatpush1.bf16.msra.mxu0 0
    %3124 = vmatprep.subr.bf16.mxu0 0
    %3125 = vmatpush1.bf16.msra.mxu0 0
    %3126 = vmatprep.subr.bf16.mxu0 0
    %3127 = vmatpush1.bf16.msra.mxu0 0
    %3128 = vmatprep.subr.bf16.mxu0 0
    %3129 = vmatpush1.bf16.msra.mxu0 0
    %3130 = vmatprep.subr.bf16.mxu0 0
    %3131 = vmatpush1.bf16.msra.mxu0 0
    %3132 = vmatprep.subr.bf16.mxu0 0
    %3133 = vmatpush1.bf16.msra.mxu0 0
    %3134 = vmatprep.subr.bf16.mxu0 0
    %3135 = vmatpush1.bf16.msra.mxu0 0
    %3136 = vmatprep.subr.bf16.mxu0 0
    %3137 = vmatpush1.bf16.msra.mxu0 0
    %3138 = vmatprep.subr.bf16.mxu0 0
    %3139 = vmatpush1.bf16.msra.mxu0 0
    %3140 = vmatprep.subr.bf16.mxu0 0
    %3141 = vmatpush1.bf16.msra.mxu0 0
    %3142 = vmatprep.subr.bf16.mxu0 0
    %3143 = vmatpush1.bf16.msra.mxu0 0
    %3144 = vmatprep.subr.bf16.mxu0 0
    %3145 = vmatpush1.bf16.msra.mxu0 0
    %3146 = vmatprep.subr.bf16.mxu0 0
    %3147 = vmatpush1.bf16.msra.mxu0 0
    %3148 = vmatprep.mubr.bf16.mxu0 0
    %3149 = vmatmul.mubr.bf16.gmra.mrb[0].mxu0 %v3114
    %v3150 = vpop.f32.mrb[0].mxu0
    %v3151 = vadd.f32 0.0, %v3150
    %v3152 = vpop.f32.mrb[0].mxu0
    %v3153 = vpop.f32.mrb[0].mxu0
    %v3154 = vpop.f32.mrb[0].mxu0
    %3155 = vdwg.mxu0
    %v3156 = vrcp.pop %v3108
    %v3157 = vmul.f32 %v3151, %v3156
    %v3158 = vpack.c.bf16 %v3157, %v3157
    %v3160 = vsel %vm417, %v3158, 0
    %3162 = vmatprep.subr.bf16.mxu0 0
    %3163 = vmatpush1.bf16.msra.mxu0 %v2551
    %3164 = vmatprep.subr.bf16.mxu0 0
    %3165 = vmatpush1.bf16.msra.mxu0 0
    %3166 = vmatprep.subr.bf16.mxu0 0
    %3167 = vmatpush1.bf16.msra.mxu0 0
    %3168 = vmatprep.subr.bf16.mxu0 0
    %3169 = vmatpush1.bf16.msra.mxu0 0
    %3170 = vmatprep.subr.bf16.mxu0 0
    %3171 = vmatpush1.bf16.msra.mxu0 0
    %3172 = vmatprep.subr.bf16.mxu0 0
    %3173 = vmatpush1.bf16.msra.mxu0 0
    %3174 = vmatprep.subr.bf16.mxu0 0
    %3175 = vmatpush1.bf16.msra.mxu0 0
    %3176 = vmatprep.subr.bf16.mxu0 0
    %3177 = vmatpush1.bf16.msra.mxu0 0
    %3178 = vmatprep.subr.bf16.mxu0 0
    %3179 = vmatpush1.bf16.msra.mxu0 0
    %3180 = vmatprep.subr.bf16.mxu0 0
    %3181 = vmatpush1.bf16.msra.mxu0 0
    %3182 = vmatprep.subr.bf16.mxu0 0
    %3183 = vmatpush1.bf16.msra.mxu0 0
    %3184 = vmatprep.subr.bf16.mxu0 0
    %3185 = vmatpush1.bf16.msra.mxu0 0
    %3186 = vmatprep.subr.bf16.mxu0 0
    %3187 = vmatpush1.bf16.msra.mxu0 0
    %3188 = vmatprep.subr.bf16.mxu0 0
    %3189 = vmatpush1.bf16.msra.mxu0 0
    %3190 = vmatprep.subr.bf16.mxu0 0
    %3191 = vmatpush1.bf16.msra.mxu0 0
    %3192 = vmatprep.subr.bf16.mxu0 0
    %3193 = vmatpush1.bf16.msra.mxu0 0
    %3194 = vmatprep.mubr.bf16.mxu0 0
    %3195 = vmatmul.mubr.bf16.gmra.mrb[0].mxu0 %v3160
    %v3196 = vpop.f32.mrb[0].mxu0
    %v3197 = vadd.f32 0.0, %v3196
    %v3198 = vpop.f32.mrb[0].mxu0
    %v3199 = vpop.f32.mrb[0].mxu0
    %v3200 = vpop.f32.mrb[0].mxu0
    %3201 = vdwg.mxu0
    %v3202 = vadd.f32 %v3049, %v3197
    %v3203 = vld [vmem:[#allocation10 + $0x7] sm:$0x1]
    %v3204 = vlaneseq
    %v3205 = vshrl.u32 %v3204, 7
    %v3206 = vsub.s32 0, %v3205
    %v3207 = vrot.slane %v3203, %v3206
    %v3208 = vadd.f32 %v2593, %v3207
    %v3209 = vadd.f32 %v3202, %v3207
    %v3210 = vadd.f32 %v1679, %v3208
    %v3211 = vadd.f32 %v1680, %v3209
    %v3212 = vld [vmem:[#allocation11 + $0x2] sm:$0x1]
    %v3213 = vld [vmem:[#allocation13 + $0x2] sm:$0x1]
    %v3214 = vsel %vm157, %v3210, 0.0
    %3215 = vadd.xlane.f32.xlu0 %v3214
    %v3216 = vpop.xlane.xlu0 %3215
    %v3217 = vsel %vm157, %v3211, 0.0
    %3218 = vadd.xlane.f32.xlu0 %v3217
    %v3219 = vpop.xlane.xlu0 %3218
    %v3220 = vmul.f32 %v3216, %v164
    %v3221 = vmul.f32 %v3219, %v164
    %v3222 = vsub.f32 %v3210, %v3220
    %v3223 = vsub.f32 %v3211, %v3221
    %v3224 = vmul.f32 %v3222, %v3222
    %v3225 = vmul.f32 %v3223, %v3223
    %v3226 = vsel %vm157, %v3224, 0.0
    %3227 = vadd.xlane.f32.xlu0 %v3226
    %v3228 = vpop.xlane.xlu0 %3227
    %v3229 = vsel %vm157, %v3225, 0.0
    %3230 = vadd.xlane.f32.xlu0 %v3229
    %v3231 = vpop.xlane.xlu0 %3230
    %v3232 = vmul.f32 %v3228, 0.032258064
    %v3233 = vmul.f32 %v3231, 0.032258064
    %v3234 = vrsqrt.pop %v3232
    %v3235 = vmul.f32 %v3232, %v3234
    %vm3236 = vcmp.eq.f32.partialorder %v3232, inf
    %v3237 = vsel %vm3236, %v3232, %v3235
    %vm3238 = vcmp.eq.f32.partialorder %v3232, 0.0
    %v3239 = vand.u32 %v3232, 2147483648
    %v3240 = vsel %vm3238, %v3239, %v3237
    %v3241 = vrsqrt.pop %v3233
    %v3242 = vmul.f32 %v3233, %v3241
    %vm3243 = vcmp.eq.f32.partialorder %v3233, inf
    %v3244 = vsel %vm3243, %v3233, %v3242
    %vm3245 = vcmp.eq.f32.partialorder %v3233, 0.0
    %v3246 = vand.u32 %v3233, 2147483648
    %v3247 = vsel %vm3245, %v3246, %v3244
    %v3248 = vlaneseq
    %v3249 = vshrl.u32 %v3248, 7
    %v3250 = vsub.s32 0, %v3249
    %v3251 = vrot.slane %v3212, %v3250
    %v3252 = vmul.f32 %v3251, %v3222
    %v3253 = vmul.f32 %v3251, %v3223
    %v3254 = vadd.f32 %v3240, 1e-06
    %v3255 = vadd.f32 %v3247, 1e-06
    %v3256 = vrcp.pop %v3254
    %v3257 = vmul.f32 %v3252, %v3256
    %v3258 = vrcp.pop %v3255
    %v3259 = vmul.f32 %v3253, %v3258
    %v3260 = vlaneseq
    %v3261 = vshrl.u32 %v3260, 7
    %v3262 = vsub.s32 0, %v3261
    %v3263 = vrot.slane %v3213, %v3262
    %v3264 = vadd.f32 %v3257, %v3263
    %v3265 = vadd.f32 %v3259, %v3263
    %v3266 = vld [vmem:[#allocation14] sm:$0xf]
    %v3267 = vld [vmem:[#allocation14 + $0x4] sm:$0xf]
    %v3268 = vld [vmem:[#allocation14 + $0x8] sm:$0xf]
    %v3269 = vld [vmem:[#allocation14 + $0xc] sm:$0xf]
    %v3270 = vpack.c.bf16 %v3265, %v3264
    %v3271 = vld [vmem:[%s10] sm:$0x1]
    %v3273 = vlaneseq
    %v3274 = vshrl.u32 %v3273, 7
    %v3275 = vsub.s32 0, %v3274
    %v3276 = vrot.slane %v3271, %v3275
    %v3282 = vunpack.c.l.b16 %v3266
    %v3283 = vunpack.c.l.b16 %v3267
    %v3284 = vunpack.c.l.b16 %v3268
    %v3285 = vunpack.c.l.b16 %v3269
    %v3286 = vpack.c.b16 %v3283, %v3282
    %v3287 = vpack.c.b16 %v3285, %v3284
    %v3291 = vsel %vm157, %v3270, 0
    %3293 = vmatprep.subr.bf16.mxu0 0
    %3294 = vmatpush1.bf16.msra.mxu0 %v3286
    %3295 = vmatprep.subr.bf16.mxu0 0
    %3296 = vmatpush1.bf16.msra.mxu0 %v3287
    %3297 = vmatprep.subr.bf16.mxu0 0
    %3298 = vmatpush1.bf16.msra.mxu0 0
    %3299 = vmatprep.subr.bf16.mxu0 0
    %3300 = vmatpush1.bf16.msra.mxu0 0
    %3301 = vmatprep.subr.bf16.mxu0 0
    %3302 = vmatpush1.bf16.msra.mxu0 0
    %3303 = vmatprep.subr.bf16.mxu0 0
    %3304 = vmatpush1.bf16.msra.mxu0 0
    %3305 = vmatprep.subr.bf16.mxu0 0
    %3306 = vmatpush1.bf16.msra.mxu0 0
    %3307 = vmatprep.subr.bf16.mxu0 0
    %3308 = vmatpush1.bf16.msra.mxu0 0
    %3309 = vmatprep.subr.bf16.mxu0 0
    %3310 = vmatpush1.bf16.msra.mxu0 0
    %3311 = vmatprep.subr.bf16.mxu0 0
    %3312 = vmatpush1.bf16.msra.mxu0 0
    %3313 = vmatprep.subr.bf16.mxu0 0
    %3314 = vmatpush1.bf16.msra.mxu0 0
    %3315 = vmatprep.subr.bf16.mxu0 0
    %3316 = vmatpush1.bf16.msra.mxu0 0
    %3317 = vmatprep.subr.bf16.mxu0 0
    %3318 = vmatpush1.bf16.msra.mxu0 0
    %3319 = vmatprep.subr.bf16.mxu0 0
    %3320 = vmatpush1.bf16.msra.mxu0 0
    %3321 = vmatprep.subr.bf16.mxu0 0
    %3322 = vmatpush1.bf16.msra.mxu0 0
    %3323 = vmatprep.subr.bf16.mxu0 0
    %3324 = vmatpush1.bf16.msra.mxu0 0
    %3325 = vmatprep.mubr.bf16.mxu0 0
    %3326 = vmatmul.mubr.bf16.gmra.mrb[0].mxu0 %v3291
    %v3327 = vpop.f32.mrb[0].mxu0
    %v3328 = vadd.f32 %v3276, %v3327
    %v3329 = vpop.f32.mrb[0].mxu0
    %v3330 = vpop.f32.mrb[0].mxu0
    %v3331 = vadd.f32 %v3276, %v3330
    %v3332 = vpop.f32.mrb[0].mxu0
    %3333 = vdwg.mxu0
    %v3334 = vmax.f32 %v3328, 0.0
    %v3335 = vmax.f32 %v3331, 0.0
    %v3336 = vld [vmem:[%s11] sm:$0xf]
    %v3337 = vld [vmem:[%s11 + $0x4] sm:$0xf]
    %v3338 = vld [vmem:[%s11 + $0x8] sm:$0xf]
    %v3339 = vld [vmem:[%s11 + $0xc] sm:$0xf]
    %v3340 = vld [vmem:[%s11 + $0x10] sm:$0xf]
    %v3341 = vld [vmem:[%s11 + $0x14] sm:$0xf]
    %v3342 = vld [vmem:[%s11 + $0x18] sm:$0xf]
    %v3343 = vld [vmem:[%s11 + $0x1c] sm:$0xf]
    %v3344 = vpack.c.bf16 %v3335, %v3334
    %v3353 = vunpack.c.l.b16 %v3336
    %v3354 = vunpack.c.l.b16 %v3337
    %v3355 = vunpack.c.l.b16 %v3338
    %v3356 = vunpack.c.l.b16 %v3339
    %v3357 = vunpack.c.l.b16 %v3340
    %v3358 = vunpack.c.l.b16 %v3341
    %v3359 = vunpack.c.l.b16 %v3342
    %v3360 = vunpack.c.l.b16 %v3343
    %v3361 = vpack.c.b16 %v3354, %v3353
    %v3362 = vpack.c.b16 %v3356, %v3355
    %v3363 = vpack.c.b16 %v3358, %v3357
    %v3364 = vpack.c.b16 %v3360, %v3359
    %vm3369 = vcmask 523264
    %v3371 = vsel %vm3369, %v3344, 0
    %3373 = vmatprep.subr.bf16.mxu0 0
    %3374 = vmatpush1.bf16.msra.mxu0 %v3361
    %3375 = vmatprep.subr.bf16.mxu0 0
    %3376 = vmatpush1.bf16.msra.mxu0 %v3362
    %3377 = vmatprep.subr.bf16.mxu0 0
    %3378 = vmatpush1.bf16.msra.mxu0 %v3363
    %3379 = vmatprep.subr.bf16.mxu0 0
    %3380 = vmatpush1.bf16.msra.mxu0 %v3364
    %3381 = vmatprep.subr.bf16.mxu0 0
    %3382 = vmatpush1.bf16.msra.mxu0 0
    %3383 = vmatprep.subr.bf16.mxu0 0
    %3384 = vmatpush1.bf16.msra.mxu0 0
    %3385 = vmatprep.subr.bf16.mxu0 0
    %3386 = vmatpush1.bf16.msra.mxu0 0
    %3387 = vmatprep.subr.bf16.mxu0 0
    %3388 = vmatpush1.bf16.msra.mxu0 0
    %3389 = vmatprep.subr.bf16.mxu0 0
    %3390 = vmatpush1.bf16.msra.mxu0 0
    %3391 = vmatprep.subr.bf16.mxu0 0
    %3392 = vmatpush1.bf16.msra.mxu0 0
    %3393 = vmatprep.subr.bf16.mxu0 0
    %3394 = vmatpush1.bf16.msra.mxu0 0
    %3395 = vmatprep.subr.bf16.mxu0 0
    %3396 = vmatpush1.bf16.msra.mxu0 0
    %3397 = vmatprep.subr.bf16.mxu0 0
    %3398 = vmatpush1.bf16.msra.mxu0 0
    %3399 = vmatprep.subr.bf16.mxu0 0
    %3400 = vmatpush1.bf16.msra.mxu0 0
    %3401 = vmatprep.subr.bf16.mxu0 0
    %3402 = vmatpush1.bf16.msra.mxu0 0
    %3403 = vmatprep.subr.bf16.mxu0 0
    %3404 = vmatpush1.bf16.msra.mxu0 0
    %3405 = vmatprep.mubr.bf16.mxu0 0
    %3406 = vmatmul.mubr.bf16.gmra.mrb[0].mxu0 %v3371
    %v3407 = vpop.f32.mrb[0].mxu0
    %v3408 = vadd.f32 0.0, %v3407
    %v3409 = vpop.f32.mrb[0].mxu0
    %v3410 = vpop.f32.mrb[0].mxu0
    %v3411 = vadd.f32 0.0, %v3410
    %v3412 = vpop.f32.mrb[0].mxu0
    %3413 = vdwg.mxu0
    %v3414 = vadd.f32 %v3210, %v3408
    %v3415 = vadd.f32 %v3211, %v3411
    %v3416 = vld [vmem:[%s12] sm:$0x1]
    %v3418 = vlaneseq
    %v3419 = vshrl.u32 %v3418, 7
    %v3420 = vsub.s32 0, %v3419
    %v3421 = vrot.slane %v3416, %v3420
    %v3423 = vadd.f32 %v3414, %v3421
    %v3424 = vadd.f32 %v3415, %v3421
    %3425 = vst.msk [vmem:[#allocation16] sm:$0xff] %vm157, %v3423
    %3426 = vst.msk [vmem:[#allocation16 + $0x8] sm:$0xff] %vm157, %v3424
    // Predicated region
    $region86: #{tpu_custom_call.1} parent=1 // pred_check
      _
    $region87: #{tpu_custom_call.1} parent=1 // pred_check_branch
      %3428 = sbr.rel (0) target = $region89
    $region88: #{tpu_custom_call.1} parent=1 // pred_region
      %s3430 = ssub.s32 256, 256
      %3431 = vsyncadd [#allocation4], %s3430
      %s3432 = sshll.u32 [#allocation16], 4
      %s3433 = int_to_ptr.vmem [resolvable:$true] %s3432
      %3438 = dma.vmem_to_hbm [thread:$0]  %s3433, 256, %s13, [#allocation4], 128, 128, 8
    $region89: #{tpu_custom_call.1} parent=1 // pred_fallthru
      _
    // Predicated region
    $region90: #{tpu_custom_call.1} parent=1 // pred_check
      _
    $region91: #{tpu_custom_call.1} parent=1 // pred_check_branch
      %3440 = sbr.rel (0) target = $region93
    $region92: #{tpu_custom_call.1} parent=1 // pred_region
      %3441 = dma.done [#allocation4], 256
    $region93: #{tpu_custom_call.1} parent=1 // pred_fallthru
      _
    %3442 = vsyncpa [#allocation3], 1
    %3443 = vsyncpa [#allocation6], 1
    %3444 = vsyncpa [#allocation9], 1
    %3445 = vsyncpa [#allocation12], 1
    %3446 = vsyncpa [#allocation15], 1
    %3447 = vsyncpa [#allocation4], 1

</llo_original>
